<compile_context>
chip_gen: v5e
topology: v5e:2x2
jax: 0.10.0
libtpu: 0.0.40
codegen_flags: <defaults>
</compile_context>

<pallas_src>
import math
import functools

import jax
import jax.numpy as jnp
from jax.experimental import pallas as pl
from jax.experimental.pallas import tpu as pltpu


# ----------------------------- fused Pallas kernel -----------------------------

def _make_fused_kernel(temperature: float, batch: int):
    inv_temp = 1.0 / float(temperature)
    B = int(batch)

    def kernel(x_mo_ref, x_mv_ref, x_vo_ref, x_vv_ref,        # (B, C, HW) feature slabs
               w1o_ref, b1o_ref, w2o_ref, b2o_ref,            # online projector
               w1b_ref, b1b_ref, w2b_ref, b2b_ref,            # branch projector
               queue_ref,                                     # (Dout, Q)
               loss_ref, z_ref):                              # outputs: SMEM (1,), VMEM (2B, Dout)
        # ---- AdaptiveAvgPool2d(1).squeeze(): mean over the spatial (last) axis ----
        x_online = jnp.concatenate([x_mo_ref[...], x_mv_ref[...]], axis=0)   # (2B, C, HW)
        x_branch = jnp.concatenate([x_vo_ref[...], x_vv_ref[...]], axis=0)   # (2B, C, HW)
        online_in = jnp.mean(x_online.astype(jnp.float32), axis=-1)          # (2B, C)
        branch_in = jnp.mean(x_branch.astype(jnp.float32), axis=-1)          # (2B, C)

        # ---- MLP: Linear -> ReLU -> Linear (bf16 MXU, f32 accumulation) ----
        def mlp(xin, w1, b1, w2, b2):
            h = jnp.dot(xin.astype(jnp.bfloat16), w1[...],
                        preferred_element_type=jnp.float32)
            h = jnp.maximum(h + b1[...], 0.0)
            y = jnp.dot(h.astype(jnp.bfloat16), w2[...],
                        preferred_element_type=jnp.float32)
            return y + b2[...]

        # ---- F.normalize(dim=-1): v / max(||v||, 1e-12) ----
        def l2norm(v):
            nsq = jnp.sum(v * v, axis=-1, keepdims=True)
            return v * jax.lax.rsqrt(jnp.maximum(nsq, 1e-24))

        p = l2norm(mlp(online_in, w1o_ref, b1o_ref, w2o_ref, b2o_ref))  # (2B, Dout) online
        z = l2norm(mlp(branch_in, w1b_ref, b1b_ref, w2b_ref, b2b_ref))  # (2B, Dout) momentum

        # normalized branch projections (rows 0:B = view_org, B:2B = view_view)
        z_ref[...] = z.astype(z_ref.dtype)

        queue = queue_ref[...]  # (Dout, Q), negatives in columns (pre-update clone)

        # mocov2plus_loss_func: CE over [pos | q @ queue] / T with target index 0,
        # computed as a streaming logsumexp (no concat -> lane-dense shapes only).
        def moco_ce(q, k):
            pos = jnp.sum(q * k, axis=-1, keepdims=True) * inv_temp                      # (B, 1)
            neg = jnp.dot(q, queue, preferred_element_type=jnp.float32) * inv_temp       # (B, Q)
            m = jnp.maximum(pos, jnp.max(neg, axis=-1, keepdims=True))                   # (B, 1)
            se = jnp.exp(pos - m) + jnp.sum(jnp.exp(neg - m), axis=-1, keepdims=True)    # (B, 1)
            lse = m + jnp.log(se)                                                        # (B, 1)
            return jnp.mean(lse - pos)

        p_org, p_view = p[:B], p[B:]
        z_org, z_view = z[:B], z[B:]
        loss_ref[0] = 0.5 * (moco_ce(p_org, z_view) + moco_ce(p_view, z_org))

    return kernel


# ------------------------------ forward wrapper --------------------------------

def moco_global_forward(params, queue, queue_ptr,
                        mask_emb_org, mask_emb_view,
                        view_emb_org, view_emb_view,
                        loss_rec, *, temperature=0.2):
    """MoCoBased.forward global branch on last-stage backbone feature maps (NCHW)."""
    B, C, H, W = mask_emb_org.shape
    HW = H * W
    op, bp = params["online_projector"], params["branch_projector"]
    Dh = op["w1"].shape[1]
    Dout = op["w2"].shape[1]
    Q = queue.shape[1]

    # Free reshape (no transpose): NCHW -> (B, C, H*W); pooling happens in-kernel.
    xs = [a.reshape(B, C, HW) for a in
          (mask_emb_org, mask_emb_view, view_emb_org, view_emb_view)]

    kernel = _make_fused_kernel(temperature, B)
    vmem = pl.BlockSpec(memory_space=pltpu.MemorySpace.VMEM)
    smem = pl.BlockSpec(memory_space=pltpu.MemorySpace.SMEM)

    global_loss_arr, z_branch = pl.pallas_call(
        kernel,
        out_shape=(jax.ShapeDtypeStruct((1,), jnp.float32),
                   jax.ShapeDtypeStruct((2 * B, Dout), jnp.float32)),
        in_specs=[vmem] * 13,
        out_specs=(smem, vmem),
    )(
        xs[0], xs[1], xs[2], xs[3],
        op["w1"].astype(jnp.bfloat16), op["b1"],
        op["w2"].astype(jnp.bfloat16), op["b2"],
        bp["w1"].astype(jnp.bfloat16), bp["b1"],
        bp["w2"].astype(jnp.bfloat16), bp["b2"],
        queue,
    )
    global_loss = global_loss_arr[0]

    # momentum path is torch.no_grad
    z_branch = jax.lax.stop_gradient(z_branch)
    keys_view = z_branch[B:]   # view_proj_embedding_view
    keys_org = z_branch[:B]    # view_proj_embedding_org

    # _dequeue_and_enqueue (functional): queue[:, ptr:ptr+B] = keys.T ; ptr += B (mod Q)
    def enqueue(q, ptr, keys):
        q = jax.lax.dynamic_update_slice(q, jnp.transpose(keys).astype(q.dtype), (0, ptr))
        return q, (ptr + keys.shape[0]) % q.shape[1]

    queue_new, ptr_new = enqueue(queue, queue_ptr, keys_view)
    queue_new, ptr_new = enqueue(queue_new, ptr_new, keys_org)

    total_loss = loss_rec + global_loss
    return {
        "loss_rec": loss_rec,
        "global_loss": global_loss,
        "total_loss": total_loss,
        "queue": queue_new,
        "queue_ptr": ptr_new,
    }


# ----------------------------- parameter / buffer init -----------------------------

def init_mlp_params(key, din, dh, dout):
    k1, k2 = jax.random.split(key)
    return {
        "w1": jax.random.normal(k1, (din, dh), jnp.float32) / math.sqrt(din),
        "b1": jnp.zeros((1, dh), jnp.float32),
        "w2": jax.random.normal(k2, (dh, dout), jnp.float32) / math.sqrt(dh),
        "b2": jnp.zeros((1, dout), jnp.float32),
    }


def init_moco_params(key, in_dim, hidden_dim, out_dim):
    online_projector = init_mlp_params(key, in_dim, hidden_dim, out_dim)
    # init_momentum_pairs: branch projector starts as an exact (independent) copy.
    branch_projector = jax.tree_util.tree_map(jnp.array, online_projector)
    return {"online_projector": online_projector, "branch_projector": branch_projector}


def init_queue(key, out_dim, queue_size):
    q = jax.random.normal(key, (out_dim, queue_size), jnp.float32)
    # matches: queue = F.normalize(randn(out_dim, queue_size), dim=1)
    q = q / jnp.maximum(jnp.linalg.norm(q, axis=1, keepdims=True), 1e-12)
    ptr = jnp.zeros((), jnp.int32)
    return q, ptr


# --------------------------------- main ---------------------------------------

if __name__ == "__main__":
    # Small, module-consistent shapes.
    B, C, H, W = 2, 512, 4, 4
    hidden_dim, out_dim, queue_size = 256, 128, 256
    temperature = 0.2
    assert queue_size % B == 0  # mirrors the assert in _dequeue_and_enqueue

    key = jax.random.PRNGKey(0)
    k_p, k_q, k1, k2, k3, k4, k5 = jax.random.split(key, 7)

    params = init_moco_params(k_p, in_dim=C, hidden_dim=hidden_dim, out_dim=out_dim)
    queue, queue_ptr = init_queue(k_q, out_dim, queue_size)

    # Synthetic backbone outputs (stand-ins for online / momentum encoder maps).
    mask_emb_org = jax.random.normal(k1, (B, C, H, W), jnp.float32)
    mask_emb_view = jax.random.normal(k2, (B, C, H, W), jnp.float32)
    view_emb_org = jax.random.normal(k3, (B, C, H, W), jnp.float32)
    view_emb_view = jax.random.normal(k4, (B, C, H, W), jnp.float32)
    loss_rec = jnp.abs(jax.random.normal(k5, (), jnp.float32))  # stand-in MIM loss

    forward = jax.jit(functools.partial(moco_global_forward, temperature=temperature))
    out = forward(params, queue, queue_ptr,
                  mask_emb_org, mask_emb_view, view_emb_org, view_emb_view, loss_rec)
    jax.block_until_ready(out)

    assert out["total_loss"].shape == ()
    assert out["global_loss"].shape == ()
    assert out["queue"].shape == (out_dim, queue_size)
    assert out["queue_ptr"].shape == ()
    assert bool(jnp.isfinite(out["total_loss"]))
    print("KERNEL_OK")
</pallas_src>

<mosaic_0001>
module attributes {stable_mosaic.version = 11 : i64} {
  func.func @kernel(%arg0: memref<2x512x16xf32, #tpu.memory_space<vmem>>, %arg1: memref<2x512x16xf32, #tpu.memory_space<vmem>>, %arg2: memref<2x512x16xf32, #tpu.memory_space<vmem>>, %arg3: memref<2x512x16xf32, #tpu.memory_space<vmem>>, %arg4: memref<512x256xbf16, #tpu.memory_space<vmem>>, %arg5: memref<1x256xf32, #tpu.memory_space<vmem>>, %arg6: memref<256x128xbf16, #tpu.memory_space<vmem>>, %arg7: memref<1x128xf32, #tpu.memory_space<vmem>>, %arg8: memref<512x256xbf16, #tpu.memory_space<vmem>>, %arg9: memref<1x256xf32, #tpu.memory_space<vmem>>, %arg10: memref<256x128xbf16, #tpu.memory_space<vmem>>, %arg11: memref<1x128xf32, #tpu.memory_space<vmem>>, %arg12: memref<128x256xf32, #tpu.memory_space<vmem>>, %arg13: memref<1xf32, #tpu.memory_space<smem>>, %arg14: memref<4x128xf32, #tpu.memory_space<vmem>>) attributes {dimension_semantics = [], scalar_prefetch = 0 : i64, scratch_operands = 0 : i64, tpu.core_type = #tpu.core_type<tc>} {
    %c0 = arith.constant 0 : index
    %c0_0 = arith.constant 0 : index
    %c0_1 = arith.constant 0 : index
    %0 = vector.load %arg0[%c0, %c0_0, %c0_1] : memref<2x512x16xf32, #tpu.memory_space<vmem>>, vector<2x512x16xf32>
    %c0_2 = arith.constant 0 : index
    %c0_3 = arith.constant 0 : index
    %c0_4 = arith.constant 0 : index
    %1 = vector.load %arg1[%c0_2, %c0_3, %c0_4] : memref<2x512x16xf32, #tpu.memory_space<vmem>>, vector<2x512x16xf32>
    %2 = tpu.concatenate %0, %1 in 0 : vector<2x512x16xf32>, vector<2x512x16xf32> -> vector<4x512x16xf32>
    %c0_5 = arith.constant 0 : index
    %c0_6 = arith.constant 0 : index
    %c0_7 = arith.constant 0 : index
    %3 = vector.load %arg2[%c0_5, %c0_6, %c0_7] : memref<2x512x16xf32, #tpu.memory_space<vmem>>, vector<2x512x16xf32>
    %c0_8 = arith.constant 0 : index
    %c0_9 = arith.constant 0 : index
    %c0_10 = arith.constant 0 : index
    %4 = vector.load %arg3[%c0_8, %c0_9, %c0_10] : memref<2x512x16xf32, #tpu.memory_space<vmem>>, vector<2x512x16xf32>
    %5 = tpu.concatenate %3, %4 in 0 : vector<2x512x16xf32>, vector<2x512x16xf32> -> vector<4x512x16xf32>
    %cst = arith.constant dense<0.000000e+00> : vector<4x512xf32>
    %6 = vector.multi_reduction <add>, %2, %cst [2] : vector<4x512x16xf32> to vector<4x512xf32>
    %cst_11 = arith.constant 1.600000e+01 : f32
    %7 = vector.broadcast %cst_11 : f32 to vector<4x512xf32>
    %8 = arith.divf %6, %7 : vector<4x512xf32>
    %cst_12 = arith.constant dense<0.000000e+00> : vector<4x512xf32>
    %9 = vector.multi_reduction <add>, %5, %cst_12 [2] : vector<4x512x16xf32> to vector<4x512xf32>
    %cst_13 = arith.constant 1.600000e+01 : f32
    %10 = vector.broadcast %cst_13 : f32 to vector<4x512xf32>
    %11 = arith.divf %9, %10 : vector<4x512xf32>
    %12 = arith.truncf %8 : vector<4x512xf32> to vector<4x512xbf16>
    %c0_14 = arith.constant 0 : index
    %c0_15 = arith.constant 0 : index
    %13 = vector.load %arg4[%c0_14, %c0_15] : memref<512x256xbf16, #tpu.memory_space<vmem>>, vector<512x256xbf16>
    %cst_16 = arith.constant dense<0.000000e+00> : vector<4x256xf32>
    %14 = tpu.matmul %12, %13, %cst_16 {dimension_numbers = #tpu.dot_dimension_numbers<[1], [0], [0], [1], [0, 0, 1, 1], [], []>} : vector<4x512xbf16>, vector<512x256xbf16>, vector<4x256xf32> -> vector<4x256xf32>
    %c0_17 = arith.constant 0 : index
    %c0_18 = arith.constant 0 : index
    %15 = vector.load %arg5[%c0_17, %c0_18] : memref<1x256xf32, #tpu.memory_space<vmem>>, vector<1x256xf32>
    %16 = vector.broadcast %15 : vector<1x256xf32> to vector<4x256xf32>
    %17 = arith.addf %14, %16 : vector<4x256xf32>
    %cst_19 = arith.constant 0.000000e+00 : f32
    %18 = vector.broadcast %cst_19 : f32 to vector<4x256xf32>
    %19 = arith.maximumf %17, %18 : vector<4x256xf32>
    %20 = arith.truncf %19 : vector<4x256xf32> to vector<4x256xbf16>
    %c0_20 = arith.constant 0 : index
    %c0_21 = arith.constant 0 : index
    %21 = vector.load %arg6[%c0_20, %c0_21] : memref<256x128xbf16, #tpu.memory_space<vmem>>, vector<256x128xbf16>
    %cst_22 = arith.constant dense<0.000000e+00> : vector<4x128xf32>
    %22 = tpu.matmul %20, %21, %cst_22 {dimension_numbers = #tpu.dot_dimension_numbers<[1], [0], [0], [1], [0, 0, 1, 1], [], []>} : vector<4x256xbf16>, vector<256x128xbf16>, vector<4x128xf32> -> vector<4x128xf32>
    %c0_23 = arith.constant 0 : index
    %c0_24 = arith.constant 0 : index
    %23 = vector.load %arg7[%c0_23, %c0_24] : memref<1x128xf32, #tpu.memory_space<vmem>>, vector<1x128xf32>
    %24 = vector.broadcast %23 : vector<1x128xf32> to vector<4x128xf32>
    %25 = arith.addf %22, %24 : vector<4x128xf32>
    %26 = arith.mulf %25, %25 : vector<4x128xf32>
    %cst_25 = arith.constant dense<0.000000e+00> : vector<4xf32>
    %27 = vector.multi_reduction <add>, %26, %cst_25 [1] : vector<4x128xf32> to vector<4xf32>
    %28 = vector.shape_cast %27 : vector<4xf32> to vector<4x1xf32>
    %cst_26 = arith.constant 1.000000e-24 : f32
    %29 = vector.broadcast %cst_26 : f32 to vector<4x1xf32>
    %30 = arith.maximumf %28, %29 : vector<4x1xf32>
    %31 = math.rsqrt %30 : vector<4x1xf32>
    %32 = vector.broadcast %31 : vector<4x1xf32> to vector<4x128xf32>
    %33 = arith.mulf %25, %32 : vector<4x128xf32>
    %34 = arith.truncf %11 : vector<4x512xf32> to vector<4x512xbf16>
    %c0_27 = arith.constant 0 : index
    %c0_28 = arith.constant 0 : index
    %35 = vector.load %arg8[%c0_27, %c0_28] : memref<512x256xbf16, #tpu.memory_space<vmem>>, vector<512x256xbf16>
    %cst_29 = arith.constant dense<0.000000e+00> : vector<4x256xf32>
    %36 = tpu.matmul %34, %35, %cst_29 {dimension_numbers = #tpu.dot_dimension_numbers<[1], [0], [0], [1], [0, 0, 1, 1], [], []>} : vector<4x512xbf16>, vector<512x256xbf16>, vector<4x256xf32> -> vector<4x256xf32>
    %c0_30 = arith.constant 0 : index
    %c0_31 = arith.constant 0 : index
    %37 = vector.load %arg9[%c0_30, %c0_31] : memref<1x256xf32, #tpu.memory_space<vmem>>, vector<1x256xf32>
    %38 = vector.broadcast %37 : vector<1x256xf32> to vector<4x256xf32>
    %39 = arith.addf %36, %38 : vector<4x256xf32>
    %cst_32 = arith.constant 0.000000e+00 : f32
    %40 = vector.broadcast %cst_32 : f32 to vector<4x256xf32>
    %41 = arith.maximumf %39, %40 : vector<4x256xf32>
    %42 = arith.truncf %41 : vector<4x256xf32> to vector<4x256xbf16>
    %c0_33 = arith.constant 0 : index
    %c0_34 = arith.constant 0 : index
    %43 = vector.load %arg10[%c0_33, %c0_34] : memref<256x128xbf16, #tpu.memory_space<vmem>>, vector<256x128xbf16>
    %cst_35 = arith.constant dense<0.000000e+00> : vector<4x128xf32>
    %44 = tpu.matmul %42, %43, %cst_35 {dimension_numbers = #tpu.dot_dimension_numbers<[1], [0], [0], [1], [0, 0, 1, 1], [], []>} : vector<4x256xbf16>, vector<256x128xbf16>, vector<4x128xf32> -> vector<4x128xf32>
    %c0_36 = arith.constant 0 : index
    %c0_37 = arith.constant 0 : index
    %45 = vector.load %arg11[%c0_36, %c0_37] : memref<1x128xf32, #tpu.memory_space<vmem>>, vector<1x128xf32>
    %46 = vector.broadcast %45 : vector<1x128xf32> to vector<4x128xf32>
    %47 = arith.addf %44, %46 : vector<4x128xf32>
    %48 = arith.mulf %47, %47 : vector<4x128xf32>
    %cst_38 = arith.constant dense<0.000000e+00> : vector<4xf32>
    %49 = vector.multi_reduction <add>, %48, %cst_38 [1] : vector<4x128xf32> to vector<4xf32>
    %50 = vector.shape_cast %49 : vector<4xf32> to vector<4x1xf32>
    %cst_39 = arith.constant 1.000000e-24 : f32
    %51 = vector.broadcast %cst_39 : f32 to vector<4x1xf32>
    %52 = arith.maximumf %50, %51 : vector<4x1xf32>
    %53 = math.rsqrt %52 : vector<4x1xf32>
    %54 = vector.broadcast %53 : vector<4x1xf32> to vector<4x128xf32>
    %55 = arith.mulf %47, %54 : vector<4x128xf32>
    %c0_40 = arith.constant 0 : index
    %c0_41 = arith.constant 0 : index
    %56 = vector.load %arg14[%c0_40, %c0_41] : memref<4x128xf32, #tpu.memory_space<vmem>>, vector<4x128xf32>
    tpu.vector_store %arg14[%c0_40, %c0_41], %55 {strides = array<i32>} : memref<4x128xf32, #tpu.memory_space<vmem>>, vector<4x128xf32>,
    %c0_42 = arith.constant 0 : index
    %c0_43 = arith.constant 0 : index
    %57 = vector.load %arg12[%c0_42, %c0_43] : memref<128x256xf32, #tpu.memory_space<vmem>>, vector<128x256xf32>
    %58 = vector.extract_strided_slice %33 {offsets = [0, 0], sizes = [2, 128], strides = [1, 1]} : vector<4x128xf32> to vector<2x128xf32>
    %59 = vector.extract_strided_slice %33 {offsets = [2, 0], sizes = [2, 128], strides = [1, 1]} : vector<4x128xf32> to vector<2x128xf32>
    %60 = vector.extract_strided_slice %55 {offsets = [0, 0], sizes = [2, 128], strides = [1, 1]} : vector<4x128xf32> to vector<2x128xf32>
    %61 = vector.extract_strided_slice %55 {offsets = [2, 0], sizes = [2, 128], strides = [1, 1]} : vector<4x128xf32> to vector<2x128xf32>
    %62 = arith.mulf %58, %61 : vector<2x128xf32>
    %cst_44 = arith.constant dense<0.000000e+00> : vector<2xf32>
    %63 = vector.multi_reduction <add>, %62, %cst_44 [1] : vector<2x128xf32> to vector<2xf32>
    %64 = vector.shape_cast %63 : vector<2xf32> to vector<2x1xf32>
    %cst_45 = arith.constant 5.000000e+00 : f32
    %65 = vector.broadcast %cst_45 : f32 to vector<2x1xf32>
    %66 = arith.mulf %64, %65 : vector<2x1xf32>
    %cst_46 = arith.constant dense<0.000000e+00> : vector<2x256xf32>
    %67 = tpu.matmul %58, %57, %cst_46 {dimension_numbers = #tpu.dot_dimension_numbers<[1], [0], [0], [1], [0, 0, 1, 1], [], []>} : vector<2x128xf32>, vector<128x256xf32>, vector<2x256xf32> -> vector<2x256xf32>
    %cst_47 = arith.constant 5.000000e+00 : f32
    %68 = vector.broadcast %cst_47 : f32 to vector<2x256xf32>
    %69 = arith.mulf %67, %68 : vector<2x256xf32>
    %cst_48 = arith.constant dense<0xFF800000> : vector<2xf32>
    %70 = vector.multi_reduction <maximumf>, %69, %cst_48 [1] : vector<2x256xf32> to vector<2xf32>
    %71 = vector.shape_cast %70 : vector<2xf32> to vector<2x1xf32>
    %72 = arith.maximumf %66, %71 : vector<2x1xf32>
    %73 = arith.subf %66, %72 : vector<2x1xf32>
    %74 = math.exp %73 : vector<2x1xf32>
    %75 = vector.broadcast %72 : vector<2x1xf32> to vector<2x256xf32>
    %76 = arith.subf %69, %75 : vector<2x256xf32>
    %77 = math.exp %76 : vector<2x256xf32>
    %cst_49 = arith.constant dense<0.000000e+00> : vector<2xf32>
    %78 = vector.multi_reduction <add>, %77, %cst_49 [1] : vector<2x256xf32> to vector<2xf32>
    %79 = vector.shape_cast %78 : vector<2xf32> to vector<2x1xf32>
    %80 = arith.addf %74, %79 : vector<2x1xf32>
    %81 = math.log %80 : vector<2x1xf32>
    %82 = arith.addf %72, %81 : vector<2x1xf32>
    %83 = arith.subf %82, %66 : vector<2x1xf32>
    %84 = vector.shape_cast %83 : vector<2x1xf32> to vector<1x2x1xf32>
    %cst_50 = arith.constant dense<0.000000e+00> : vector<1xf32>
    %85 = vector.multi_reduction <add>, %84, %cst_50 [1, 2] : vector<1x2x1xf32> to vector<1xf32>
    %86 = vector.shape_cast %85 : vector<1xf32> to vector<1x1x1xf32>
    %87 = vector.extract %86[0, 0, 0] : f32 from vector<1x1x1xf32>
    %cst_51 = arith.constant 2.000000e+00 : f32
    %88 = arith.divf %87, %cst_51 : f32
    %89 = arith.mulf %59, %60 : vector<2x128xf32>
    %cst_52 = arith.constant dense<0.000000e+00> : vector<2xf32>
    %90 = vector.multi_reduction <add>, %89, %cst_52 [1] : vector<2x128xf32> to vector<2xf32>
    %91 = vector.shape_cast %90 : vector<2xf32> to vector<2x1xf32>
    %cst_53 = arith.constant 5.000000e+00 : f32
    %92 = vector.broadcast %cst_53 : f32 to vector<2x1xf32>
    %93 = arith.mulf %91, %92 : vector<2x1xf32>
    %cst_54 = arith.constant dense<0.000000e+00> : vector<2x256xf32>
    %94 = tpu.matmul %59, %57, %cst_54 {dimension_numbers = #tpu.dot_dimension_numbers<[1], [0], [0], [1], [0, 0, 1, 1], [], []>} : vector<2x128xf32>, vector<128x256xf32>, vector<2x256xf32> -> vector<2x256xf32>
    %cst_55 = arith.constant 5.000000e+00 : f32
    %95 = vector.broadcast %cst_55 : f32 to vector<2x256xf32>
    %96 = arith.mulf %94, %95 : vector<2x256xf32>
    %cst_56 = arith.constant dense<0xFF800000> : vector<2xf32>
    %97 = vector.multi_reduction <maximumf>, %96, %cst_56 [1] : vector<2x256xf32> to vector<2xf32>
    %98 = vector.shape_cast %97 : vector<2xf32> to vector<2x1xf32>
    %99 = arith.maximumf %93, %98 : vector<2x1xf32>
    %100 = arith.subf %93, %99 : vector<2x1xf32>
    %101 = math.exp %100 : vector<2x1xf32>
    %102 = vector.broadcast %99 : vector<2x1xf32> to vector<2x256xf32>
    %103 = arith.subf %96, %102 : vector<2x256xf32>
    %104 = math.exp %103 : vector<2x256xf32>
    %cst_57 = arith.constant dense<0.000000e+00> : vector<2xf32>
    %105 = vector.multi_reduction <add>, %104, %cst_57 [1] : vector<2x256xf32> to vector<2xf32>
    %106 = vector.shape_cast %105 : vector<2xf32> to vector<2x1xf32>
    %107 = arith.addf %101, %106 : vector<2x1xf32>
    %108 = math.log %107 : vector<2x1xf32>
    %109 = arith.addf %99, %108 : vector<2x1xf32>
    %110 = arith.subf %109, %93 : vector<2x1xf32>
    %111 = vector.shape_cast %110 : vector<2x1xf32> to vector<1x2x1xf32>
    %cst_58 = arith.constant dense<0.000000e+00> : vector<1xf32>
    %112 = vector.multi_reduction <add>, %111, %cst_58 [1, 2] : vector<1x2x1xf32> to vector<1xf32>
    %113 = vector.shape_cast %112 : vector<1xf32> to vector<1x1x1xf32>
    %114 = vector.extract %113[0, 0, 0] : f32 from vector<1x1x1xf32>
    %cst_59 = arith.constant 2.000000e+00 : f32
    %115 = arith.divf %114, %cst_59 : f32
    %116 = arith.addf %88, %115 : f32
    %cst_60 = arith.constant 5.000000e-01 : f32
    %117 = arith.mulf %cst_60, %116 : f32
    %c0_61 = arith.constant 0 : index
    %118 = memref.load %arg13[%c0_61] : memref<1xf32, #tpu.memory_space<smem>>
    memref.store %117, %arg13[%c0_61] : memref<1xf32, #tpu.memory_space<smem>>
    return
  }
}

</mosaic_0001>

<llo_original>
// kernel: moco_global_forward.1
$region0: #{moco_global_forward.1}
  #allocation0 [shape = 'u32[]', space=smem, size = 0x4, offset = 0x4, fixed_abs, tag = 'smem constant byte address 0x4 - core index']
  #allocation1 [shape = 'u32[72,128]{1,0:T(1,128)}', space=vmem, size = 0x9000, scoped, tag = 'internal scratch']
  %s0 = inlined_call_operand.vmem [shape: f32[2,512,16], index: 0, kind: input, shape index: {}]
  %s1 = inlined_call_operand.vmem [shape: f32[2,512,16], index: 1, kind: input, shape index: {}]
  %s2 = inlined_call_operand.vmem [shape: f32[2,512,16], index: 2, kind: input, shape index: {}]
  %s3 = inlined_call_operand.vmem [shape: f32[2,512,16], index: 3, kind: input, shape index: {}]
  %s4 = inlined_call_operand.vmem [shape: bf16[512,256], index: 4, kind: input, shape index: {}]
  %s5 = inlined_call_operand.vmem [shape: f32[1,256], index: 5, kind: input, shape index: {}]
  %s6 = inlined_call_operand.vmem [shape: bf16[256,128], index: 6, kind: input, shape index: {}]
  %s7 = inlined_call_operand.vmem [shape: f32[1,128], index: 7, kind: input, shape index: {}]
  %s8 = inlined_call_operand.vmem [shape: bf16[512,256], index: 8, kind: input, shape index: {}]
  %s9 = inlined_call_operand.vmem [shape: f32[1,256], index: 9, kind: input, shape index: {}]
  %s10 = inlined_call_operand.vmem [shape: bf16[256,128], index: 10, kind: input, shape index: {}]
  %s11 = inlined_call_operand.vmem [shape: f32[1,128], index: 11, kind: input, shape index: {}]
  %s12 = inlined_call_operand.vmem [shape: f32[128,256], index: 12, kind: input, shape index: {}]
  %s13 = inlined_call_operand.hbm [shape: f32[1], index: 13, kind: output, shape index: {0}]
  %s14 = inlined_call_operand.vmem [shape: f32[4,128], index: 14, kind: output, shape index: {1}]
  %15 = xla_tuple %s13, %s14
  %s16 = sld [smem:[#allocation0]]
  $region70: #{moco_global_forward.1} parent=0
    _
  %s18 = ssub.s32 1, %s16
  %s19 = scalar_select 0, %s18, %s16
  $region1: #{moco_global_forward.1} parent=0
    #allocation2 [shape = 'u8[512]{0}', space=smem, size = 0x200, scoped, tag = 'output window, operand 0, single buffered']
    #allocation3 [shape = 's32[1]{0}', space=sflag, size = 0x4, scoped, tag = 'scoped memory for moco_global_forward.1']
    %20 = vsyncpa [#allocation3], 0
    // Predicated region
    $region2: #{moco_global_forward.1} parent=1 // pred_check
      _
    $region3: #{moco_global_forward.1} parent=1 // pred_check_branch
      %22 = sbr.rel (0) target = $region5
    $region4: #{moco_global_forward.1} parent=1 // pred_region
      _
    $region5: #{moco_global_forward.1} parent=1 // pred_fallthru
      _
    // Predicated region
    $region6: #{moco_global_forward.1} parent=1 // pred_check
      _
    $region7: #{moco_global_forward.1} parent=1 // pred_check_branch
      %24 = sbr.rel (0) target = $region9
    $region8: #{moco_global_forward.1} parent=1 // pred_region
      _
    $region9: #{moco_global_forward.1} parent=1 // pred_fallthru
      _
    // Predicated region
    $region10: #{moco_global_forward.1} parent=1 // pred_check
      _
    $region11: #{moco_global_forward.1} parent=1 // pred_check_branch
      %26 = sbr.rel (0) target = $region13
    $region12: #{moco_global_forward.1} parent=1 // pred_region
      _
    $region13: #{moco_global_forward.1} parent=1 // pred_fallthru
      _
    // Predicated region
    $region14: #{moco_global_forward.1} parent=1 // pred_check
      _
    $region15: #{moco_global_forward.1} parent=1 // pred_check_branch
      %28 = sbr.rel (0) target = $region17
    $region16: #{moco_global_forward.1} parent=1 // pred_region
      _
    $region17: #{moco_global_forward.1} parent=1 // pred_fallthru
      _
    // Predicated region
    $region18: #{moco_global_forward.1} parent=1 // pred_check
      _
    $region19: #{moco_global_forward.1} parent=1 // pred_check_branch
      %30 = sbr.rel (0) target = $region21
    $region20: #{moco_global_forward.1} parent=1 // pred_region
      _
    $region21: #{moco_global_forward.1} parent=1 // pred_fallthru
      _
    // Predicated region
    $region22: #{moco_global_forward.1} parent=1 // pred_check
      _
    $region23: #{moco_global_forward.1} parent=1 // pred_check_branch
      %32 = sbr.rel (0) target = $region25
    $region24: #{moco_global_forward.1} parent=1 // pred_region
      _
    $region25: #{moco_global_forward.1} parent=1 // pred_fallthru
      _
    // Predicated region
    $region26: #{moco_global_forward.1} parent=1 // pred_check
      _
    $region27: #{moco_global_forward.1} parent=1 // pred_check_branch
      %34 = sbr.rel (0) target = $region29
    $region28: #{moco_global_forward.1} parent=1 // pred_region
      _
    $region29: #{moco_global_forward.1} parent=1 // pred_fallthru
      _
    // Predicated region
    $region30: #{moco_global_forward.1} parent=1 // pred_check
      _
    $region31: #{moco_global_forward.1} parent=1 // pred_check_branch
      %36 = sbr.rel (0) target = $region33
    $region32: #{moco_global_forward.1} parent=1 // pred_region
      _
    $region33: #{moco_global_forward.1} parent=1 // pred_fallthru
      _
    // Predicated region
    $region34: #{moco_global_forward.1} parent=1 // pred_check
      _
    $region35: #{moco_global_forward.1} parent=1 // pred_check_branch
      %38 = sbr.rel (0) target = $region37
    $region36: #{moco_global_forward.1} parent=1 // pred_region
      _
    $region37: #{moco_global_forward.1} parent=1 // pred_fallthru
      _
    // Predicated region
    $region38: #{moco_global_forward.1} parent=1 // pred_check
      _
    $region39: #{moco_global_forward.1} parent=1 // pred_check_branch
      %40 = sbr.rel (0) target = $region41
    $region40: #{moco_global_forward.1} parent=1 // pred_region
      _
    $region41: #{moco_global_forward.1} parent=1 // pred_fallthru
      _
    // Predicated region
    $region42: #{moco_global_forward.1} parent=1 // pred_check
      _
    $region43: #{moco_global_forward.1} parent=1 // pred_check_branch
      %42 = sbr.rel (0) target = $region45
    $region44: #{moco_global_forward.1} parent=1 // pred_region
      _
    $region45: #{moco_global_forward.1} parent=1 // pred_fallthru
      _
    // Predicated region
    $region46: #{moco_global_forward.1} parent=1 // pred_check
      _
    $region47: #{moco_global_forward.1} parent=1 // pred_check_branch
      %44 = sbr.rel (0) target = $region49
    $region48: #{moco_global_forward.1} parent=1 // pred_region
      _
    $region49: #{moco_global_forward.1} parent=1 // pred_fallthru
      _
    // Predicated region
    $region50: #{moco_global_forward.1} parent=1 // pred_check
      _
    $region51: #{moco_global_forward.1} parent=1 // pred_check_branch
      %46 = sbr.rel (0) target = $region53
    $region52: #{moco_global_forward.1} parent=1 // pred_region
      _
    $region53: #{moco_global_forward.1} parent=1 // pred_fallthru
      _
    %v47 = vld [vmem:[%s0] sm:$0xff]
    %v48 = vld [vmem:[%s0 + $0x8] sm:$0xff]
    %v49 = vld [vmem:[%s0 + $0x10] sm:$0xff]
    %v50 = vld [vmem:[%s0 + $0x18] sm:$0xff]
    %v51 = vld [vmem:[%s0 + $0x20] sm:$0xff]
    %v52 = vld [vmem:[%s0 + $0x28] sm:$0xff]
    %v53 = vld [vmem:[%s0 + $0x30] sm:$0xff]
    %v54 = vld [vmem:[%s0 + $0x38] sm:$0xff]
    %v55 = vld [vmem:[%s0 + $0x40] sm:$0xff]
    %v56 = vld [vmem:[%s0 + $0x48] sm:$0xff]
    %v57 = vld [vmem:[%s0 + $0x50] sm:$0xff]
    %v58 = vld [vmem:[%s0 + $0x58] sm:$0xff]
    %v59 = vld [vmem:[%s0 + $0x60] sm:$0xff]
    %v60 = vld [vmem:[%s0 + $0x68] sm:$0xff]
    %v61 = vld [vmem:[%s0 + $0x70] sm:$0xff]
    %v62 = vld [vmem:[%s0 + $0x78] sm:$0xff]
    %v63 = vld [vmem:[%s0 + $0x80] sm:$0xff]
    %v64 = vld [vmem:[%s0 + $0x88] sm:$0xff]
    %v65 = vld [vmem:[%s0 + $0x90] sm:$0xff]
    %v66 = vld [vmem:[%s0 + $0x98] sm:$0xff]
    %v67 = vld [vmem:[%s0 + $0xa0] sm:$0xff]
    %v68 = vld [vmem:[%s0 + $0xa8] sm:$0xff]
    %v69 = vld [vmem:[%s0 + $0xb0] sm:$0xff]
    %v70 = vld [vmem:[%s0 + $0xb8] sm:$0xff]
    %v71 = vld [vmem:[%s0 + $0xc0] sm:$0xff]
    %v72 = vld [vmem:[%s0 + $0xc8] sm:$0xff]
    %v73 = vld [vmem:[%s0 + $0xd0] sm:$0xff]
    %v74 = vld [vmem:[%s0 + $0xd8] sm:$0xff]
    %v75 = vld [vmem:[%s0 + $0xe0] sm:$0xff]
    %v76 = vld [vmem:[%s0 + $0xe8] sm:$0xff]
    %v77 = vld [vmem:[%s0 + $0xf0] sm:$0xff]
    %v78 = vld [vmem:[%s0 + $0xf8] sm:$0xff]
    %v79 = vld [vmem:[%s0 + $0x100] sm:$0xff]
    %v80 = vld [vmem:[%s0 + $0x108] sm:$0xff]
    %v81 = vld [vmem:[%s0 + $0x110] sm:$0xff]
    %v82 = vld [vmem:[%s0 + $0x118] sm:$0xff]
    %v83 = vld [vmem:[%s0 + $0x120] sm:$0xff]
    %v84 = vld [vmem:[%s0 + $0x128] sm:$0xff]
    %v85 = vld [vmem:[%s0 + $0x130] sm:$0xff]
    %v86 = vld [vmem:[%s0 + $0x138] sm:$0xff]
    %v87 = vld [vmem:[%s0 + $0x140] sm:$0xff]
    %v88 = vld [vmem:[%s0 + $0x148] sm:$0xff]
    %v89 = vld [vmem:[%s0 + $0x150] sm:$0xff]
    %v90 = vld [vmem:[%s0 + $0x158] sm:$0xff]
    %v91 = vld [vmem:[%s0 + $0x160] sm:$0xff]
    %v92 = vld [vmem:[%s0 + $0x168] sm:$0xff]
    %v93 = vld [vmem:[%s0 + $0x170] sm:$0xff]
    %v94 = vld [vmem:[%s0 + $0x178] sm:$0xff]
    %v95 = vld [vmem:[%s0 + $0x180] sm:$0xff]
    %v96 = vld [vmem:[%s0 + $0x188] sm:$0xff]
    %v97 = vld [vmem:[%s0 + $0x190] sm:$0xff]
    %v98 = vld [vmem:[%s0 + $0x198] sm:$0xff]
    %v99 = vld [vmem:[%s0 + $0x1a0] sm:$0xff]
    %v100 = vld [vmem:[%s0 + $0x1a8] sm:$0xff]
    %v101 = vld [vmem:[%s0 + $0x1b0] sm:$0xff]
    %v102 = vld [vmem:[%s0 + $0x1b8] sm:$0xff]
    %v103 = vld [vmem:[%s0 + $0x1c0] sm:$0xff]
    %v104 = vld [vmem:[%s0 + $0x1c8] sm:$0xff]
    %v105 = vld [vmem:[%s0 + $0x1d0] sm:$0xff]
    %v106 = vld [vmem:[%s0 + $0x1d8] sm:$0xff]
    %v107 = vld [vmem:[%s0 + $0x1e0] sm:$0xff]
    %v108 = vld [vmem:[%s0 + $0x1e8] sm:$0xff]
    %v109 = vld [vmem:[%s0 + $0x1f0] sm:$0xff]
    %v110 = vld [vmem:[%s0 + $0x1f8] sm:$0xff]
    %v111 = vld [vmem:[%s0 + $0x200] sm:$0xff]
    %v112 = vld [vmem:[%s0 + $0x208] sm:$0xff]
    %v113 = vld [vmem:[%s0 + $0x210] sm:$0xff]
    %v114 = vld [vmem:[%s0 + $0x218] sm:$0xff]
    %v115 = vld [vmem:[%s0 + $0x220] sm:$0xff]
    %v116 = vld [vmem:[%s0 + $0x228] sm:$0xff]
    %v117 = vld [vmem:[%s0 + $0x230] sm:$0xff]
    %v118 = vld [vmem:[%s0 + $0x238] sm:$0xff]
    %v119 = vld [vmem:[%s0 + $0x240] sm:$0xff]
    %v120 = vld [vmem:[%s0 + $0x248] sm:$0xff]
    %v121 = vld [vmem:[%s0 + $0x250] sm:$0xff]
    %v122 = vld [vmem:[%s0 + $0x258] sm:$0xff]
    %v123 = vld [vmem:[%s0 + $0x260] sm:$0xff]
    %v124 = vld [vmem:[%s0 + $0x268] sm:$0xff]
    %v125 = vld [vmem:[%s0 + $0x270] sm:$0xff]
    %v126 = vld [vmem:[%s0 + $0x278] sm:$0xff]
    %v127 = vld [vmem:[%s0 + $0x280] sm:$0xff]
    %v128 = vld [vmem:[%s0 + $0x288] sm:$0xff]
    %v129 = vld [vmem:[%s0 + $0x290] sm:$0xff]
    %v130 = vld [vmem:[%s0 + $0x298] sm:$0xff]
    %v131 = vld [vmem:[%s0 + $0x2a0] sm:$0xff]
    %v132 = vld [vmem:[%s0 + $0x2a8] sm:$0xff]
    %v133 = vld [vmem:[%s0 + $0x2b0] sm:$0xff]
    %v134 = vld [vmem:[%s0 + $0x2b8] sm:$0xff]
    %v135 = vld [vmem:[%s0 + $0x2c0] sm:$0xff]
    %v136 = vld [vmem:[%s0 + $0x2c8] sm:$0xff]
    %v137 = vld [vmem:[%s0 + $0x2d0] sm:$0xff]
    %v138 = vld [vmem:[%s0 + $0x2d8] sm:$0xff]
    %v139 = vld [vmem:[%s0 + $0x2e0] sm:$0xff]
    %v140 = vld [vmem:[%s0 + $0x2e8] sm:$0xff]
    %v141 = vld [vmem:[%s0 + $0x2f0] sm:$0xff]
    %v142 = vld [vmem:[%s0 + $0x2f8] sm:$0xff]
    %v143 = vld [vmem:[%s0 + $0x300] sm:$0xff]
    %v144 = vld [vmem:[%s0 + $0x308] sm:$0xff]
    %v145 = vld [vmem:[%s0 + $0x310] sm:$0xff]
    %v146 = vld [vmem:[%s0 + $0x318] sm:$0xff]
    %v147 = vld [vmem:[%s0 + $0x320] sm:$0xff]
    %v148 = vld [vmem:[%s0 + $0x328] sm:$0xff]
    %v149 = vld [vmem:[%s0 + $0x330] sm:$0xff]
    %v150 = vld [vmem:[%s0 + $0x338] sm:$0xff]
    %v151 = vld [vmem:[%s0 + $0x340] sm:$0xff]
    %v152 = vld [vmem:[%s0 + $0x348] sm:$0xff]
    %v153 = vld [vmem:[%s0 + $0x350] sm:$0xff]
    %v154 = vld [vmem:[%s0 + $0x358] sm:$0xff]
    %v155 = vld [vmem:[%s0 + $0x360] sm:$0xff]
    %v156 = vld [vmem:[%s0 + $0x368] sm:$0xff]
    %v157 = vld [vmem:[%s0 + $0x370] sm:$0xff]
    %v158 = vld [vmem:[%s0 + $0x378] sm:$0xff]
    %v159 = vld [vmem:[%s0 + $0x380] sm:$0xff]
    %v160 = vld [vmem:[%s0 + $0x388] sm:$0xff]
    %v161 = vld [vmem:[%s0 + $0x390] sm:$0xff]
    %v162 = vld [vmem:[%s0 + $0x398] sm:$0xff]
    %v163 = vld [vmem:[%s0 + $0x3a0] sm:$0xff]
    %v164 = vld [vmem:[%s0 + $0x3a8] sm:$0xff]
    %v165 = vld [vmem:[%s0 + $0x3b0] sm:$0xff]
    %v166 = vld [vmem:[%s0 + $0x3b8] sm:$0xff]
    %v167 = vld [vmem:[%s0 + $0x3c0] sm:$0xff]
    %v168 = vld [vmem:[%s0 + $0x3c8] sm:$0xff]
    %v169 = vld [vmem:[%s0 + $0x3d0] sm:$0xff]
    %v170 = vld [vmem:[%s0 + $0x3d8] sm:$0xff]
    %v171 = vld [vmem:[%s0 + $0x3e0] sm:$0xff]
    %v172 = vld [vmem:[%s0 + $0x3e8] sm:$0xff]
    %v173 = vld [vmem:[%s0 + $0x3f0] sm:$0xff]
    %v174 = vld [vmem:[%s0 + $0x3f8] sm:$0xff]
    %v175 = vld [vmem:[%s1] sm:$0xff]
    %v176 = vld [vmem:[%s1 + $0x8] sm:$0xff]
    %v177 = vld [vmem:[%s1 + $0x10] sm:$0xff]
    %v178 = vld [vmem:[%s1 + $0x18] sm:$0xff]
    %v179 = vld [vmem:[%s1 + $0x20] sm:$0xff]
    %v180 = vld [vmem:[%s1 + $0x28] sm:$0xff]
    %v181 = vld [vmem:[%s1 + $0x30] sm:$0xff]
    %v182 = vld [vmem:[%s1 + $0x38] sm:$0xff]
    %v183 = vld [vmem:[%s1 + $0x40] sm:$0xff]
    %v184 = vld [vmem:[%s1 + $0x48] sm:$0xff]
    %v185 = vld [vmem:[%s1 + $0x50] sm:$0xff]
    %v186 = vld [vmem:[%s1 + $0x58] sm:$0xff]
    %v187 = vld [vmem:[%s1 + $0x60] sm:$0xff]
    %v188 = vld [vmem:[%s1 + $0x68] sm:$0xff]
    %v189 = vld [vmem:[%s1 + $0x70] sm:$0xff]
    %v190 = vld [vmem:[%s1 + $0x78] sm:$0xff]
    %v191 = vld [vmem:[%s1 + $0x80] sm:$0xff]
    %v192 = vld [vmem:[%s1 + $0x88] sm:$0xff]
    %v193 = vld [vmem:[%s1 + $0x90] sm:$0xff]
    %v194 = vld [vmem:[%s1 + $0x98] sm:$0xff]
    %v195 = vld [vmem:[%s1 + $0xa0] sm:$0xff]
    %v196 = vld [vmem:[%s1 + $0xa8] sm:$0xff]
    %v197 = vld [vmem:[%s1 + $0xb0] sm:$0xff]
    %v198 = vld [vmem:[%s1 + $0xb8] sm:$0xff]
    %v199 = vld [vmem:[%s1 + $0xc0] sm:$0xff]
    %v200 = vld [vmem:[%s1 + $0xc8] sm:$0xff]
    %v201 = vld [vmem:[%s1 + $0xd0] sm:$0xff]
    %v202 = vld [vmem:[%s1 + $0xd8] sm:$0xff]
    %v203 = vld [vmem:[%s1 + $0xe0] sm:$0xff]
    %v204 = vld [vmem:[%s1 + $0xe8] sm:$0xff]
    %v205 = vld [vmem:[%s1 + $0xf0] sm:$0xff]
    %v206 = vld [vmem:[%s1 + $0xf8] sm:$0xff]
    %v207 = vld [vmem:[%s1 + $0x100] sm:$0xff]
    %v208 = vld [vmem:[%s1 + $0x108] sm:$0xff]
    %v209 = vld [vmem:[%s1 + $0x110] sm:$0xff]
    %v210 = vld [vmem:[%s1 + $0x118] sm:$0xff]
    %v211 = vld [vmem:[%s1 + $0x120] sm:$0xff]
    %v212 = vld [vmem:[%s1 + $0x128] sm:$0xff]
    %v213 = vld [vmem:[%s1 + $0x130] sm:$0xff]
    %v214 = vld [vmem:[%s1 + $0x138] sm:$0xff]
    %v215 = vld [vmem:[%s1 + $0x140] sm:$0xff]
    %v216 = vld [vmem:[%s1 + $0x148] sm:$0xff]
    %v217 = vld [vmem:[%s1 + $0x150] sm:$0xff]
    %v218 = vld [vmem:[%s1 + $0x158] sm:$0xff]
    %v219 = vld [vmem:[%s1 + $0x160] sm:$0xff]
    %v220 = vld [vmem:[%s1 + $0x168] sm:$0xff]
    %v221 = vld [vmem:[%s1 + $0x170] sm:$0xff]
    %v222 = vld [vmem:[%s1 + $0x178] sm:$0xff]
    %v223 = vld [vmem:[%s1 + $0x180] sm:$0xff]
    %v224 = vld [vmem:[%s1 + $0x188] sm:$0xff]
    %v225 = vld [vmem:[%s1 + $0x190] sm:$0xff]
    %v226 = vld [vmem:[%s1 + $0x198] sm:$0xff]
    %v227 = vld [vmem:[%s1 + $0x1a0] sm:$0xff]
    %v228 = vld [vmem:[%s1 + $0x1a8] sm:$0xff]
    %v229 = vld [vmem:[%s1 + $0x1b0] sm:$0xff]
    %v230 = vld [vmem:[%s1 + $0x1b8] sm:$0xff]
    %v231 = vld [vmem:[%s1 + $0x1c0] sm:$0xff]
    %v232 = vld [vmem:[%s1 + $0x1c8] sm:$0xff]
    %v233 = vld [vmem:[%s1 + $0x1d0] sm:$0xff]
    %v234 = vld [vmem:[%s1 + $0x1d8] sm:$0xff]
    %v235 = vld [vmem:[%s1 + $0x1e0] sm:$0xff]
    %v236 = vld [vmem:[%s1 + $0x1e8] sm:$0xff]
    %v237 = vld [vmem:[%s1 + $0x1f0] sm:$0xff]
    %v238 = vld [vmem:[%s1 + $0x1f8] sm:$0xff]
    %v239 = vld [vmem:[%s1 + $0x200] sm:$0xff]
    %v240 = vld [vmem:[%s1 + $0x208] sm:$0xff]
    %v241 = vld [vmem:[%s1 + $0x210] sm:$0xff]
    %v242 = vld [vmem:[%s1 + $0x218] sm:$0xff]
    %v243 = vld [vmem:[%s1 + $0x220] sm:$0xff]
    %v244 = vld [vmem:[%s1 + $0x228] sm:$0xff]
    %v245 = vld [vmem:[%s1 + $0x230] sm:$0xff]
    %v246 = vld [vmem:[%s1 + $0x238] sm:$0xff]
    %v247 = vld [vmem:[%s1 + $0x240] sm:$0xff]
    %v248 = vld [vmem:[%s1 + $0x248] sm:$0xff]
    %v249 = vld [vmem:[%s1 + $0x250] sm:$0xff]
    %v250 = vld [vmem:[%s1 + $0x258] sm:$0xff]
    %v251 = vld [vmem:[%s1 + $0x260] sm:$0xff]
    %v252 = vld [vmem:[%s1 + $0x268] sm:$0xff]
    %v253 = vld [vmem:[%s1 + $0x270] sm:$0xff]
    %v254 = vld [vmem:[%s1 + $0x278] sm:$0xff]
    %v255 = vld [vmem:[%s1 + $0x280] sm:$0xff]
    %v256 = vld [vmem:[%s1 + $0x288] sm:$0xff]
    %v257 = vld [vmem:[%s1 + $0x290] sm:$0xff]
    %v258 = vld [vmem:[%s1 + $0x298] sm:$0xff]
    %v259 = vld [vmem:[%s1 + $0x2a0] sm:$0xff]
    %v260 = vld [vmem:[%s1 + $0x2a8] sm:$0xff]
    %v261 = vld [vmem:[%s1 + $0x2b0] sm:$0xff]
    %v262 = vld [vmem:[%s1 + $0x2b8] sm:$0xff]
    %v263 = vld [vmem:[%s1 + $0x2c0] sm:$0xff]
    %v264 = vld [vmem:[%s1 + $0x2c8] sm:$0xff]
    %v265 = vld [vmem:[%s1 + $0x2d0] sm:$0xff]
    %v266 = vld [vmem:[%s1 + $0x2d8] sm:$0xff]
    %v267 = vld [vmem:[%s1 + $0x2e0] sm:$0xff]
    %v268 = vld [vmem:[%s1 + $0x2e8] sm:$0xff]
    %v269 = vld [vmem:[%s1 + $0x2f0] sm:$0xff]
    %v270 = vld [vmem:[%s1 + $0x2f8] sm:$0xff]
    %v271 = vld [vmem:[%s1 + $0x300] sm:$0xff]
    %v272 = vld [vmem:[%s1 + $0x308] sm:$0xff]
    %v273 = vld [vmem:[%s1 + $0x310] sm:$0xff]
    %v274 = vld [vmem:[%s1 + $0x318] sm:$0xff]
    %v275 = vld [vmem:[%s1 + $0x320] sm:$0xff]
    %v276 = vld [vmem:[%s1 + $0x328] sm:$0xff]
    %v277 = vld [vmem:[%s1 + $0x330] sm:$0xff]
    %v278 = vld [vmem:[%s1 + $0x338] sm:$0xff]
    %v279 = vld [vmem:[%s1 + $0x340] sm:$0xff]
    %v280 = vld [vmem:[%s1 + $0x348] sm:$0xff]
    %v281 = vld [vmem:[%s1 + $0x350] sm:$0xff]
    %v282 = vld [vmem:[%s1 + $0x358] sm:$0xff]
    %v283 = vld [vmem:[%s1 + $0x360] sm:$0xff]
    %v284 = vld [vmem:[%s1 + $0x368] sm:$0xff]
    %v285 = vld [vmem:[%s1 + $0x370] sm:$0xff]
    %v286 = vld [vmem:[%s1 + $0x378] sm:$0xff]
    %v287 = vld [vmem:[%s1 + $0x380] sm:$0xff]
    %v288 = vld [vmem:[%s1 + $0x388] sm:$0xff]
    %v289 = vld [vmem:[%s1 + $0x390] sm:$0xff]
    %v290 = vld [vmem:[%s1 + $0x398] sm:$0xff]
    %v291 = vld [vmem:[%s1 + $0x3a0] sm:$0xff]
    %v292 = vld [vmem:[%s1 + $0x3a8] sm:$0xff]
    %v293 = vld [vmem:[%s1 + $0x3b0] sm:$0xff]
    %v294 = vld [vmem:[%s1 + $0x3b8] sm:$0xff]
    %v295 = vld [vmem:[%s1 + $0x3c0] sm:$0xff]
    %v296 = vld [vmem:[%s1 + $0x3c8] sm:$0xff]
    %v297 = vld [vmem:[%s1 + $0x3d0] sm:$0xff]
    %v298 = vld [vmem:[%s1 + $0x3d8] sm:$0xff]
    %v299 = vld [vmem:[%s1 + $0x3e0] sm:$0xff]
    %v300 = vld [vmem:[%s1 + $0x3e8] sm:$0xff]
    %v301 = vld [vmem:[%s1 + $0x3f0] sm:$0xff]
    %v302 = vld [vmem:[%s1 + $0x3f8] sm:$0xff]
    %v303 = vld [vmem:[%s2] sm:$0xff]
    %v304 = vld [vmem:[%s2 + $0x8] sm:$0xff]
    %v305 = vld [vmem:[%s2 + $0x10] sm:$0xff]
    %v306 = vld [vmem:[%s2 + $0x18] sm:$0xff]
    %v307 = vld [vmem:[%s2 + $0x20] sm:$0xff]
    %v308 = vld [vmem:[%s2 + $0x28] sm:$0xff]
    %v309 = vld [vmem:[%s2 + $0x30] sm:$0xff]
    %v310 = vld [vmem:[%s2 + $0x38] sm:$0xff]
    %v311 = vld [vmem:[%s2 + $0x40] sm:$0xff]
    %v312 = vld [vmem:[%s2 + $0x48] sm:$0xff]
    %v313 = vld [vmem:[%s2 + $0x50] sm:$0xff]
    %v314 = vld [vmem:[%s2 + $0x58] sm:$0xff]
    %v315 = vld [vmem:[%s2 + $0x60] sm:$0xff]
    %v316 = vld [vmem:[%s2 + $0x68] sm:$0xff]
    %v317 = vld [vmem:[%s2 + $0x70] sm:$0xff]
    %v318 = vld [vmem:[%s2 + $0x78] sm:$0xff]
    %v319 = vld [vmem:[%s2 + $0x80] sm:$0xff]
    %v320 = vld [vmem:[%s2 + $0x88] sm:$0xff]
    %v321 = vld [vmem:[%s2 + $0x90] sm:$0xff]
    %v322 = vld [vmem:[%s2 + $0x98] sm:$0xff]
    %v323 = vld [vmem:[%s2 + $0xa0] sm:$0xff]
    %v324 = vld [vmem:[%s2 + $0xa8] sm:$0xff]
    %v325 = vld [vmem:[%s2 + $0xb0] sm:$0xff]
    %v326 = vld [vmem:[%s2 + $0xb8] sm:$0xff]
    %v327 = vld [vmem:[%s2 + $0xc0] sm:$0xff]
    %v328 = vld [vmem:[%s2 + $0xc8] sm:$0xff]
    %v329 = vld [vmem:[%s2 + $0xd0] sm:$0xff]
    %v330 = vld [vmem:[%s2 + $0xd8] sm:$0xff]
    %v331 = vld [vmem:[%s2 + $0xe0] sm:$0xff]
    %v332 = vld [vmem:[%s2 + $0xe8] sm:$0xff]
    %v333 = vld [vmem:[%s2 + $0xf0] sm:$0xff]
    %v334 = vld [vmem:[%s2 + $0xf8] sm:$0xff]
    %v335 = vld [vmem:[%s2 + $0x100] sm:$0xff]
    %v336 = vld [vmem:[%s2 + $0x108] sm:$0xff]
    %v337 = vld [vmem:[%s2 + $0x110] sm:$0xff]
    %v338 = vld [vmem:[%s2 + $0x118] sm:$0xff]
    %v339 = vld [vmem:[%s2 + $0x120] sm:$0xff]
    %v340 = vld [vmem:[%s2 + $0x128] sm:$0xff]
    %v341 = vld [vmem:[%s2 + $0x130] sm:$0xff]
    %v342 = vld [vmem:[%s2 + $0x138] sm:$0xff]
    %v343 = vld [vmem:[%s2 + $0x140] sm:$0xff]
    %v344 = vld [vmem:[%s2 + $0x148] sm:$0xff]
    %v345 = vld [vmem:[%s2 + $0x150] sm:$0xff]
    %v346 = vld [vmem:[%s2 + $0x158] sm:$0xff]
    %v347 = vld [vmem:[%s2 + $0x160] sm:$0xff]
    %v348 = vld [vmem:[%s2 + $0x168] sm:$0xff]
    %v349 = vld [vmem:[%s2 + $0x170] sm:$0xff]
    %v350 = vld [vmem:[%s2 + $0x178] sm:$0xff]
    %v351 = vld [vmem:[%s2 + $0x180] sm:$0xff]
    %v352 = vld [vmem:[%s2 + $0x188] sm:$0xff]
    %v353 = vld [vmem:[%s2 + $0x190] sm:$0xff]
    %v354 = vld [vmem:[%s2 + $0x198] sm:$0xff]
    %v355 = vld [vmem:[%s2 + $0x1a0] sm:$0xff]
    %v356 = vld [vmem:[%s2 + $0x1a8] sm:$0xff]
    %v357 = vld [vmem:[%s2 + $0x1b0] sm:$0xff]
    %v358 = vld [vmem:[%s2 + $0x1b8] sm:$0xff]
    %v359 = vld [vmem:[%s2 + $0x1c0] sm:$0xff]
    %v360 = vld [vmem:[%s2 + $0x1c8] sm:$0xff]
    %v361 = vld [vmem:[%s2 + $0x1d0] sm:$0xff]
    %v362 = vld [vmem:[%s2 + $0x1d8] sm:$0xff]
    %v363 = vld [vmem:[%s2 + $0x1e0] sm:$0xff]
    %v364 = vld [vmem:[%s2 + $0x1e8] sm:$0xff]
    %v365 = vld [vmem:[%s2 + $0x1f0] sm:$0xff]
    %v366 = vld [vmem:[%s2 + $0x1f8] sm:$0xff]
    %v367 = vld [vmem:[%s2 + $0x200] sm:$0xff]
    %v368 = vld [vmem:[%s2 + $0x208] sm:$0xff]
    %v369 = vld [vmem:[%s2 + $0x210] sm:$0xff]
    %v370 = vld [vmem:[%s2 + $0x218] sm:$0xff]
    %v371 = vld [vmem:[%s2 + $0x220] sm:$0xff]
    %v372 = vld [vmem:[%s2 + $0x228] sm:$0xff]
    %v373 = vld [vmem:[%s2 + $0x230] sm:$0xff]
    %v374 = vld [vmem:[%s2 + $0x238] sm:$0xff]
    %v375 = vld [vmem:[%s2 + $0x240] sm:$0xff]
    %v376 = vld [vmem:[%s2 + $0x248] sm:$0xff]
    %v377 = vld [vmem:[%s2 + $0x250] sm:$0xff]
    %v378 = vld [vmem:[%s2 + $0x258] sm:$0xff]
    %v379 = vld [vmem:[%s2 + $0x260] sm:$0xff]
    %v380 = vld [vmem:[%s2 + $0x268] sm:$0xff]
    %v381 = vld [vmem:[%s2 + $0x270] sm:$0xff]
    %v382 = vld [vmem:[%s2 + $0x278] sm:$0xff]
    %v383 = vld [vmem:[%s2 + $0x280] sm:$0xff]
    %v384 = vld [vmem:[%s2 + $0x288] sm:$0xff]
    %v385 = vld [vmem:[%s2 + $0x290] sm:$0xff]
    %v386 = vld [vmem:[%s2 + $0x298] sm:$0xff]
    %v387 = vld [vmem:[%s2 + $0x2a0] sm:$0xff]
    %v388 = vld [vmem:[%s2 + $0x2a8] sm:$0xff]
    %v389 = vld [vmem:[%s2 + $0x2b0] sm:$0xff]
    %v390 = vld [vmem:[%s2 + $0x2b8] sm:$0xff]
    %v391 = vld [vmem:[%s2 + $0x2c0] sm:$0xff]
    %v392 = vld [vmem:[%s2 + $0x2c8] sm:$0xff]
    %v393 = vld [vmem:[%s2 + $0x2d0] sm:$0xff]
    %v394 = vld [vmem:[%s2 + $0x2d8] sm:$0xff]
    %v395 = vld [vmem:[%s2 + $0x2e0] sm:$0xff]
    %v396 = vld [vmem:[%s2 + $0x2e8] sm:$0xff]
    %v397 = vld [vmem:[%s2 + $0x2f0] sm:$0xff]
    %v398 = vld [vmem:[%s2 + $0x2f8] sm:$0xff]
    %v399 = vld [vmem:[%s2 + $0x300] sm:$0xff]
    %v400 = vld [vmem:[%s2 + $0x308] sm:$0xff]
    %v401 = vld [vmem:[%s2 + $0x310] sm:$0xff]
    %v402 = vld [vmem:[%s2 + $0x318] sm:$0xff]
    %v403 = vld [vmem:[%s2 + $0x320] sm:$0xff]
    %v404 = vld [vmem:[%s2 + $0x328] sm:$0xff]
    %v405 = vld [vmem:[%s2 + $0x330] sm:$0xff]
    %v406 = vld [vmem:[%s2 + $0x338] sm:$0xff]
    %v407 = vld [vmem:[%s2 + $0x340] sm:$0xff]
    %v408 = vld [vmem:[%s2 + $0x348] sm:$0xff]
    %v409 = vld [vmem:[%s2 + $0x350] sm:$0xff]
    %v410 = vld [vmem:[%s2 + $0x358] sm:$0xff]
    %v411 = vld [vmem:[%s2 + $0x360] sm:$0xff]
    %v412 = vld [vmem:[%s2 + $0x368] sm:$0xff]
    %v413 = vld [vmem:[%s2 + $0x370] sm:$0xff]
    %v414 = vld [vmem:[%s2 + $0x378] sm:$0xff]
    %v415 = vld [vmem:[%s2 + $0x380] sm:$0xff]
    %v416 = vld [vmem:[%s2 + $0x388] sm:$0xff]
    %v417 = vld [vmem:[%s2 + $0x390] sm:$0xff]
    %v418 = vld [vmem:[%s2 + $0x398] sm:$0xff]
    %v419 = vld [vmem:[%s2 + $0x3a0] sm:$0xff]
    %v420 = vld [vmem:[%s2 + $0x3a8] sm:$0xff]
    %v421 = vld [vmem:[%s2 + $0x3b0] sm:$0xff]
    %v422 = vld [vmem:[%s2 + $0x3b8] sm:$0xff]
    %v423 = vld [vmem:[%s2 + $0x3c0] sm:$0xff]
    %v424 = vld [vmem:[%s2 + $0x3c8] sm:$0xff]
    %v425 = vld [vmem:[%s2 + $0x3d0] sm:$0xff]
    %v426 = vld [vmem:[%s2 + $0x3d8] sm:$0xff]
    %v427 = vld [vmem:[%s2 + $0x3e0] sm:$0xff]
    %v428 = vld [vmem:[%s2 + $0x3e8] sm:$0xff]
    %v429 = vld [vmem:[%s2 + $0x3f0] sm:$0xff]
    %v430 = vld [vmem:[%s2 + $0x3f8] sm:$0xff]
    %v431 = vld [vmem:[%s3] sm:$0xff]
    %v432 = vld [vmem:[%s3 + $0x8] sm:$0xff]
    %v433 = vld [vmem:[%s3 + $0x10] sm:$0xff]
    %v434 = vld [vmem:[%s3 + $0x18] sm:$0xff]
    %v435 = vld [vmem:[%s3 + $0x20] sm:$0xff]
    %v436 = vld [vmem:[%s3 + $0x28] sm:$0xff]
    %v437 = vld [vmem:[%s3 + $0x30] sm:$0xff]
    %v438 = vld [vmem:[%s3 + $0x38] sm:$0xff]
    %v439 = vld [vmem:[%s3 + $0x40] sm:$0xff]
    %v440 = vld [vmem:[%s3 + $0x48] sm:$0xff]
    %v441 = vld [vmem:[%s3 + $0x50] sm:$0xff]
    %v442 = vld [vmem:[%s3 + $0x58] sm:$0xff]
    %v443 = vld [vmem:[%s3 + $0x60] sm:$0xff]
    %v444 = vld [vmem:[%s3 + $0x68] sm:$0xff]
    %v445 = vld [vmem:[%s3 + $0x70] sm:$0xff]
    %v446 = vld [vmem:[%s3 + $0x78] sm:$0xff]
    %v447 = vld [vmem:[%s3 + $0x80] sm:$0xff]
    %v448 = vld [vmem:[%s3 + $0x88] sm:$0xff]
    %v449 = vld [vmem:[%s3 + $0x90] sm:$0xff]
    %v450 = vld [vmem:[%s3 + $0x98] sm:$0xff]
    %v451 = vld [vmem:[%s3 + $0xa0] sm:$0xff]
    %v452 = vld [vmem:[%s3 + $0xa8] sm:$0xff]
    %v453 = vld [vmem:[%s3 + $0xb0] sm:$0xff]
    %v454 = vld [vmem:[%s3 + $0xb8] sm:$0xff]
    %v455 = vld [vmem:[%s3 + $0xc0] sm:$0xff]
    %v456 = vld [vmem:[%s3 + $0xc8] sm:$0xff]
    %v457 = vld [vmem:[%s3 + $0xd0] sm:$0xff]
    %v458 = vld [vmem:[%s3 + $0xd8] sm:$0xff]
    %v459 = vld [vmem:[%s3 + $0xe0] sm:$0xff]
    %v460 = vld [vmem:[%s3 + $0xe8] sm:$0xff]
    %v461 = vld [vmem:[%s3 + $0xf0] sm:$0xff]
    %v462 = vld [vmem:[%s3 + $0xf8] sm:$0xff]
    %v463 = vld [vmem:[%s3 + $0x100] sm:$0xff]
    %v464 = vld [vmem:[%s3 + $0x108] sm:$0xff]
    %v465 = vld [vmem:[%s3 + $0x110] sm:$0xff]
    %v466 = vld [vmem:[%s3 + $0x118] sm:$0xff]
    %v467 = vld [vmem:[%s3 + $0x120] sm:$0xff]
    %v468 = vld [vmem:[%s3 + $0x128] sm:$0xff]
    %v469 = vld [vmem:[%s3 + $0x130] sm:$0xff]
    %v470 = vld [vmem:[%s3 + $0x138] sm:$0xff]
    %v471 = vld [vmem:[%s3 + $0x140] sm:$0xff]
    %v472 = vld [vmem:[%s3 + $0x148] sm:$0xff]
    %v473 = vld [vmem:[%s3 + $0x150] sm:$0xff]
    %v474 = vld [vmem:[%s3 + $0x158] sm:$0xff]
    %v475 = vld [vmem:[%s3 + $0x160] sm:$0xff]
    %v476 = vld [vmem:[%s3 + $0x168] sm:$0xff]
    %v477 = vld [vmem:[%s3 + $0x170] sm:$0xff]
    %v478 = vld [vmem:[%s3 + $0x178] sm:$0xff]
    %v479 = vld [vmem:[%s3 + $0x180] sm:$0xff]
    %v480 = vld [vmem:[%s3 + $0x188] sm:$0xff]
    %v481 = vld [vmem:[%s3 + $0x190] sm:$0xff]
    %v482 = vld [vmem:[%s3 + $0x198] sm:$0xff]
    %v483 = vld [vmem:[%s3 + $0x1a0] sm:$0xff]
    %v484 = vld [vmem:[%s3 + $0x1a8] sm:$0xff]
    %v485 = vld [vmem:[%s3 + $0x1b0] sm:$0xff]
    %v486 = vld [vmem:[%s3 + $0x1b8] sm:$0xff]
    %v487 = vld [vmem:[%s3 + $0x1c0] sm:$0xff]
    %v488 = vld [vmem:[%s3 + $0x1c8] sm:$0xff]
    %v489 = vld [vmem:[%s3 + $0x1d0] sm:$0xff]
    %v490 = vld [vmem:[%s3 + $0x1d8] sm:$0xff]
    %v491 = vld [vmem:[%s3 + $0x1e0] sm:$0xff]
    %v492 = vld [vmem:[%s3 + $0x1e8] sm:$0xff]
    %v493 = vld [vmem:[%s3 + $0x1f0] sm:$0xff]
    %v494 = vld [vmem:[%s3 + $0x1f8] sm:$0xff]
    %v495 = vld [vmem:[%s3 + $0x200] sm:$0xff]
    %v496 = vld [vmem:[%s3 + $0x208] sm:$0xff]
    %v497 = vld [vmem:[%s3 + $0x210] sm:$0xff]
    %v498 = vld [vmem:[%s3 + $0x218] sm:$0xff]
    %v499 = vld [vmem:[%s3 + $0x220] sm:$0xff]
    %v500 = vld [vmem:[%s3 + $0x228] sm:$0xff]
    %v501 = vld [vmem:[%s3 + $0x230] sm:$0xff]
    %v502 = vld [vmem:[%s3 + $0x238] sm:$0xff]
    %v503 = vld [vmem:[%s3 + $0x240] sm:$0xff]
    %v504 = vld [vmem:[%s3 + $0x248] sm:$0xff]
    %v505 = vld [vmem:[%s3 + $0x250] sm:$0xff]
    %v506 = vld [vmem:[%s3 + $0x258] sm:$0xff]
    %v507 = vld [vmem:[%s3 + $0x260] sm:$0xff]
    %v508 = vld [vmem:[%s3 + $0x268] sm:$0xff]
    %v509 = vld [vmem:[%s3 + $0x270] sm:$0xff]
    %v510 = vld [vmem:[%s3 + $0x278] sm:$0xff]
    %v511 = vld [vmem:[%s3 + $0x280] sm:$0xff]
    %v512 = vld [vmem:[%s3 + $0x288] sm:$0xff]
    %v513 = vld [vmem:[%s3 + $0x290] sm:$0xff]
    %v514 = vld [vmem:[%s3 + $0x298] sm:$0xff]
    %v515 = vld [vmem:[%s3 + $0x2a0] sm:$0xff]
    %v516 = vld [vmem:[%s3 + $0x2a8] sm:$0xff]
    %v517 = vld [vmem:[%s3 + $0x2b0] sm:$0xff]
    %v518 = vld [vmem:[%s3 + $0x2b8] sm:$0xff]
    %v519 = vld [vmem:[%s3 + $0x2c0] sm:$0xff]
    %v520 = vld [vmem:[%s3 + $0x2c8] sm:$0xff]
    %v521 = vld [vmem:[%s3 + $0x2d0] sm:$0xff]
    %v522 = vld [vmem:[%s3 + $0x2d8] sm:$0xff]
    %v523 = vld [vmem:[%s3 + $0x2e0] sm:$0xff]
    %v524 = vld [vmem:[%s3 + $0x2e8] sm:$0xff]
    %v525 = vld [vmem:[%s3 + $0x2f0] sm:$0xff]
    %v526 = vld [vmem:[%s3 + $0x2f8] sm:$0xff]
    %v527 = vld [vmem:[%s3 + $0x300] sm:$0xff]
    %v528 = vld [vmem:[%s3 + $0x308] sm:$0xff]
    %v529 = vld [vmem:[%s3 + $0x310] sm:$0xff]
    %v530 = vld [vmem:[%s3 + $0x318] sm:$0xff]
    %v531 = vld [vmem:[%s3 + $0x320] sm:$0xff]
    %v532 = vld [vmem:[%s3 + $0x328] sm:$0xff]
    %v533 = vld [vmem:[%s3 + $0x330] sm:$0xff]
    %v534 = vld [vmem:[%s3 + $0x338] sm:$0xff]
    %v535 = vld [vmem:[%s3 + $0x340] sm:$0xff]
    %v536 = vld [vmem:[%s3 + $0x348] sm:$0xff]
    %v537 = vld [vmem:[%s3 + $0x350] sm:$0xff]
    %v538 = vld [vmem:[%s3 + $0x358] sm:$0xff]
    %v539 = vld [vmem:[%s3 + $0x360] sm:$0xff]
    %v540 = vld [vmem:[%s3 + $0x368] sm:$0xff]
    %v541 = vld [vmem:[%s3 + $0x370] sm:$0xff]
    %v542 = vld [vmem:[%s3 + $0x378] sm:$0xff]
    %v543 = vld [vmem:[%s3 + $0x380] sm:$0xff]
    %v544 = vld [vmem:[%s3 + $0x388] sm:$0xff]
    %v545 = vld [vmem:[%s3 + $0x390] sm:$0xff]
    %v546 = vld [vmem:[%s3 + $0x398] sm:$0xff]
    %v547 = vld [vmem:[%s3 + $0x3a0] sm:$0xff]
    %v548 = vld [vmem:[%s3 + $0x3a8] sm:$0xff]
    %v549 = vld [vmem:[%s3 + $0x3b0] sm:$0xff]
    %v550 = vld [vmem:[%s3 + $0x3b8] sm:$0xff]
    %v551 = vld [vmem:[%s3 + $0x3c0] sm:$0xff]
    %v552 = vld [vmem:[%s3 + $0x3c8] sm:$0xff]
    %v553 = vld [vmem:[%s3 + $0x3d0] sm:$0xff]
    %v554 = vld [vmem:[%s3 + $0x3d8] sm:$0xff]
    %v555 = vld [vmem:[%s3 + $0x3e0] sm:$0xff]
    %v556 = vld [vmem:[%s3 + $0x3e8] sm:$0xff]
    %v557 = vld [vmem:[%s3 + $0x3f0] sm:$0xff]
    %v558 = vld [vmem:[%s3 + $0x3f8] sm:$0xff]
    %vm559 = vcmask 130048
    %v560 = vsel %vm559, %v47, 0.0
    %561 = vadd.xlane.f32.xlu0 %v560
    %v562 = vpop.xlane.xlu0 %561
    %v563 = vsel %vm559, %v48, 0.0
    %564 = vadd.xlane.f32.xlu0 %v563
    %v565 = vpop.xlane.xlu0 %564
    %v566 = vsel %vm559, %v49, 0.0
    %567 = vadd.xlane.f32.xlu0 %v566
    %v568 = vpop.xlane.xlu0 %567
    %v569 = vsel %vm559, %v50, 0.0
    %570 = vadd.xlane.f32.xlu0 %v569
    %v571 = vpop.xlane.xlu0 %570
    %v572 = vsel %vm559, %v51, 0.0
    %573 = vadd.xlane.f32.xlu0 %v572
    %v574 = vpop.xlane.xlu0 %573
    %v575 = vsel %vm559, %v52, 0.0
    %576 = vadd.xlane.f32.xlu0 %v575
    %v577 = vpop.xlane.xlu0 %576
    %v578 = vsel %vm559, %v53, 0.0
    %579 = vadd.xlane.f32.xlu0 %v578
    %v580 = vpop.xlane.xlu0 %579
    %v581 = vsel %vm559, %v54, 0.0
    %582 = vadd.xlane.f32.xlu0 %v581
    %v583 = vpop.xlane.xlu0 %582
    %v584 = vsel %vm559, %v55, 0.0
    %585 = vadd.xlane.f32.xlu0 %v584
    %v586 = vpop.xlane.xlu0 %585
    %v587 = vsel %vm559, %v56, 0.0
    %588 = vadd.xlane.f32.xlu0 %v587
    %v589 = vpop.xlane.xlu0 %588
    %v590 = vsel %vm559, %v57, 0.0
    %591 = vadd.xlane.f32.xlu0 %v590
    %v592 = vpop.xlane.xlu0 %591
    %v593 = vsel %vm559, %v58, 0.0
    %594 = vadd.xlane.f32.xlu0 %v593
    %v595 = vpop.xlane.xlu0 %594
    %v596 = vsel %vm559, %v59, 0.0
    %597 = vadd.xlane.f32.xlu0 %v596
    %v598 = vpop.xlane.xlu0 %597
    %v599 = vsel %vm559, %v60, 0.0
    %600 = vadd.xlane.f32.xlu0 %v599
    %v601 = vpop.xlane.xlu0 %600
    %v602 = vsel %vm559, %v61, 0.0
    %603 = vadd.xlane.f32.xlu0 %v602
    %v604 = vpop.xlane.xlu0 %603
    %v605 = vsel %vm559, %v62, 0.0
    %606 = vadd.xlane.f32.xlu0 %v605
    %v607 = vpop.xlane.xlu0 %606
    %v608 = vsel %vm559, %v63, 0.0
    %609 = vadd.xlane.f32.xlu0 %v608
    %v610 = vpop.xlane.xlu0 %609
    %v611 = vsel %vm559, %v64, 0.0
    %612 = vadd.xlane.f32.xlu0 %v611
    %v613 = vpop.xlane.xlu0 %612
    %v614 = vsel %vm559, %v65, 0.0
    %615 = vadd.xlane.f32.xlu0 %v614
    %v616 = vpop.xlane.xlu0 %615
    %v617 = vsel %vm559, %v66, 0.0
    %618 = vadd.xlane.f32.xlu0 %v617
    %v619 = vpop.xlane.xlu0 %618
    %v620 = vsel %vm559, %v67, 0.0
    %621 = vadd.xlane.f32.xlu0 %v620
    %v622 = vpop.xlane.xlu0 %621
    %v623 = vsel %vm559, %v68, 0.0
    %624 = vadd.xlane.f32.xlu0 %v623
    %v625 = vpop.xlane.xlu0 %624
    %v626 = vsel %vm559, %v69, 0.0
    %627 = vadd.xlane.f32.xlu0 %v626
    %v628 = vpop.xlane.xlu0 %627
    %v629 = vsel %vm559, %v70, 0.0
    %630 = vadd.xlane.f32.xlu0 %v629
    %v631 = vpop.xlane.xlu0 %630
    %v632 = vsel %vm559, %v71, 0.0
    %633 = vadd.xlane.f32.xlu0 %v632
    %v634 = vpop.xlane.xlu0 %633
    %v635 = vsel %vm559, %v72, 0.0
    %636 = vadd.xlane.f32.xlu0 %v635
    %v637 = vpop.xlane.xlu0 %636
    %v638 = vsel %vm559, %v73, 0.0
    %639 = vadd.xlane.f32.xlu0 %v638
    %v640 = vpop.xlane.xlu0 %639
    %v641 = vsel %vm559, %v74, 0.0
    %642 = vadd.xlane.f32.xlu0 %v641
    %v643 = vpop.xlane.xlu0 %642
    %v644 = vsel %vm559, %v75, 0.0
    %645 = vadd.xlane.f32.xlu0 %v644
    %v646 = vpop.xlane.xlu0 %645
    %v647 = vsel %vm559, %v76, 0.0
    %648 = vadd.xlane.f32.xlu0 %v647
    %v649 = vpop.xlane.xlu0 %648
    %v650 = vsel %vm559, %v77, 0.0
    %651 = vadd.xlane.f32.xlu0 %v650
    %v652 = vpop.xlane.xlu0 %651
    %v653 = vsel %vm559, %v78, 0.0
    %654 = vadd.xlane.f32.xlu0 %v653
    %v655 = vpop.xlane.xlu0 %654
    %v656 = vsel %vm559, %v79, 0.0
    %657 = vadd.xlane.f32.xlu0 %v656
    %v658 = vpop.xlane.xlu0 %657
    %v659 = vsel %vm559, %v80, 0.0
    %660 = vadd.xlane.f32.xlu0 %v659
    %v661 = vpop.xlane.xlu0 %660
    %v662 = vsel %vm559, %v81, 0.0
    %663 = vadd.xlane.f32.xlu0 %v662
    %v664 = vpop.xlane.xlu0 %663
    %v665 = vsel %vm559, %v82, 0.0
    %666 = vadd.xlane.f32.xlu0 %v665
    %v667 = vpop.xlane.xlu0 %666
    %v668 = vsel %vm559, %v83, 0.0
    %669 = vadd.xlane.f32.xlu0 %v668
    %v670 = vpop.xlane.xlu0 %669
    %v671 = vsel %vm559, %v84, 0.0
    %672 = vadd.xlane.f32.xlu0 %v671
    %v673 = vpop.xlane.xlu0 %672
    %v674 = vsel %vm559, %v85, 0.0
    %675 = vadd.xlane.f32.xlu0 %v674
    %v676 = vpop.xlane.xlu0 %675
    %v677 = vsel %vm559, %v86, 0.0
    %678 = vadd.xlane.f32.xlu0 %v677
    %v679 = vpop.xlane.xlu0 %678
    %v680 = vsel %vm559, %v87, 0.0
    %681 = vadd.xlane.f32.xlu0 %v680
    %v682 = vpop.xlane.xlu0 %681
    %v683 = vsel %vm559, %v88, 0.0
    %684 = vadd.xlane.f32.xlu0 %v683
    %v685 = vpop.xlane.xlu0 %684
    %v686 = vsel %vm559, %v89, 0.0
    %687 = vadd.xlane.f32.xlu0 %v686
    %v688 = vpop.xlane.xlu0 %687
    %v689 = vsel %vm559, %v90, 0.0
    %690 = vadd.xlane.f32.xlu0 %v689
    %v691 = vpop.xlane.xlu0 %690
    %v692 = vsel %vm559, %v91, 0.0
    %693 = vadd.xlane.f32.xlu0 %v692
    %v694 = vpop.xlane.xlu0 %693
    %v695 = vsel %vm559, %v92, 0.0
    %696 = vadd.xlane.f32.xlu0 %v695
    %v697 = vpop.xlane.xlu0 %696
    %v698 = vsel %vm559, %v93, 0.0
    %699 = vadd.xlane.f32.xlu0 %v698
    %v700 = vpop.xlane.xlu0 %699
    %v701 = vsel %vm559, %v94, 0.0
    %702 = vadd.xlane.f32.xlu0 %v701
    %v703 = vpop.xlane.xlu0 %702
    %v704 = vsel %vm559, %v95, 0.0
    %705 = vadd.xlane.f32.xlu0 %v704
    %v706 = vpop.xlane.xlu0 %705
    %v707 = vsel %vm559, %v96, 0.0
    %708 = vadd.xlane.f32.xlu0 %v707
    %v709 = vpop.xlane.xlu0 %708
    %v710 = vsel %vm559, %v97, 0.0
    %711 = vadd.xlane.f32.xlu0 %v710
    %v712 = vpop.xlane.xlu0 %711
    %v713 = vsel %vm559, %v98, 0.0
    %714 = vadd.xlane.f32.xlu0 %v713
    %v715 = vpop.xlane.xlu0 %714
    %v716 = vsel %vm559, %v99, 0.0
    %717 = vadd.xlane.f32.xlu0 %v716
    %v718 = vpop.xlane.xlu0 %717
    %v719 = vsel %vm559, %v100, 0.0
    %720 = vadd.xlane.f32.xlu0 %v719
    %v721 = vpop.xlane.xlu0 %720
    %v722 = vsel %vm559, %v101, 0.0
    %723 = vadd.xlane.f32.xlu0 %v722
    %v724 = vpop.xlane.xlu0 %723
    %v725 = vsel %vm559, %v102, 0.0
    %726 = vadd.xlane.f32.xlu0 %v725
    %v727 = vpop.xlane.xlu0 %726
    %v728 = vsel %vm559, %v103, 0.0
    %729 = vadd.xlane.f32.xlu0 %v728
    %v730 = vpop.xlane.xlu0 %729
    %v731 = vsel %vm559, %v104, 0.0
    %732 = vadd.xlane.f32.xlu0 %v731
    %v733 = vpop.xlane.xlu0 %732
    %v734 = vsel %vm559, %v105, 0.0
    %735 = vadd.xlane.f32.xlu0 %v734
    %v736 = vpop.xlane.xlu0 %735
    %v737 = vsel %vm559, %v106, 0.0
    %738 = vadd.xlane.f32.xlu0 %v737
    %v739 = vpop.xlane.xlu0 %738
    %v740 = vsel %vm559, %v107, 0.0
    %741 = vadd.xlane.f32.xlu0 %v740
    %v742 = vpop.xlane.xlu0 %741
    %v743 = vsel %vm559, %v108, 0.0
    %744 = vadd.xlane.f32.xlu0 %v743
    %v745 = vpop.xlane.xlu0 %744
    %v746 = vsel %vm559, %v109, 0.0
    %747 = vadd.xlane.f32.xlu0 %v746
    %v748 = vpop.xlane.xlu0 %747
    %v749 = vsel %vm559, %v110, 0.0
    %750 = vadd.xlane.f32.xlu0 %v749
    %v751 = vpop.xlane.xlu0 %750
    %v752 = vsel %vm559, %v111, 0.0
    %753 = vadd.xlane.f32.xlu0 %v752
    %v754 = vpop.xlane.xlu0 %753
    %v755 = vsel %vm559, %v112, 0.0
    %756 = vadd.xlane.f32.xlu0 %v755
    %v757 = vpop.xlane.xlu0 %756
    %v758 = vsel %vm559, %v113, 0.0
    %759 = vadd.xlane.f32.xlu0 %v758
    %v760 = vpop.xlane.xlu0 %759
    %v761 = vsel %vm559, %v114, 0.0
    %762 = vadd.xlane.f32.xlu0 %v761
    %v763 = vpop.xlane.xlu0 %762
    %v764 = vsel %vm559, %v115, 0.0
    %765 = vadd.xlane.f32.xlu0 %v764
    %v766 = vpop.xlane.xlu0 %765
    %v767 = vsel %vm559, %v116, 0.0
    %768 = vadd.xlane.f32.xlu0 %v767
    %v769 = vpop.xlane.xlu0 %768
    %v770 = vsel %vm559, %v117, 0.0
    %771 = vadd.xlane.f32.xlu0 %v770
    %v772 = vpop.xlane.xlu0 %771
    %v773 = vsel %vm559, %v118, 0.0
    %774 = vadd.xlane.f32.xlu0 %v773
    %v775 = vpop.xlane.xlu0 %774
    %v776 = vsel %vm559, %v119, 0.0
    %777 = vadd.xlane.f32.xlu0 %v776
    %v778 = vpop.xlane.xlu0 %777
    %v779 = vsel %vm559, %v120, 0.0
    %780 = vadd.xlane.f32.xlu0 %v779
    %v781 = vpop.xlane.xlu0 %780
    %v782 = vsel %vm559, %v121, 0.0
    %783 = vadd.xlane.f32.xlu0 %v782
    %v784 = vpop.xlane.xlu0 %783
    %v785 = vsel %vm559, %v122, 0.0
    %786 = vadd.xlane.f32.xlu0 %v785
    %v787 = vpop.xlane.xlu0 %786
    %v788 = vsel %vm559, %v123, 0.0
    %789 = vadd.xlane.f32.xlu0 %v788
    %v790 = vpop.xlane.xlu0 %789
    %v791 = vsel %vm559, %v124, 0.0
    %792 = vadd.xlane.f32.xlu0 %v791
    %v793 = vpop.xlane.xlu0 %792
    %v794 = vsel %vm559, %v125, 0.0
    %795 = vadd.xlane.f32.xlu0 %v794
    %v796 = vpop.xlane.xlu0 %795
    %v797 = vsel %vm559, %v126, 0.0
    %798 = vadd.xlane.f32.xlu0 %v797
    %v799 = vpop.xlane.xlu0 %798
    %v800 = vsel %vm559, %v127, 0.0
    %801 = vadd.xlane.f32.xlu0 %v800
    %v802 = vpop.xlane.xlu0 %801
    %v803 = vsel %vm559, %v128, 0.0
    %804 = vadd.xlane.f32.xlu0 %v803
    %v805 = vpop.xlane.xlu0 %804
    %v806 = vsel %vm559, %v129, 0.0
    %807 = vadd.xlane.f32.xlu0 %v806
    %v808 = vpop.xlane.xlu0 %807
    %v809 = vsel %vm559, %v130, 0.0
    %810 = vadd.xlane.f32.xlu0 %v809
    %v811 = vpop.xlane.xlu0 %810
    %v812 = vsel %vm559, %v131, 0.0
    %813 = vadd.xlane.f32.xlu0 %v812
    %v814 = vpop.xlane.xlu0 %813
    %v815 = vsel %vm559, %v132, 0.0
    %816 = vadd.xlane.f32.xlu0 %v815
    %v817 = vpop.xlane.xlu0 %816
    %v818 = vsel %vm559, %v133, 0.0
    %819 = vadd.xlane.f32.xlu0 %v818
    %v820 = vpop.xlane.xlu0 %819
    %v821 = vsel %vm559, %v134, 0.0
    %822 = vadd.xlane.f32.xlu0 %v821
    %v823 = vpop.xlane.xlu0 %822
    %v824 = vsel %vm559, %v135, 0.0
    %825 = vadd.xlane.f32.xlu0 %v824
    %v826 = vpop.xlane.xlu0 %825
    %v827 = vsel %vm559, %v136, 0.0
    %828 = vadd.xlane.f32.xlu0 %v827
    %v829 = vpop.xlane.xlu0 %828
    %v830 = vsel %vm559, %v137, 0.0
    %831 = vadd.xlane.f32.xlu0 %v830
    %v832 = vpop.xlane.xlu0 %831
    %v833 = vsel %vm559, %v138, 0.0
    %834 = vadd.xlane.f32.xlu0 %v833
    %v835 = vpop.xlane.xlu0 %834
    %v836 = vsel %vm559, %v139, 0.0
    %837 = vadd.xlane.f32.xlu0 %v836
    %v838 = vpop.xlane.xlu0 %837
    %v839 = vsel %vm559, %v140, 0.0
    %840 = vadd.xlane.f32.xlu0 %v839
    %v841 = vpop.xlane.xlu0 %840
    %v842 = vsel %vm559, %v141, 0.0
    %843 = vadd.xlane.f32.xlu0 %v842
    %v844 = vpop.xlane.xlu0 %843
    %v845 = vsel %vm559, %v142, 0.0
    %846 = vadd.xlane.f32.xlu0 %v845
    %v847 = vpop.xlane.xlu0 %846
    %v848 = vsel %vm559, %v143, 0.0
    %849 = vadd.xlane.f32.xlu0 %v848
    %v850 = vpop.xlane.xlu0 %849
    %v851 = vsel %vm559, %v144, 0.0
    %852 = vadd.xlane.f32.xlu0 %v851
    %v853 = vpop.xlane.xlu0 %852
    %v854 = vsel %vm559, %v145, 0.0
    %855 = vadd.xlane.f32.xlu0 %v854
    %v856 = vpop.xlane.xlu0 %855
    %v857 = vsel %vm559, %v146, 0.0
    %858 = vadd.xlane.f32.xlu0 %v857
    %v859 = vpop.xlane.xlu0 %858
    %v860 = vsel %vm559, %v147, 0.0
    %861 = vadd.xlane.f32.xlu0 %v860
    %v862 = vpop.xlane.xlu0 %861
    %v863 = vsel %vm559, %v148, 0.0
    %864 = vadd.xlane.f32.xlu0 %v863
    %v865 = vpop.xlane.xlu0 %864
    %v866 = vsel %vm559, %v149, 0.0
    %867 = vadd.xlane.f32.xlu0 %v866
    %v868 = vpop.xlane.xlu0 %867
    %v869 = vsel %vm559, %v150, 0.0
    %870 = vadd.xlane.f32.xlu0 %v869
    %v871 = vpop.xlane.xlu0 %870
    %v872 = vsel %vm559, %v151, 0.0
    %873 = vadd.xlane.f32.xlu0 %v872
    %v874 = vpop.xlane.xlu0 %873
    %v875 = vsel %vm559, %v152, 0.0
    %876 = vadd.xlane.f32.xlu0 %v875
    %v877 = vpop.xlane.xlu0 %876
    %v878 = vsel %vm559, %v153, 0.0
    %879 = vadd.xlane.f32.xlu0 %v878
    %v880 = vpop.xlane.xlu0 %879
    %v881 = vsel %vm559, %v154, 0.0
    %882 = vadd.xlane.f32.xlu0 %v881
    %v883 = vpop.xlane.xlu0 %882
    %v884 = vsel %vm559, %v155, 0.0
    %885 = vadd.xlane.f32.xlu0 %v884
    %v886 = vpop.xlane.xlu0 %885
    %v887 = vsel %vm559, %v156, 0.0
    %888 = vadd.xlane.f32.xlu0 %v887
    %v889 = vpop.xlane.xlu0 %888
    %v890 = vsel %vm559, %v157, 0.0
    %891 = vadd.xlane.f32.xlu0 %v890
    %v892 = vpop.xlane.xlu0 %891
    %v893 = vsel %vm559, %v158, 0.0
    %894 = vadd.xlane.f32.xlu0 %v893
    %v895 = vpop.xlane.xlu0 %894
    %v896 = vsel %vm559, %v159, 0.0
    %897 = vadd.xlane.f32.xlu0 %v896
    %v898 = vpop.xlane.xlu0 %897
    %v899 = vsel %vm559, %v160, 0.0
    %900 = vadd.xlane.f32.xlu0 %v899
    %v901 = vpop.xlane.xlu0 %900
    %v902 = vsel %vm559, %v161, 0.0
    %903 = vadd.xlane.f32.xlu0 %v902
    %v904 = vpop.xlane.xlu0 %903
    %v905 = vsel %vm559, %v162, 0.0
    %906 = vadd.xlane.f32.xlu0 %v905
    %v907 = vpop.xlane.xlu0 %906
    %v908 = vsel %vm559, %v163, 0.0
    %909 = vadd.xlane.f32.xlu0 %v908
    %v910 = vpop.xlane.xlu0 %909
    %v911 = vsel %vm559, %v164, 0.0
    %912 = vadd.xlane.f32.xlu0 %v911
    %v913 = vpop.xlane.xlu0 %912
    %v914 = vsel %vm559, %v165, 0.0
    %915 = vadd.xlane.f32.xlu0 %v914
    %v916 = vpop.xlane.xlu0 %915
    %v917 = vsel %vm559, %v166, 0.0
    %918 = vadd.xlane.f32.xlu0 %v917
    %v919 = vpop.xlane.xlu0 %918
    %v920 = vsel %vm559, %v167, 0.0
    %921 = vadd.xlane.f32.xlu0 %v920
    %v922 = vpop.xlane.xlu0 %921
    %v923 = vsel %vm559, %v168, 0.0
    %924 = vadd.xlane.f32.xlu0 %v923
    %v925 = vpop.xlane.xlu0 %924
    %v926 = vsel %vm559, %v169, 0.0
    %927 = vadd.xlane.f32.xlu0 %v926
    %v928 = vpop.xlane.xlu0 %927
    %v929 = vsel %vm559, %v170, 0.0
    %930 = vadd.xlane.f32.xlu0 %v929
    %v931 = vpop.xlane.xlu0 %930
    %v932 = vsel %vm559, %v171, 0.0
    %933 = vadd.xlane.f32.xlu0 %v932
    %v934 = vpop.xlane.xlu0 %933
    %v935 = vsel %vm559, %v172, 0.0
    %936 = vadd.xlane.f32.xlu0 %v935
    %v937 = vpop.xlane.xlu0 %936
    %v938 = vsel %vm559, %v173, 0.0
    %939 = vadd.xlane.f32.xlu0 %v938
    %v940 = vpop.xlane.xlu0 %939
    %v941 = vsel %vm559, %v174, 0.0
    %942 = vadd.xlane.f32.xlu0 %v941
    %v943 = vpop.xlane.xlu0 %942
    %v944 = vsel %vm559, %v175, 0.0
    %945 = vadd.xlane.f32.xlu0 %v944
    %v946 = vpop.xlane.xlu0 %945
    %v947 = vsel %vm559, %v176, 0.0
    %948 = vadd.xlane.f32.xlu0 %v947
    %v949 = vpop.xlane.xlu0 %948
    %v950 = vsel %vm559, %v177, 0.0
    %951 = vadd.xlane.f32.xlu0 %v950
    %v952 = vpop.xlane.xlu0 %951
    %v953 = vsel %vm559, %v178, 0.0
    %954 = vadd.xlane.f32.xlu0 %v953
    %v955 = vpop.xlane.xlu0 %954
    %v956 = vsel %vm559, %v179, 0.0
    %957 = vadd.xlane.f32.xlu0 %v956
    %v958 = vpop.xlane.xlu0 %957
    %v959 = vsel %vm559, %v180, 0.0
    %960 = vadd.xlane.f32.xlu0 %v959
    %v961 = vpop.xlane.xlu0 %960
    %v962 = vsel %vm559, %v181, 0.0
    %963 = vadd.xlane.f32.xlu0 %v962
    %v964 = vpop.xlane.xlu0 %963
    %v965 = vsel %vm559, %v182, 0.0
    %966 = vadd.xlane.f32.xlu0 %v965
    %v967 = vpop.xlane.xlu0 %966
    %v968 = vsel %vm559, %v183, 0.0
    %969 = vadd.xlane.f32.xlu0 %v968
    %v970 = vpop.xlane.xlu0 %969
    %v971 = vsel %vm559, %v184, 0.0
    %972 = vadd.xlane.f32.xlu0 %v971
    %v973 = vpop.xlane.xlu0 %972
    %v974 = vsel %vm559, %v185, 0.0
    %975 = vadd.xlane.f32.xlu0 %v974
    %v976 = vpop.xlane.xlu0 %975
    %v977 = vsel %vm559, %v186, 0.0
    %978 = vadd.xlane.f32.xlu0 %v977
    %v979 = vpop.xlane.xlu0 %978
    %v980 = vsel %vm559, %v187, 0.0
    %981 = vadd.xlane.f32.xlu0 %v980
    %v982 = vpop.xlane.xlu0 %981
    %v983 = vsel %vm559, %v188, 0.0
    %984 = vadd.xlane.f32.xlu0 %v983
    %v985 = vpop.xlane.xlu0 %984
    %v986 = vsel %vm559, %v189, 0.0
    %987 = vadd.xlane.f32.xlu0 %v986
    %v988 = vpop.xlane.xlu0 %987
    %v989 = vsel %vm559, %v190, 0.0
    %990 = vadd.xlane.f32.xlu0 %v989
    %v991 = vpop.xlane.xlu0 %990
    %v992 = vsel %vm559, %v191, 0.0
    %993 = vadd.xlane.f32.xlu0 %v992
    %v994 = vpop.xlane.xlu0 %993
    %v995 = vsel %vm559, %v192, 0.0
    %996 = vadd.xlane.f32.xlu0 %v995
    %v997 = vpop.xlane.xlu0 %996
    %v998 = vsel %vm559, %v193, 0.0
    %999 = vadd.xlane.f32.xlu0 %v998
    %v1000 = vpop.xlane.xlu0 %999
    %v1001 = vsel %vm559, %v194, 0.0
    %1002 = vadd.xlane.f32.xlu0 %v1001
    %v1003 = vpop.xlane.xlu0 %1002
    %v1004 = vsel %vm559, %v195, 0.0
    %1005 = vadd.xlane.f32.xlu0 %v1004
    %v1006 = vpop.xlane.xlu0 %1005
    %v1007 = vsel %vm559, %v196, 0.0
    %1008 = vadd.xlane.f32.xlu0 %v1007
    %v1009 = vpop.xlane.xlu0 %1008
    %v1010 = vsel %vm559, %v197, 0.0
    %1011 = vadd.xlane.f32.xlu0 %v1010
    %v1012 = vpop.xlane.xlu0 %1011
    %v1013 = vsel %vm559, %v198, 0.0
    %1014 = vadd.xlane.f32.xlu0 %v1013
    %v1015 = vpop.xlane.xlu0 %1014
    %v1016 = vsel %vm559, %v199, 0.0
    %1017 = vadd.xlane.f32.xlu0 %v1016
    %v1018 = vpop.xlane.xlu0 %1017
    %v1019 = vsel %vm559, %v200, 0.0
    %1020 = vadd.xlane.f32.xlu0 %v1019
    %v1021 = vpop.xlane.xlu0 %1020
    %v1022 = vsel %vm559, %v201, 0.0
    %1023 = vadd.xlane.f32.xlu0 %v1022
    %v1024 = vpop.xlane.xlu0 %1023
    %v1025 = vsel %vm559, %v202, 0.0
    %1026 = vadd.xlane.f32.xlu0 %v1025
    %v1027 = vpop.xlane.xlu0 %1026
    %v1028 = vsel %vm559, %v203, 0.0
    %1029 = vadd.xlane.f32.xlu0 %v1028
    %v1030 = vpop.xlane.xlu0 %1029
    %v1031 = vsel %vm559, %v204, 0.0
    %1032 = vadd.xlane.f32.xlu0 %v1031
    %v1033 = vpop.xlane.xlu0 %1032
    %v1034 = vsel %vm559, %v205, 0.0
    %1035 = vadd.xlane.f32.xlu0 %v1034
    %v1036 = vpop.xlane.xlu0 %1035
    %v1037 = vsel %vm559, %v206, 0.0
    %1038 = vadd.xlane.f32.xlu0 %v1037
    %v1039 = vpop.xlane.xlu0 %1038
    %v1040 = vsel %vm559, %v207, 0.0
    %1041 = vadd.xlane.f32.xlu0 %v1040
    %v1042 = vpop.xlane.xlu0 %1041
    %v1043 = vsel %vm559, %v208, 0.0
    %1044 = vadd.xlane.f32.xlu0 %v1043
    %v1045 = vpop.xlane.xlu0 %1044
    %v1046 = vsel %vm559, %v209, 0.0
    %1047 = vadd.xlane.f32.xlu0 %v1046
    %v1048 = vpop.xlane.xlu0 %1047
    %v1049 = vsel %vm559, %v210, 0.0
    %1050 = vadd.xlane.f32.xlu0 %v1049
    %v1051 = vpop.xlane.xlu0 %1050
    %v1052 = vsel %vm559, %v211, 0.0
    %1053 = vadd.xlane.f32.xlu0 %v1052
    %v1054 = vpop.xlane.xlu0 %1053
    %v1055 = vsel %vm559, %v212, 0.0
    %1056 = vadd.xlane.f32.xlu0 %v1055
    %v1057 = vpop.xlane.xlu0 %1056
    %v1058 = vsel %vm559, %v213, 0.0
    %1059 = vadd.xlane.f32.xlu0 %v1058
    %v1060 = vpop.xlane.xlu0 %1059
    %v1061 = vsel %vm559, %v214, 0.0
    %1062 = vadd.xlane.f32.xlu0 %v1061
    %v1063 = vpop.xlane.xlu0 %1062
    %v1064 = vsel %vm559, %v215, 0.0
    %1065 = vadd.xlane.f32.xlu0 %v1064
    %v1066 = vpop.xlane.xlu0 %1065
    %v1067 = vsel %vm559, %v216, 0.0
    %1068 = vadd.xlane.f32.xlu0 %v1067
    %v1069 = vpop.xlane.xlu0 %1068
    %v1070 = vsel %vm559, %v217, 0.0
    %1071 = vadd.xlane.f32.xlu0 %v1070
    %v1072 = vpop.xlane.xlu0 %1071
    %v1073 = vsel %vm559, %v218, 0.0
    %1074 = vadd.xlane.f32.xlu0 %v1073
    %v1075 = vpop.xlane.xlu0 %1074
    %v1076 = vsel %vm559, %v219, 0.0
    %1077 = vadd.xlane.f32.xlu0 %v1076
    %v1078 = vpop.xlane.xlu0 %1077
    %v1079 = vsel %vm559, %v220, 0.0
    %1080 = vadd.xlane.f32.xlu0 %v1079
    %v1081 = vpop.xlane.xlu0 %1080
    %v1082 = vsel %vm559, %v221, 0.0
    %1083 = vadd.xlane.f32.xlu0 %v1082
    %v1084 = vpop.xlane.xlu0 %1083
    %v1085 = vsel %vm559, %v222, 0.0
    %1086 = vadd.xlane.f32.xlu0 %v1085
    %v1087 = vpop.xlane.xlu0 %1086
    %v1088 = vsel %vm559, %v223, 0.0
    %1089 = vadd.xlane.f32.xlu0 %v1088
    %v1090 = vpop.xlane.xlu0 %1089
    %v1091 = vsel %vm559, %v224, 0.0
    %1092 = vadd.xlane.f32.xlu0 %v1091
    %v1093 = vpop.xlane.xlu0 %1092
    %v1094 = vsel %vm559, %v225, 0.0
    %1095 = vadd.xlane.f32.xlu0 %v1094
    %v1096 = vpop.xlane.xlu0 %1095
    %v1097 = vsel %vm559, %v226, 0.0
    %1098 = vadd.xlane.f32.xlu0 %v1097
    %v1099 = vpop.xlane.xlu0 %1098
    %v1100 = vsel %vm559, %v227, 0.0
    %1101 = vadd.xlane.f32.xlu0 %v1100
    %v1102 = vpop.xlane.xlu0 %1101
    %v1103 = vsel %vm559, %v228, 0.0
    %1104 = vadd.xlane.f32.xlu0 %v1103
    %v1105 = vpop.xlane.xlu0 %1104
    %v1106 = vsel %vm559, %v229, 0.0
    %1107 = vadd.xlane.f32.xlu0 %v1106
    %v1108 = vpop.xlane.xlu0 %1107
    %v1109 = vsel %vm559, %v230, 0.0
    %1110 = vadd.xlane.f32.xlu0 %v1109
    %v1111 = vpop.xlane.xlu0 %1110
    %v1112 = vsel %vm559, %v231, 0.0
    %1113 = vadd.xlane.f32.xlu0 %v1112
    %v1114 = vpop.xlane.xlu0 %1113
    %v1115 = vsel %vm559, %v232, 0.0
    %1116 = vadd.xlane.f32.xlu0 %v1115
    %v1117 = vpop.xlane.xlu0 %1116
    %v1118 = vsel %vm559, %v233, 0.0
    %1119 = vadd.xlane.f32.xlu0 %v1118
    %v1120 = vpop.xlane.xlu0 %1119
    %v1121 = vsel %vm559, %v234, 0.0
    %1122 = vadd.xlane.f32.xlu0 %v1121
    %v1123 = vpop.xlane.xlu0 %1122
    %v1124 = vsel %vm559, %v235, 0.0
    %1125 = vadd.xlane.f32.xlu0 %v1124
    %v1126 = vpop.xlane.xlu0 %1125
    %v1127 = vsel %vm559, %v236, 0.0
    %1128 = vadd.xlane.f32.xlu0 %v1127
    %v1129 = vpop.xlane.xlu0 %1128
    %v1130 = vsel %vm559, %v237, 0.0
    %1131 = vadd.xlane.f32.xlu0 %v1130
    %v1132 = vpop.xlane.xlu0 %1131
    %v1133 = vsel %vm559, %v238, 0.0
    %1134 = vadd.xlane.f32.xlu0 %v1133
    %v1135 = vpop.xlane.xlu0 %1134
    %v1136 = vsel %vm559, %v239, 0.0
    %1137 = vadd.xlane.f32.xlu0 %v1136
    %v1138 = vpop.xlane.xlu0 %1137
    %v1139 = vsel %vm559, %v240, 0.0
    %1140 = vadd.xlane.f32.xlu0 %v1139
    %v1141 = vpop.xlane.xlu0 %1140
    %v1142 = vsel %vm559, %v241, 0.0
    %1143 = vadd.xlane.f32.xlu0 %v1142
    %v1144 = vpop.xlane.xlu0 %1143
    %v1145 = vsel %vm559, %v242, 0.0
    %1146 = vadd.xlane.f32.xlu0 %v1145
    %v1147 = vpop.xlane.xlu0 %1146
    %v1148 = vsel %vm559, %v243, 0.0
    %1149 = vadd.xlane.f32.xlu0 %v1148
    %v1150 = vpop.xlane.xlu0 %1149
    %v1151 = vsel %vm559, %v244, 0.0
    %1152 = vadd.xlane.f32.xlu0 %v1151
    %v1153 = vpop.xlane.xlu0 %1152
    %v1154 = vsel %vm559, %v245, 0.0
    %1155 = vadd.xlane.f32.xlu0 %v1154
    %v1156 = vpop.xlane.xlu0 %1155
    %v1157 = vsel %vm559, %v246, 0.0
    %1158 = vadd.xlane.f32.xlu0 %v1157
    %v1159 = vpop.xlane.xlu0 %1158
    %v1160 = vsel %vm559, %v247, 0.0
    %1161 = vadd.xlane.f32.xlu0 %v1160
    %v1162 = vpop.xlane.xlu0 %1161
    %v1163 = vsel %vm559, %v248, 0.0
    %1164 = vadd.xlane.f32.xlu0 %v1163
    %v1165 = vpop.xlane.xlu0 %1164
    %v1166 = vsel %vm559, %v249, 0.0
    %1167 = vadd.xlane.f32.xlu0 %v1166
    %v1168 = vpop.xlane.xlu0 %1167
    %v1169 = vsel %vm559, %v250, 0.0
    %1170 = vadd.xlane.f32.xlu0 %v1169
    %v1171 = vpop.xlane.xlu0 %1170
    %v1172 = vsel %vm559, %v251, 0.0
    %1173 = vadd.xlane.f32.xlu0 %v1172
    %v1174 = vpop.xlane.xlu0 %1173
    %v1175 = vsel %vm559, %v252, 0.0
    %1176 = vadd.xlane.f32.xlu0 %v1175
    %v1177 = vpop.xlane.xlu0 %1176
    %v1178 = vsel %vm559, %v253, 0.0
    %1179 = vadd.xlane.f32.xlu0 %v1178
    %v1180 = vpop.xlane.xlu0 %1179
    %v1181 = vsel %vm559, %v254, 0.0
    %1182 = vadd.xlane.f32.xlu0 %v1181
    %v1183 = vpop.xlane.xlu0 %1182
    %v1184 = vsel %vm559, %v255, 0.0
    %1185 = vadd.xlane.f32.xlu0 %v1184
    %v1186 = vpop.xlane.xlu0 %1185
    %v1187 = vsel %vm559, %v256, 0.0
    %1188 = vadd.xlane.f32.xlu0 %v1187
    %v1189 = vpop.xlane.xlu0 %1188
    %v1190 = vsel %vm559, %v257, 0.0
    %1191 = vadd.xlane.f32.xlu0 %v1190
    %v1192 = vpop.xlane.xlu0 %1191
    %v1193 = vsel %vm559, %v258, 0.0
    %1194 = vadd.xlane.f32.xlu0 %v1193
    %v1195 = vpop.xlane.xlu0 %1194
    %v1196 = vsel %vm559, %v259, 0.0
    %1197 = vadd.xlane.f32.xlu0 %v1196
    %v1198 = vpop.xlane.xlu0 %1197
    %v1199 = vsel %vm559, %v260, 0.0
    %1200 = vadd.xlane.f32.xlu0 %v1199
    %v1201 = vpop.xlane.xlu0 %1200
    %v1202 = vsel %vm559, %v261, 0.0
    %1203 = vadd.xlane.f32.xlu0 %v1202
    %v1204 = vpop.xlane.xlu0 %1203
    %v1205 = vsel %vm559, %v262, 0.0
    %1206 = vadd.xlane.f32.xlu0 %v1205
    %v1207 = vpop.xlane.xlu0 %1206
    %v1208 = vsel %vm559, %v263, 0.0
    %1209 = vadd.xlane.f32.xlu0 %v1208
    %v1210 = vpop.xlane.xlu0 %1209
    %v1211 = vsel %vm559, %v264, 0.0
    %1212 = vadd.xlane.f32.xlu0 %v1211
    %v1213 = vpop.xlane.xlu0 %1212
    %v1214 = vsel %vm559, %v265, 0.0
    %1215 = vadd.xlane.f32.xlu0 %v1214
    %v1216 = vpop.xlane.xlu0 %1215
    %v1217 = vsel %vm559, %v266, 0.0
    %1218 = vadd.xlane.f32.xlu0 %v1217
    %v1219 = vpop.xlane.xlu0 %1218
    %v1220 = vsel %vm559, %v267, 0.0
    %1221 = vadd.xlane.f32.xlu0 %v1220
    %v1222 = vpop.xlane.xlu0 %1221
    %v1223 = vsel %vm559, %v268, 0.0
    %1224 = vadd.xlane.f32.xlu0 %v1223
    %v1225 = vpop.xlane.xlu0 %1224
    %v1226 = vsel %vm559, %v269, 0.0
    %1227 = vadd.xlane.f32.xlu0 %v1226
    %v1228 = vpop.xlane.xlu0 %1227
    %v1229 = vsel %vm559, %v270, 0.0
    %1230 = vadd.xlane.f32.xlu0 %v1229
    %v1231 = vpop.xlane.xlu0 %1230
    %v1232 = vsel %vm559, %v271, 0.0
    %1233 = vadd.xlane.f32.xlu0 %v1232
    %v1234 = vpop.xlane.xlu0 %1233
    %v1235 = vsel %vm559, %v272, 0.0
    %1236 = vadd.xlane.f32.xlu0 %v1235
    %v1237 = vpop.xlane.xlu0 %1236
    %v1238 = vsel %vm559, %v273, 0.0
    %1239 = vadd.xlane.f32.xlu0 %v1238
    %v1240 = vpop.xlane.xlu0 %1239
    %v1241 = vsel %vm559, %v274, 0.0
    %1242 = vadd.xlane.f32.xlu0 %v1241
    %v1243 = vpop.xlane.xlu0 %1242
    %v1244 = vsel %vm559, %v275, 0.0
    %1245 = vadd.xlane.f32.xlu0 %v1244
    %v1246 = vpop.xlane.xlu0 %1245
    %v1247 = vsel %vm559, %v276, 0.0
    %1248 = vadd.xlane.f32.xlu0 %v1247
    %v1249 = vpop.xlane.xlu0 %1248
    %v1250 = vsel %vm559, %v277, 0.0
    %1251 = vadd.xlane.f32.xlu0 %v1250
    %v1252 = vpop.xlane.xlu0 %1251
    %v1253 = vsel %vm559, %v278, 0.0
    %1254 = vadd.xlane.f32.xlu0 %v1253
    %v1255 = vpop.xlane.xlu0 %1254
    %v1256 = vsel %vm559, %v279, 0.0
    %1257 = vadd.xlane.f32.xlu0 %v1256
    %v1258 = vpop.xlane.xlu0 %1257
    %v1259 = vsel %vm559, %v280, 0.0
    %1260 = vadd.xlane.f32.xlu0 %v1259
    %v1261 = vpop.xlane.xlu0 %1260
    %v1262 = vsel %vm559, %v281, 0.0
    %1263 = vadd.xlane.f32.xlu0 %v1262
    %v1264 = vpop.xlane.xlu0 %1263
    %v1265 = vsel %vm559, %v282, 0.0
    %1266 = vadd.xlane.f32.xlu0 %v1265
    %v1267 = vpop.xlane.xlu0 %1266
    %v1268 = vsel %vm559, %v283, 0.0
    %1269 = vadd.xlane.f32.xlu0 %v1268
    %v1270 = vpop.xlane.xlu0 %1269
    %v1271 = vsel %vm559, %v284, 0.0
    %1272 = vadd.xlane.f32.xlu0 %v1271
    %v1273 = vpop.xlane.xlu0 %1272
    %v1274 = vsel %vm559, %v285, 0.0
    %1275 = vadd.xlane.f32.xlu0 %v1274
    %v1276 = vpop.xlane.xlu0 %1275
    %v1277 = vsel %vm559, %v286, 0.0
    %1278 = vadd.xlane.f32.xlu0 %v1277
    %v1279 = vpop.xlane.xlu0 %1278
    %v1280 = vsel %vm559, %v287, 0.0
    %1281 = vadd.xlane.f32.xlu0 %v1280
    %v1282 = vpop.xlane.xlu0 %1281
    %v1283 = vsel %vm559, %v288, 0.0
    %1284 = vadd.xlane.f32.xlu0 %v1283
    %v1285 = vpop.xlane.xlu0 %1284
    %v1286 = vsel %vm559, %v289, 0.0
    %1287 = vadd.xlane.f32.xlu0 %v1286
    %v1288 = vpop.xlane.xlu0 %1287
    %v1289 = vsel %vm559, %v290, 0.0
    %1290 = vadd.xlane.f32.xlu0 %v1289
    %v1291 = vpop.xlane.xlu0 %1290
    %v1292 = vsel %vm559, %v291, 0.0
    %1293 = vadd.xlane.f32.xlu0 %v1292
    %v1294 = vpop.xlane.xlu0 %1293
    %v1295 = vsel %vm559, %v292, 0.0
    %1296 = vadd.xlane.f32.xlu0 %v1295
    %v1297 = vpop.xlane.xlu0 %1296
    %v1298 = vsel %vm559, %v293, 0.0
    %1299 = vadd.xlane.f32.xlu0 %v1298
    %v1300 = vpop.xlane.xlu0 %1299
    %v1301 = vsel %vm559, %v294, 0.0
    %1302 = vadd.xlane.f32.xlu0 %v1301
    %v1303 = vpop.xlane.xlu0 %1302
    %v1304 = vsel %vm559, %v295, 0.0
    %1305 = vadd.xlane.f32.xlu0 %v1304
    %v1306 = vpop.xlane.xlu0 %1305
    %v1307 = vsel %vm559, %v296, 0.0
    %1308 = vadd.xlane.f32.xlu0 %v1307
    %v1309 = vpop.xlane.xlu0 %1308
    %v1310 = vsel %vm559, %v297, 0.0
    %1311 = vadd.xlane.f32.xlu0 %v1310
    %v1312 = vpop.xlane.xlu0 %1311
    %v1313 = vsel %vm559, %v298, 0.0
    %1314 = vadd.xlane.f32.xlu0 %v1313
    %v1315 = vpop.xlane.xlu0 %1314
    %v1316 = vsel %vm559, %v299, 0.0
    %1317 = vadd.xlane.f32.xlu0 %v1316
    %v1318 = vpop.xlane.xlu0 %1317
    %v1319 = vsel %vm559, %v300, 0.0
    %1320 = vadd.xlane.f32.xlu0 %v1319
    %v1321 = vpop.xlane.xlu0 %1320
    %v1322 = vsel %vm559, %v301, 0.0
    %1323 = vadd.xlane.f32.xlu0 %v1322
    %v1324 = vpop.xlane.xlu0 %1323
    %v1325 = vsel %vm559, %v302, 0.0
    %1326 = vadd.xlane.f32.xlu0 %v1325
    %v1327 = vpop.xlane.xlu0 %1326
    %v1328 = vrcp.pop 16.0
    %v1329 = vmul.f32 16.0, %v1328
    %v1330 = vsub.f32 1.0, %v1329
    %v1331 = vmul.f32 %v1328, %v1330
    %v1332 = vadd.f32 %v1328, %v1331
    %vm1333 = vweird.f32 %v1328
    %v1334 = vsel %vm1333, %v1328, %v1332
    %v1335 = vmul.f32 %v562, %v1334
    %v1336 = vmul.f32 %v565, %v1334
    %v1337 = vmul.f32 %v568, %v1334
    %v1338 = vmul.f32 %v571, %v1334
    %v1339 = vmul.f32 %v574, %v1334
    %v1340 = vmul.f32 %v577, %v1334
    %v1341 = vmul.f32 %v580, %v1334
    %v1342 = vmul.f32 %v583, %v1334
    %v1343 = vmul.f32 %v586, %v1334
    %v1344 = vmul.f32 %v589, %v1334
    %v1345 = vmul.f32 %v592, %v1334
    %v1346 = vmul.f32 %v595, %v1334
    %v1347 = vmul.f32 %v598, %v1334
    %v1348 = vmul.f32 %v601, %v1334
    %v1349 = vmul.f32 %v604, %v1334
    %v1350 = vmul.f32 %v607, %v1334
    %v1351 = vmul.f32 %v610, %v1334
    %v1352 = vmul.f32 %v613, %v1334
    %v1353 = vmul.f32 %v616, %v1334
    %v1354 = vmul.f32 %v619, %v1334
    %v1355 = vmul.f32 %v622, %v1334
    %v1356 = vmul.f32 %v625, %v1334
    %v1357 = vmul.f32 %v628, %v1334
    %v1358 = vmul.f32 %v631, %v1334
    %v1359 = vmul.f32 %v634, %v1334
    %v1360 = vmul.f32 %v637, %v1334
    %v1361 = vmul.f32 %v640, %v1334
    %v1362 = vmul.f32 %v643, %v1334
    %v1363 = vmul.f32 %v646, %v1334
    %v1364 = vmul.f32 %v649, %v1334
    %v1365 = vmul.f32 %v652, %v1334
    %v1366 = vmul.f32 %v655, %v1334
    %v1367 = vmul.f32 %v658, %v1334
    %v1368 = vmul.f32 %v661, %v1334
    %v1369 = vmul.f32 %v664, %v1334
    %v1370 = vmul.f32 %v667, %v1334
    %v1371 = vmul.f32 %v670, %v1334
    %v1372 = vmul.f32 %v673, %v1334
    %v1373 = vmul.f32 %v676, %v1334
    %v1374 = vmul.f32 %v679, %v1334
    %v1375 = vmul.f32 %v682, %v1334
    %v1376 = vmul.f32 %v685, %v1334
    %v1377 = vmul.f32 %v688, %v1334
    %v1378 = vmul.f32 %v691, %v1334
    %v1379 = vmul.f32 %v694, %v1334
    %v1380 = vmul.f32 %v697, %v1334
    %v1381 = vmul.f32 %v700, %v1334
    %v1382 = vmul.f32 %v703, %v1334
    %v1383 = vmul.f32 %v706, %v1334
    %v1384 = vmul.f32 %v709, %v1334
    %v1385 = vmul.f32 %v712, %v1334
    %v1386 = vmul.f32 %v715, %v1334
    %v1387 = vmul.f32 %v718, %v1334
    %v1388 = vmul.f32 %v721, %v1334
    %v1389 = vmul.f32 %v724, %v1334
    %v1390 = vmul.f32 %v727, %v1334
    %v1391 = vmul.f32 %v730, %v1334
    %v1392 = vmul.f32 %v733, %v1334
    %v1393 = vmul.f32 %v736, %v1334
    %v1394 = vmul.f32 %v739, %v1334
    %v1395 = vmul.f32 %v742, %v1334
    %v1396 = vmul.f32 %v745, %v1334
    %v1397 = vmul.f32 %v748, %v1334
    %v1398 = vmul.f32 %v751, %v1334
    %v1399 = vmul.f32 %v754, %v1334
    %v1400 = vmul.f32 %v757, %v1334
    %v1401 = vmul.f32 %v760, %v1334
    %v1402 = vmul.f32 %v763, %v1334
    %v1403 = vmul.f32 %v766, %v1334
    %v1404 = vmul.f32 %v769, %v1334
    %v1405 = vmul.f32 %v772, %v1334
    %v1406 = vmul.f32 %v775, %v1334
    %v1407 = vmul.f32 %v778, %v1334
    %v1408 = vmul.f32 %v781, %v1334
    %v1409 = vmul.f32 %v784, %v1334
    %v1410 = vmul.f32 %v787, %v1334
    %v1411 = vmul.f32 %v790, %v1334
    %v1412 = vmul.f32 %v793, %v1334
    %v1413 = vmul.f32 %v796, %v1334
    %v1414 = vmul.f32 %v799, %v1334
    %v1415 = vmul.f32 %v802, %v1334
    %v1416 = vmul.f32 %v805, %v1334
    %v1417 = vmul.f32 %v808, %v1334
    %v1418 = vmul.f32 %v811, %v1334
    %v1419 = vmul.f32 %v814, %v1334
    %v1420 = vmul.f32 %v817, %v1334
    %v1421 = vmul.f32 %v820, %v1334
    %v1422 = vmul.f32 %v823, %v1334
    %v1423 = vmul.f32 %v826, %v1334
    %v1424 = vmul.f32 %v829, %v1334
    %v1425 = vmul.f32 %v832, %v1334
    %v1426 = vmul.f32 %v835, %v1334
    %v1427 = vmul.f32 %v838, %v1334
    %v1428 = vmul.f32 %v841, %v1334
    %v1429 = vmul.f32 %v844, %v1334
    %v1430 = vmul.f32 %v847, %v1334
    %v1431 = vmul.f32 %v850, %v1334
    %v1432 = vmul.f32 %v853, %v1334
    %v1433 = vmul.f32 %v856, %v1334
    %v1434 = vmul.f32 %v859, %v1334
    %v1435 = vmul.f32 %v862, %v1334
    %v1436 = vmul.f32 %v865, %v1334
    %v1437 = vmul.f32 %v868, %v1334
    %v1438 = vmul.f32 %v871, %v1334
    %v1439 = vmul.f32 %v874, %v1334
    %v1440 = vmul.f32 %v877, %v1334
    %v1441 = vmul.f32 %v880, %v1334
    %v1442 = vmul.f32 %v883, %v1334
    %v1443 = vmul.f32 %v886, %v1334
    %v1444 = vmul.f32 %v889, %v1334
    %v1445 = vmul.f32 %v892, %v1334
    %v1446 = vmul.f32 %v895, %v1334
    %v1447 = vmul.f32 %v898, %v1334
    %v1448 = vmul.f32 %v901, %v1334
    %v1449 = vmul.f32 %v904, %v1334
    %v1450 = vmul.f32 %v907, %v1334
    %v1451 = vmul.f32 %v910, %v1334
    %v1452 = vmul.f32 %v913, %v1334
    %v1453 = vmul.f32 %v916, %v1334
    %v1454 = vmul.f32 %v919, %v1334
    %v1455 = vmul.f32 %v922, %v1334
    %v1456 = vmul.f32 %v925, %v1334
    %v1457 = vmul.f32 %v928, %v1334
    %v1458 = vmul.f32 %v931, %v1334
    %v1459 = vmul.f32 %v934, %v1334
    %v1460 = vmul.f32 %v937, %v1334
    %v1461 = vmul.f32 %v940, %v1334
    %v1462 = vmul.f32 %v943, %v1334
    %v1463 = vmul.f32 %v946, %v1334
    %v1464 = vmul.f32 %v949, %v1334
    %v1465 = vmul.f32 %v952, %v1334
    %v1466 = vmul.f32 %v955, %v1334
    %v1467 = vmul.f32 %v958, %v1334
    %v1468 = vmul.f32 %v961, %v1334
    %v1469 = vmul.f32 %v964, %v1334
    %v1470 = vmul.f32 %v967, %v1334
    %v1471 = vmul.f32 %v970, %v1334
    %v1472 = vmul.f32 %v973, %v1334
    %v1473 = vmul.f32 %v976, %v1334
    %v1474 = vmul.f32 %v979, %v1334
    %v1475 = vmul.f32 %v982, %v1334
    %v1476 = vmul.f32 %v985, %v1334
    %v1477 = vmul.f32 %v988, %v1334
    %v1478 = vmul.f32 %v991, %v1334
    %v1479 = vmul.f32 %v994, %v1334
    %v1480 = vmul.f32 %v997, %v1334
    %v1481 = vmul.f32 %v1000, %v1334
    %v1482 = vmul.f32 %v1003, %v1334
    %v1483 = vmul.f32 %v1006, %v1334
    %v1484 = vmul.f32 %v1009, %v1334
    %v1485 = vmul.f32 %v1012, %v1334
    %v1486 = vmul.f32 %v1015, %v1334
    %v1487 = vmul.f32 %v1018, %v1334
    %v1488 = vmul.f32 %v1021, %v1334
    %v1489 = vmul.f32 %v1024, %v1334
    %v1490 = vmul.f32 %v1027, %v1334
    %v1491 = vmul.f32 %v1030, %v1334
    %v1492 = vmul.f32 %v1033, %v1334
    %v1493 = vmul.f32 %v1036, %v1334
    %v1494 = vmul.f32 %v1039, %v1334
    %v1495 = vmul.f32 %v1042, %v1334
    %v1496 = vmul.f32 %v1045, %v1334
    %v1497 = vmul.f32 %v1048, %v1334
    %v1498 = vmul.f32 %v1051, %v1334
    %v1499 = vmul.f32 %v1054, %v1334
    %v1500 = vmul.f32 %v1057, %v1334
    %v1501 = vmul.f32 %v1060, %v1334
    %v1502 = vmul.f32 %v1063, %v1334
    %v1503 = vmul.f32 %v1066, %v1334
    %v1504 = vmul.f32 %v1069, %v1334
    %v1505 = vmul.f32 %v1072, %v1334
    %v1506 = vmul.f32 %v1075, %v1334
    %v1507 = vmul.f32 %v1078, %v1334
    %v1508 = vmul.f32 %v1081, %v1334
    %v1509 = vmul.f32 %v1084, %v1334
    %v1510 = vmul.f32 %v1087, %v1334
    %v1511 = vmul.f32 %v1090, %v1334
    %v1512 = vmul.f32 %v1093, %v1334
    %v1513 = vmul.f32 %v1096, %v1334
    %v1514 = vmul.f32 %v1099, %v1334
    %v1515 = vmul.f32 %v1102, %v1334
    %v1516 = vmul.f32 %v1105, %v1334
    %v1517 = vmul.f32 %v1108, %v1334
    %v1518 = vmul.f32 %v1111, %v1334
    %v1519 = vmul.f32 %v1114, %v1334
    %v1520 = vmul.f32 %v1117, %v1334
    %v1521 = vmul.f32 %v1120, %v1334
    %v1522 = vmul.f32 %v1123, %v1334
    %v1523 = vmul.f32 %v1126, %v1334
    %v1524 = vmul.f32 %v1129, %v1334
    %v1525 = vmul.f32 %v1132, %v1334
    %v1526 = vmul.f32 %v1135, %v1334
    %v1527 = vmul.f32 %v1138, %v1334
    %v1528 = vmul.f32 %v1141, %v1334
    %v1529 = vmul.f32 %v1144, %v1334
    %v1530 = vmul.f32 %v1147, %v1334
    %v1531 = vmul.f32 %v1150, %v1334
    %v1532 = vmul.f32 %v1153, %v1334
    %v1533 = vmul.f32 %v1156, %v1334
    %v1534 = vmul.f32 %v1159, %v1334
    %v1535 = vmul.f32 %v1162, %v1334
    %v1536 = vmul.f32 %v1165, %v1334
    %v1537 = vmul.f32 %v1168, %v1334
    %v1538 = vmul.f32 %v1171, %v1334
    %v1539 = vmul.f32 %v1174, %v1334
    %v1540 = vmul.f32 %v1177, %v1334
    %v1541 = vmul.f32 %v1180, %v1334
    %v1542 = vmul.f32 %v1183, %v1334
    %v1543 = vmul.f32 %v1186, %v1334
    %v1544 = vmul.f32 %v1189, %v1334
    %v1545 = vmul.f32 %v1192, %v1334
    %v1546 = vmul.f32 %v1195, %v1334
    %v1547 = vmul.f32 %v1198, %v1334
    %v1548 = vmul.f32 %v1201, %v1334
    %v1549 = vmul.f32 %v1204, %v1334
    %v1550 = vmul.f32 %v1207, %v1334
    %v1551 = vmul.f32 %v1210, %v1334
    %v1552 = vmul.f32 %v1213, %v1334
    %v1553 = vmul.f32 %v1216, %v1334
    %v1554 = vmul.f32 %v1219, %v1334
    %v1555 = vmul.f32 %v1222, %v1334
    %v1556 = vmul.f32 %v1225, %v1334
    %v1557 = vmul.f32 %v1228, %v1334
    %v1558 = vmul.f32 %v1231, %v1334
    %v1559 = vmul.f32 %v1234, %v1334
    %v1560 = vmul.f32 %v1237, %v1334
    %v1561 = vmul.f32 %v1240, %v1334
    %v1562 = vmul.f32 %v1243, %v1334
    %v1563 = vmul.f32 %v1246, %v1334
    %v1564 = vmul.f32 %v1249, %v1334
    %v1565 = vmul.f32 %v1252, %v1334
    %v1566 = vmul.f32 %v1255, %v1334
    %v1567 = vmul.f32 %v1258, %v1334
    %v1568 = vmul.f32 %v1261, %v1334
    %v1569 = vmul.f32 %v1264, %v1334
    %v1570 = vmul.f32 %v1267, %v1334
    %v1571 = vmul.f32 %v1270, %v1334
    %v1572 = vmul.f32 %v1273, %v1334
    %v1573 = vmul.f32 %v1276, %v1334
    %v1574 = vmul.f32 %v1279, %v1334
    %v1575 = vmul.f32 %v1282, %v1334
    %v1576 = vmul.f32 %v1285, %v1334
    %v1577 = vmul.f32 %v1288, %v1334
    %v1578 = vmul.f32 %v1291, %v1334
    %v1579 = vmul.f32 %v1294, %v1334
    %v1580 = vmul.f32 %v1297, %v1334
    %v1581 = vmul.f32 %v1300, %v1334
    %v1582 = vmul.f32 %v1303, %v1334
    %v1583 = vmul.f32 %v1306, %v1334
    %v1584 = vmul.f32 %v1309, %v1334
    %v1585 = vmul.f32 %v1312, %v1334
    %v1586 = vmul.f32 %v1315, %v1334
    %v1587 = vmul.f32 %v1318, %v1334
    %v1588 = vmul.f32 %v1321, %v1334
    %v1589 = vmul.f32 %v1324, %v1334
    %v1590 = vmul.f32 %v1327, %v1334
    %v1591 = vsel %vm559, %v303, 0.0
    %1592 = vadd.xlane.f32.xlu0 %v1591
    %v1593 = vpop.xlane.xlu0 %1592
    %v1594 = vsel %vm559, %v304, 0.0
    %1595 = vadd.xlane.f32.xlu0 %v1594
    %v1596 = vpop.xlane.xlu0 %1595
    %v1597 = vsel %vm559, %v305, 0.0
    %1598 = vadd.xlane.f32.xlu0 %v1597
    %v1599 = vpop.xlane.xlu0 %1598
    %v1600 = vsel %vm559, %v306, 0.0
    %1601 = vadd.xlane.f32.xlu0 %v1600
    %v1602 = vpop.xlane.xlu0 %1601
    %v1603 = vsel %vm559, %v307, 0.0
    %1604 = vadd.xlane.f32.xlu0 %v1603
    %v1605 = vpop.xlane.xlu0 %1604
    %v1606 = vsel %vm559, %v308, 0.0
    %1607 = vadd.xlane.f32.xlu0 %v1606
    %v1608 = vpop.xlane.xlu0 %1607
    %v1609 = vsel %vm559, %v309, 0.0
    %1610 = vadd.xlane.f32.xlu0 %v1609
    %v1611 = vpop.xlane.xlu0 %1610
    %v1612 = vsel %vm559, %v310, 0.0
    %1613 = vadd.xlane.f32.xlu0 %v1612
    %v1614 = vpop.xlane.xlu0 %1613
    %v1615 = vsel %vm559, %v311, 0.0
    %1616 = vadd.xlane.f32.xlu0 %v1615
    %v1617 = vpop.xlane.xlu0 %1616
    %v1618 = vsel %vm559, %v312, 0.0
    %1619 = vadd.xlane.f32.xlu0 %v1618
    %v1620 = vpop.xlane.xlu0 %1619
    %v1621 = vsel %vm559, %v313, 0.0
    %1622 = vadd.xlane.f32.xlu0 %v1621
    %v1623 = vpop.xlane.xlu0 %1622
    %v1624 = vsel %vm559, %v314, 0.0
    %1625 = vadd.xlane.f32.xlu0 %v1624
    %v1626 = vpop.xlane.xlu0 %1625
    %v1627 = vsel %vm559, %v315, 0.0
    %1628 = vadd.xlane.f32.xlu0 %v1627
    %v1629 = vpop.xlane.xlu0 %1628
    %v1630 = vsel %vm559, %v316, 0.0
    %1631 = vadd.xlane.f32.xlu0 %v1630
    %v1632 = vpop.xlane.xlu0 %1631
    %v1633 = vsel %vm559, %v317, 0.0
    %1634 = vadd.xlane.f32.xlu0 %v1633
    %v1635 = vpop.xlane.xlu0 %1634
    %v1636 = vsel %vm559, %v318, 0.0
    %1637 = vadd.xlane.f32.xlu0 %v1636
    %v1638 = vpop.xlane.xlu0 %1637
    %v1639 = vsel %vm559, %v319, 0.0
    %1640 = vadd.xlane.f32.xlu0 %v1639
    %v1641 = vpop.xlane.xlu0 %1640
    %v1642 = vsel %vm559, %v320, 0.0
    %1643 = vadd.xlane.f32.xlu0 %v1642
    %v1644 = vpop.xlane.xlu0 %1643
    %v1645 = vsel %vm559, %v321, 0.0
    %1646 = vadd.xlane.f32.xlu0 %v1645
    %v1647 = vpop.xlane.xlu0 %1646
    %v1648 = vsel %vm559, %v322, 0.0
    %1649 = vadd.xlane.f32.xlu0 %v1648
    %v1650 = vpop.xlane.xlu0 %1649
    %v1651 = vsel %vm559, %v323, 0.0
    %1652 = vadd.xlane.f32.xlu0 %v1651
    %v1653 = vpop.xlane.xlu0 %1652
    %v1654 = vsel %vm559, %v324, 0.0
    %1655 = vadd.xlane.f32.xlu0 %v1654
    %v1656 = vpop.xlane.xlu0 %1655
    %v1657 = vsel %vm559, %v325, 0.0
    %1658 = vadd.xlane.f32.xlu0 %v1657
    %v1659 = vpop.xlane.xlu0 %1658
    %v1660 = vsel %vm559, %v326, 0.0
    %1661 = vadd.xlane.f32.xlu0 %v1660
    %v1662 = vpop.xlane.xlu0 %1661
    %v1663 = vsel %vm559, %v327, 0.0
    %1664 = vadd.xlane.f32.xlu0 %v1663
    %v1665 = vpop.xlane.xlu0 %1664
    %v1666 = vsel %vm559, %v328, 0.0
    %1667 = vadd.xlane.f32.xlu0 %v1666
    %v1668 = vpop.xlane.xlu0 %1667
    %v1669 = vsel %vm559, %v329, 0.0
    %1670 = vadd.xlane.f32.xlu0 %v1669
    %v1671 = vpop.xlane.xlu0 %1670
    %v1672 = vsel %vm559, %v330, 0.0
    %1673 = vadd.xlane.f32.xlu0 %v1672
    %v1674 = vpop.xlane.xlu0 %1673
    %v1675 = vsel %vm559, %v331, 0.0
    %1676 = vadd.xlane.f32.xlu0 %v1675
    %v1677 = vpop.xlane.xlu0 %1676
    %v1678 = vsel %vm559, %v332, 0.0
    %1679 = vadd.xlane.f32.xlu0 %v1678
    %v1680 = vpop.xlane.xlu0 %1679
    %v1681 = vsel %vm559, %v333, 0.0
    %1682 = vadd.xlane.f32.xlu0 %v1681
    %v1683 = vpop.xlane.xlu0 %1682
    %v1684 = vsel %vm559, %v334, 0.0
    %1685 = vadd.xlane.f32.xlu0 %v1684
    %v1686 = vpop.xlane.xlu0 %1685
    %v1687 = vsel %vm559, %v335, 0.0
    %1688 = vadd.xlane.f32.xlu0 %v1687
    %v1689 = vpop.xlane.xlu0 %1688
    %v1690 = vsel %vm559, %v336, 0.0
    %1691 = vadd.xlane.f32.xlu0 %v1690
    %v1692 = vpop.xlane.xlu0 %1691
    %v1693 = vsel %vm559, %v337, 0.0
    %1694 = vadd.xlane.f32.xlu0 %v1693
    %v1695 = vpop.xlane.xlu0 %1694
    %v1696 = vsel %vm559, %v338, 0.0
    %1697 = vadd.xlane.f32.xlu0 %v1696
    %v1698 = vpop.xlane.xlu0 %1697
    %v1699 = vsel %vm559, %v339, 0.0
    %1700 = vadd.xlane.f32.xlu0 %v1699
    %v1701 = vpop.xlane.xlu0 %1700
    %v1702 = vsel %vm559, %v340, 0.0
    %1703 = vadd.xlane.f32.xlu0 %v1702
    %v1704 = vpop.xlane.xlu0 %1703
    %v1705 = vsel %vm559, %v341, 0.0
    %1706 = vadd.xlane.f32.xlu0 %v1705
    %v1707 = vpop.xlane.xlu0 %1706
    %v1708 = vsel %vm559, %v342, 0.0
    %1709 = vadd.xlane.f32.xlu0 %v1708
    %v1710 = vpop.xlane.xlu0 %1709
    %v1711 = vsel %vm559, %v343, 0.0
    %1712 = vadd.xlane.f32.xlu0 %v1711
    %v1713 = vpop.xlane.xlu0 %1712
    %v1714 = vsel %vm559, %v344, 0.0
    %1715 = vadd.xlane.f32.xlu0 %v1714
    %v1716 = vpop.xlane.xlu0 %1715
    %v1717 = vsel %vm559, %v345, 0.0
    %1718 = vadd.xlane.f32.xlu0 %v1717
    %v1719 = vpop.xlane.xlu0 %1718
    %v1720 = vsel %vm559, %v346, 0.0
    %1721 = vadd.xlane.f32.xlu0 %v1720
    %v1722 = vpop.xlane.xlu0 %1721
    %v1723 = vsel %vm559, %v347, 0.0
    %1724 = vadd.xlane.f32.xlu0 %v1723
    %v1725 = vpop.xlane.xlu0 %1724
    %v1726 = vsel %vm559, %v348, 0.0
    %1727 = vadd.xlane.f32.xlu0 %v1726
    %v1728 = vpop.xlane.xlu0 %1727
    %v1729 = vsel %vm559, %v349, 0.0
    %1730 = vadd.xlane.f32.xlu0 %v1729
    %v1731 = vpop.xlane.xlu0 %1730
    %v1732 = vsel %vm559, %v350, 0.0
    %1733 = vadd.xlane.f32.xlu0 %v1732
    %v1734 = vpop.xlane.xlu0 %1733
    %v1735 = vsel %vm559, %v351, 0.0
    %1736 = vadd.xlane.f32.xlu0 %v1735
    %v1737 = vpop.xlane.xlu0 %1736
    %v1738 = vsel %vm559, %v352, 0.0
    %1739 = vadd.xlane.f32.xlu0 %v1738
    %v1740 = vpop.xlane.xlu0 %1739
    %v1741 = vsel %vm559, %v353, 0.0
    %1742 = vadd.xlane.f32.xlu0 %v1741
    %v1743 = vpop.xlane.xlu0 %1742
    %v1744 = vsel %vm559, %v354, 0.0
    %1745 = vadd.xlane.f32.xlu0 %v1744
    %v1746 = vpop.xlane.xlu0 %1745
    %v1747 = vsel %vm559, %v355, 0.0
    %1748 = vadd.xlane.f32.xlu0 %v1747
    %v1749 = vpop.xlane.xlu0 %1748
    %v1750 = vsel %vm559, %v356, 0.0
    %1751 = vadd.xlane.f32.xlu0 %v1750
    %v1752 = vpop.xlane.xlu0 %1751
    %v1753 = vsel %vm559, %v357, 0.0
    %1754 = vadd.xlane.f32.xlu0 %v1753
    %v1755 = vpop.xlane.xlu0 %1754
    %v1756 = vsel %vm559, %v358, 0.0
    %1757 = vadd.xlane.f32.xlu0 %v1756
    %v1758 = vpop.xlane.xlu0 %1757
    %v1759 = vsel %vm559, %v359, 0.0
    %1760 = vadd.xlane.f32.xlu0 %v1759
    %v1761 = vpop.xlane.xlu0 %1760
    %v1762 = vsel %vm559, %v360, 0.0
    %1763 = vadd.xlane.f32.xlu0 %v1762
    %v1764 = vpop.xlane.xlu0 %1763
    %v1765 = vsel %vm559, %v361, 0.0
    %1766 = vadd.xlane.f32.xlu0 %v1765
    %v1767 = vpop.xlane.xlu0 %1766
    %v1768 = vsel %vm559, %v362, 0.0
    %1769 = vadd.xlane.f32.xlu0 %v1768
    %v1770 = vpop.xlane.xlu0 %1769
    %v1771 = vsel %vm559, %v363, 0.0
    %1772 = vadd.xlane.f32.xlu0 %v1771
    %v1773 = vpop.xlane.xlu0 %1772
    %v1774 = vsel %vm559, %v364, 0.0
    %1775 = vadd.xlane.f32.xlu0 %v1774
    %v1776 = vpop.xlane.xlu0 %1775
    %v1777 = vsel %vm559, %v365, 0.0
    %1778 = vadd.xlane.f32.xlu0 %v1777
    %v1779 = vpop.xlane.xlu0 %1778
    %v1780 = vsel %vm559, %v366, 0.0
    %1781 = vadd.xlane.f32.xlu0 %v1780
    %v1782 = vpop.xlane.xlu0 %1781
    %v1783 = vsel %vm559, %v367, 0.0
    %1784 = vadd.xlane.f32.xlu0 %v1783
    %v1785 = vpop.xlane.xlu0 %1784
    %v1786 = vsel %vm559, %v368, 0.0
    %1787 = vadd.xlane.f32.xlu0 %v1786
    %v1788 = vpop.xlane.xlu0 %1787
    %v1789 = vsel %vm559, %v369, 0.0
    %1790 = vadd.xlane.f32.xlu0 %v1789
    %v1791 = vpop.xlane.xlu0 %1790
    %v1792 = vsel %vm559, %v370, 0.0
    %1793 = vadd.xlane.f32.xlu0 %v1792
    %v1794 = vpop.xlane.xlu0 %1793
    %v1795 = vsel %vm559, %v371, 0.0
    %1796 = vadd.xlane.f32.xlu0 %v1795
    %v1797 = vpop.xlane.xlu0 %1796
    %v1798 = vsel %vm559, %v372, 0.0
    %1799 = vadd.xlane.f32.xlu0 %v1798
    %v1800 = vpop.xlane.xlu0 %1799
    %v1801 = vsel %vm559, %v373, 0.0
    %1802 = vadd.xlane.f32.xlu0 %v1801
    %v1803 = vpop.xlane.xlu0 %1802
    %v1804 = vsel %vm559, %v374, 0.0
    %1805 = vadd.xlane.f32.xlu0 %v1804
    %v1806 = vpop.xlane.xlu0 %1805
    %v1807 = vsel %vm559, %v375, 0.0
    %1808 = vadd.xlane.f32.xlu0 %v1807
    %v1809 = vpop.xlane.xlu0 %1808
    %v1810 = vsel %vm559, %v376, 0.0
    %1811 = vadd.xlane.f32.xlu0 %v1810
    %v1812 = vpop.xlane.xlu0 %1811
    %v1813 = vsel %vm559, %v377, 0.0
    %1814 = vadd.xlane.f32.xlu0 %v1813
    %v1815 = vpop.xlane.xlu0 %1814
    %v1816 = vsel %vm559, %v378, 0.0
    %1817 = vadd.xlane.f32.xlu0 %v1816
    %v1818 = vpop.xlane.xlu0 %1817
    %v1819 = vsel %vm559, %v379, 0.0
    %1820 = vadd.xlane.f32.xlu0 %v1819
    %v1821 = vpop.xlane.xlu0 %1820
    %v1822 = vsel %vm559, %v380, 0.0
    %1823 = vadd.xlane.f32.xlu0 %v1822
    %v1824 = vpop.xlane.xlu0 %1823
    %v1825 = vsel %vm559, %v381, 0.0
    %1826 = vadd.xlane.f32.xlu0 %v1825
    %v1827 = vpop.xlane.xlu0 %1826
    %v1828 = vsel %vm559, %v382, 0.0
    %1829 = vadd.xlane.f32.xlu0 %v1828
    %v1830 = vpop.xlane.xlu0 %1829
    %v1831 = vsel %vm559, %v383, 0.0
    %1832 = vadd.xlane.f32.xlu0 %v1831
    %v1833 = vpop.xlane.xlu0 %1832
    %v1834 = vsel %vm559, %v384, 0.0
    %1835 = vadd.xlane.f32.xlu0 %v1834
    %v1836 = vpop.xlane.xlu0 %1835
    %v1837 = vsel %vm559, %v385, 0.0
    %1838 = vadd.xlane.f32.xlu0 %v1837
    %v1839 = vpop.xlane.xlu0 %1838
    %v1840 = vsel %vm559, %v386, 0.0
    %1841 = vadd.xlane.f32.xlu0 %v1840
    %v1842 = vpop.xlane.xlu0 %1841
    %v1843 = vsel %vm559, %v387, 0.0
    %1844 = vadd.xlane.f32.xlu0 %v1843
    %v1845 = vpop.xlane.xlu0 %1844
    %v1846 = vsel %vm559, %v388, 0.0
    %1847 = vadd.xlane.f32.xlu0 %v1846
    %v1848 = vpop.xlane.xlu0 %1847
    %v1849 = vsel %vm559, %v389, 0.0
    %1850 = vadd.xlane.f32.xlu0 %v1849
    %v1851 = vpop.xlane.xlu0 %1850
    %v1852 = vsel %vm559, %v390, 0.0
    %1853 = vadd.xlane.f32.xlu0 %v1852
    %v1854 = vpop.xlane.xlu0 %1853
    %v1855 = vsel %vm559, %v391, 0.0
    %1856 = vadd.xlane.f32.xlu0 %v1855
    %v1857 = vpop.xlane.xlu0 %1856
    %v1858 = vsel %vm559, %v392, 0.0
    %1859 = vadd.xlane.f32.xlu0 %v1858
    %v1860 = vpop.xlane.xlu0 %1859
    %v1861 = vsel %vm559, %v393, 0.0
    %1862 = vadd.xlane.f32.xlu0 %v1861
    %v1863 = vpop.xlane.xlu0 %1862
    %v1864 = vsel %vm559, %v394, 0.0
    %1865 = vadd.xlane.f32.xlu0 %v1864
    %v1866 = vpop.xlane.xlu0 %1865
    %v1867 = vsel %vm559, %v395, 0.0
    %1868 = vadd.xlane.f32.xlu0 %v1867
    %v1869 = vpop.xlane.xlu0 %1868
    %v1870 = vsel %vm559, %v396, 0.0
    %1871 = vadd.xlane.f32.xlu0 %v1870
    %v1872 = vpop.xlane.xlu0 %1871
    %v1873 = vsel %vm559, %v397, 0.0
    %1874 = vadd.xlane.f32.xlu0 %v1873
    %v1875 = vpop.xlane.xlu0 %1874
    %v1876 = vsel %vm559, %v398, 0.0
    %1877 = vadd.xlane.f32.xlu0 %v1876
    %v1878 = vpop.xlane.xlu0 %1877
    %v1879 = vsel %vm559, %v399, 0.0
    %1880 = vadd.xlane.f32.xlu0 %v1879
    %v1881 = vpop.xlane.xlu0 %1880
    %v1882 = vsel %vm559, %v400, 0.0
    %1883 = vadd.xlane.f32.xlu0 %v1882
    %v1884 = vpop.xlane.xlu0 %1883
    %v1885 = vsel %vm559, %v401, 0.0
    %1886 = vadd.xlane.f32.xlu0 %v1885
    %v1887 = vpop.xlane.xlu0 %1886
    %v1888 = vsel %vm559, %v402, 0.0
    %1889 = vadd.xlane.f32.xlu0 %v1888
    %v1890 = vpop.xlane.xlu0 %1889
    %v1891 = vsel %vm559, %v403, 0.0
    %1892 = vadd.xlane.f32.xlu0 %v1891
    %v1893 = vpop.xlane.xlu0 %1892
    %v1894 = vsel %vm559, %v404, 0.0
    %1895 = vadd.xlane.f32.xlu0 %v1894
    %v1896 = vpop.xlane.xlu0 %1895
    %v1897 = vsel %vm559, %v405, 0.0
    %1898 = vadd.xlane.f32.xlu0 %v1897
    %v1899 = vpop.xlane.xlu0 %1898
    %v1900 = vsel %vm559, %v406, 0.0
    %1901 = vadd.xlane.f32.xlu0 %v1900
    %v1902 = vpop.xlane.xlu0 %1901
    %v1903 = vsel %vm559, %v407, 0.0
    %1904 = vadd.xlane.f32.xlu0 %v1903
    %v1905 = vpop.xlane.xlu0 %1904
    %v1906 = vsel %vm559, %v408, 0.0
    %1907 = vadd.xlane.f32.xlu0 %v1906
    %v1908 = vpop.xlane.xlu0 %1907
    %v1909 = vsel %vm559, %v409, 0.0
    %1910 = vadd.xlane.f32.xlu0 %v1909
    %v1911 = vpop.xlane.xlu0 %1910
    %v1912 = vsel %vm559, %v410, 0.0
    %1913 = vadd.xlane.f32.xlu0 %v1912
    %v1914 = vpop.xlane.xlu0 %1913
    %v1915 = vsel %vm559, %v411, 0.0
    %1916 = vadd.xlane.f32.xlu0 %v1915
    %v1917 = vpop.xlane.xlu0 %1916
    %v1918 = vsel %vm559, %v412, 0.0
    %1919 = vadd.xlane.f32.xlu0 %v1918
    %v1920 = vpop.xlane.xlu0 %1919
    %v1921 = vsel %vm559, %v413, 0.0
    %1922 = vadd.xlane.f32.xlu0 %v1921
    %v1923 = vpop.xlane.xlu0 %1922
    %v1924 = vsel %vm559, %v414, 0.0
    %1925 = vadd.xlane.f32.xlu0 %v1924
    %v1926 = vpop.xlane.xlu0 %1925
    %v1927 = vsel %vm559, %v415, 0.0
    %1928 = vadd.xlane.f32.xlu0 %v1927
    %v1929 = vpop.xlane.xlu0 %1928
    %v1930 = vsel %vm559, %v416, 0.0
    %1931 = vadd.xlane.f32.xlu0 %v1930
    %v1932 = vpop.xlane.xlu0 %1931
    %v1933 = vsel %vm559, %v417, 0.0
    %1934 = vadd.xlane.f32.xlu0 %v1933
    %v1935 = vpop.xlane.xlu0 %1934
    %v1936 = vsel %vm559, %v418, 0.0
    %1937 = vadd.xlane.f32.xlu0 %v1936
    %v1938 = vpop.xlane.xlu0 %1937
    %v1939 = vsel %vm559, %v419, 0.0
    %1940 = vadd.xlane.f32.xlu0 %v1939
    %v1941 = vpop.xlane.xlu0 %1940
    %v1942 = vsel %vm559, %v420, 0.0
    %1943 = vadd.xlane.f32.xlu0 %v1942
    %v1944 = vpop.xlane.xlu0 %1943
    %v1945 = vsel %vm559, %v421, 0.0
    %1946 = vadd.xlane.f32.xlu0 %v1945
    %v1947 = vpop.xlane.xlu0 %1946
    %v1948 = vsel %vm559, %v422, 0.0
    %1949 = vadd.xlane.f32.xlu0 %v1948
    %v1950 = vpop.xlane.xlu0 %1949
    %v1951 = vsel %vm559, %v423, 0.0
    %1952 = vadd.xlane.f32.xlu0 %v1951
    %v1953 = vpop.xlane.xlu0 %1952
    %v1954 = vsel %vm559, %v424, 0.0
    %1955 = vadd.xlane.f32.xlu0 %v1954
    %v1956 = vpop.xlane.xlu0 %1955
    %v1957 = vsel %vm559, %v425, 0.0
    %1958 = vadd.xlane.f32.xlu0 %v1957
    %v1959 = vpop.xlane.xlu0 %1958
    %v1960 = vsel %vm559, %v426, 0.0
    %1961 = vadd.xlane.f32.xlu0 %v1960
    %v1962 = vpop.xlane.xlu0 %1961
    %v1963 = vsel %vm559, %v427, 0.0
    %1964 = vadd.xlane.f32.xlu0 %v1963
    %v1965 = vpop.xlane.xlu0 %1964
    %v1966 = vsel %vm559, %v428, 0.0
    %1967 = vadd.xlane.f32.xlu0 %v1966
    %v1968 = vpop.xlane.xlu0 %1967
    %v1969 = vsel %vm559, %v429, 0.0
    %1970 = vadd.xlane.f32.xlu0 %v1969
    %v1971 = vpop.xlane.xlu0 %1970
    %v1972 = vsel %vm559, %v430, 0.0
    %1973 = vadd.xlane.f32.xlu0 %v1972
    %v1974 = vpop.xlane.xlu0 %1973
    %v1975 = vsel %vm559, %v431, 0.0
    %1976 = vadd.xlane.f32.xlu0 %v1975
    %v1977 = vpop.xlane.xlu0 %1976
    %v1978 = vsel %vm559, %v432, 0.0
    %1979 = vadd.xlane.f32.xlu0 %v1978
    %v1980 = vpop.xlane.xlu0 %1979
    %v1981 = vsel %vm559, %v433, 0.0
    %1982 = vadd.xlane.f32.xlu0 %v1981
    %v1983 = vpop.xlane.xlu0 %1982
    %v1984 = vsel %vm559, %v434, 0.0
    %1985 = vadd.xlane.f32.xlu0 %v1984
    %v1986 = vpop.xlane.xlu0 %1985
    %v1987 = vsel %vm559, %v435, 0.0
    %1988 = vadd.xlane.f32.xlu0 %v1987
    %v1989 = vpop.xlane.xlu0 %1988
    %v1990 = vsel %vm559, %v436, 0.0
    %1991 = vadd.xlane.f32.xlu0 %v1990
    %v1992 = vpop.xlane.xlu0 %1991
    %v1993 = vsel %vm559, %v437, 0.0
    %1994 = vadd.xlane.f32.xlu0 %v1993
    %v1995 = vpop.xlane.xlu0 %1994
    %v1996 = vsel %vm559, %v438, 0.0
    %1997 = vadd.xlane.f32.xlu0 %v1996
    %v1998 = vpop.xlane.xlu0 %1997
    %v1999 = vsel %vm559, %v439, 0.0
    %2000 = vadd.xlane.f32.xlu0 %v1999
    %v2001 = vpop.xlane.xlu0 %2000
    %v2002 = vsel %vm559, %v440, 0.0
    %2003 = vadd.xlane.f32.xlu0 %v2002
    %v2004 = vpop.xlane.xlu0 %2003
    %v2005 = vsel %vm559, %v441, 0.0
    %2006 = vadd.xlane.f32.xlu0 %v2005
    %v2007 = vpop.xlane.xlu0 %2006
    %v2008 = vsel %vm559, %v442, 0.0
    %2009 = vadd.xlane.f32.xlu0 %v2008
    %v2010 = vpop.xlane.xlu0 %2009
    %v2011 = vsel %vm559, %v443, 0.0
    %2012 = vadd.xlane.f32.xlu0 %v2011
    %v2013 = vpop.xlane.xlu0 %2012
    %v2014 = vsel %vm559, %v444, 0.0
    %2015 = vadd.xlane.f32.xlu0 %v2014
    %v2016 = vpop.xlane.xlu0 %2015
    %v2017 = vsel %vm559, %v445, 0.0
    %2018 = vadd.xlane.f32.xlu0 %v2017
    %v2019 = vpop.xlane.xlu0 %2018
    %v2020 = vsel %vm559, %v446, 0.0
    %2021 = vadd.xlane.f32.xlu0 %v2020
    %v2022 = vpop.xlane.xlu0 %2021
    %v2023 = vsel %vm559, %v447, 0.0
    %2024 = vadd.xlane.f32.xlu0 %v2023
    %v2025 = vpop.xlane.xlu0 %2024
    %v2026 = vsel %vm559, %v448, 0.0
    %2027 = vadd.xlane.f32.xlu0 %v2026
    %v2028 = vpop.xlane.xlu0 %2027
    %v2029 = vsel %vm559, %v449, 0.0
    %2030 = vadd.xlane.f32.xlu0 %v2029
    %v2031 = vpop.xlane.xlu0 %2030
    %v2032 = vsel %vm559, %v450, 0.0
    %2033 = vadd.xlane.f32.xlu0 %v2032
    %v2034 = vpop.xlane.xlu0 %2033
    %v2035 = vsel %vm559, %v451, 0.0
    %2036 = vadd.xlane.f32.xlu0 %v2035
    %v2037 = vpop.xlane.xlu0 %2036
    %v2038 = vsel %vm559, %v452, 0.0
    %2039 = vadd.xlane.f32.xlu0 %v2038
    %v2040 = vpop.xlane.xlu0 %2039
    %v2041 = vsel %vm559, %v453, 0.0
    %2042 = vadd.xlane.f32.xlu0 %v2041
    %v2043 = vpop.xlane.xlu0 %2042
    %v2044 = vsel %vm559, %v454, 0.0
    %2045 = vadd.xlane.f32.xlu0 %v2044
    %v2046 = vpop.xlane.xlu0 %2045
    %v2047 = vsel %vm559, %v455, 0.0
    %2048 = vadd.xlane.f32.xlu0 %v2047
    %v2049 = vpop.xlane.xlu0 %2048
    %v2050 = vsel %vm559, %v456, 0.0
    %2051 = vadd.xlane.f32.xlu0 %v2050
    %v2052 = vpop.xlane.xlu0 %2051
    %v2053 = vsel %vm559, %v457, 0.0
    %2054 = vadd.xlane.f32.xlu0 %v2053
    %v2055 = vpop.xlane.xlu0 %2054
    %v2056 = vsel %vm559, %v458, 0.0
    %2057 = vadd.xlane.f32.xlu0 %v2056
    %v2058 = vpop.xlane.xlu0 %2057
    %v2059 = vsel %vm559, %v459, 0.0
    %2060 = vadd.xlane.f32.xlu0 %v2059
    %v2061 = vpop.xlane.xlu0 %2060
    %v2062 = vsel %vm559, %v460, 0.0
    %2063 = vadd.xlane.f32.xlu0 %v2062
    %v2064 = vpop.xlane.xlu0 %2063
    %v2065 = vsel %vm559, %v461, 0.0
    %2066 = vadd.xlane.f32.xlu0 %v2065
    %v2067 = vpop.xlane.xlu0 %2066
    %v2068 = vsel %vm559, %v462, 0.0
    %2069 = vadd.xlane.f32.xlu0 %v2068
    %v2070 = vpop.xlane.xlu0 %2069
    %v2071 = vsel %vm559, %v463, 0.0
    %2072 = vadd.xlane.f32.xlu0 %v2071
    %v2073 = vpop.xlane.xlu0 %2072
    %v2074 = vsel %vm559, %v464, 0.0
    %2075 = vadd.xlane.f32.xlu0 %v2074
    %v2076 = vpop.xlane.xlu0 %2075
    %v2077 = vsel %vm559, %v465, 0.0
    %2078 = vadd.xlane.f32.xlu0 %v2077
    %v2079 = vpop.xlane.xlu0 %2078
    %v2080 = vsel %vm559, %v466, 0.0
    %2081 = vadd.xlane.f32.xlu0 %v2080
    %v2082 = vpop.xlane.xlu0 %2081
    %v2083 = vsel %vm559, %v467, 0.0
    %2084 = vadd.xlane.f32.xlu0 %v2083
    %v2085 = vpop.xlane.xlu0 %2084
    %v2086 = vsel %vm559, %v468, 0.0
    %2087 = vadd.xlane.f32.xlu0 %v2086
    %v2088 = vpop.xlane.xlu0 %2087
    %v2089 = vsel %vm559, %v469, 0.0
    %2090 = vadd.xlane.f32.xlu0 %v2089
    %v2091 = vpop.xlane.xlu0 %2090
    %v2092 = vsel %vm559, %v470, 0.0
    %2093 = vadd.xlane.f32.xlu0 %v2092
    %v2094 = vpop.xlane.xlu0 %2093
    %v2095 = vsel %vm559, %v471, 0.0
    %2096 = vadd.xlane.f32.xlu0 %v2095
    %v2097 = vpop.xlane.xlu0 %2096
    %v2098 = vsel %vm559, %v472, 0.0
    %2099 = vadd.xlane.f32.xlu0 %v2098
    %v2100 = vpop.xlane.xlu0 %2099
    %v2101 = vsel %vm559, %v473, 0.0
    %2102 = vadd.xlane.f32.xlu0 %v2101
    %v2103 = vpop.xlane.xlu0 %2102
    %v2104 = vsel %vm559, %v474, 0.0
    %2105 = vadd.xlane.f32.xlu0 %v2104
    %v2106 = vpop.xlane.xlu0 %2105
    %v2107 = vsel %vm559, %v475, 0.0
    %2108 = vadd.xlane.f32.xlu0 %v2107
    %v2109 = vpop.xlane.xlu0 %2108
    %v2110 = vsel %vm559, %v476, 0.0
    %2111 = vadd.xlane.f32.xlu0 %v2110
    %v2112 = vpop.xlane.xlu0 %2111
    %v2113 = vsel %vm559, %v477, 0.0
    %2114 = vadd.xlane.f32.xlu0 %v2113
    %v2115 = vpop.xlane.xlu0 %2114
    %v2116 = vsel %vm559, %v478, 0.0
    %2117 = vadd.xlane.f32.xlu0 %v2116
    %v2118 = vpop.xlane.xlu0 %2117
    %v2119 = vsel %vm559, %v479, 0.0
    %2120 = vadd.xlane.f32.xlu0 %v2119
    %v2121 = vpop.xlane.xlu0 %2120
    %v2122 = vsel %vm559, %v480, 0.0
    %2123 = vadd.xlane.f32.xlu0 %v2122
    %v2124 = vpop.xlane.xlu0 %2123
    %v2125 = vsel %vm559, %v481, 0.0
    %2126 = vadd.xlane.f32.xlu0 %v2125
    %v2127 = vpop.xlane.xlu0 %2126
    %v2128 = vsel %vm559, %v482, 0.0
    %2129 = vadd.xlane.f32.xlu0 %v2128
    %v2130 = vpop.xlane.xlu0 %2129
    %v2131 = vsel %vm559, %v483, 0.0
    %2132 = vadd.xlane.f32.xlu0 %v2131
    %v2133 = vpop.xlane.xlu0 %2132
    %v2134 = vsel %vm559, %v484, 0.0
    %2135 = vadd.xlane.f32.xlu0 %v2134
    %v2136 = vpop.xlane.xlu0 %2135
    %v2137 = vsel %vm559, %v485, 0.0
    %2138 = vadd.xlane.f32.xlu0 %v2137
    %v2139 = vpop.xlane.xlu0 %2138
    %v2140 = vsel %vm559, %v486, 0.0
    %2141 = vadd.xlane.f32.xlu0 %v2140
    %v2142 = vpop.xlane.xlu0 %2141
    %v2143 = vsel %vm559, %v487, 0.0
    %2144 = vadd.xlane.f32.xlu0 %v2143
    %v2145 = vpop.xlane.xlu0 %2144
    %v2146 = vsel %vm559, %v488, 0.0
    %2147 = vadd.xlane.f32.xlu0 %v2146
    %v2148 = vpop.xlane.xlu0 %2147
    %v2149 = vsel %vm559, %v489, 0.0
    %2150 = vadd.xlane.f32.xlu0 %v2149
    %v2151 = vpop.xlane.xlu0 %2150
    %v2152 = vsel %vm559, %v490, 0.0
    %2153 = vadd.xlane.f32.xlu0 %v2152
    %v2154 = vpop.xlane.xlu0 %2153
    %v2155 = vsel %vm559, %v491, 0.0
    %2156 = vadd.xlane.f32.xlu0 %v2155
    %v2157 = vpop.xlane.xlu0 %2156
    %v2158 = vsel %vm559, %v492, 0.0
    %2159 = vadd.xlane.f32.xlu0 %v2158
    %v2160 = vpop.xlane.xlu0 %2159
    %v2161 = vsel %vm559, %v493, 0.0
    %2162 = vadd.xlane.f32.xlu0 %v2161
    %v2163 = vpop.xlane.xlu0 %2162
    %v2164 = vsel %vm559, %v494, 0.0
    %2165 = vadd.xlane.f32.xlu0 %v2164
    %v2166 = vpop.xlane.xlu0 %2165
    %v2167 = vsel %vm559, %v495, 0.0
    %2168 = vadd.xlane.f32.xlu0 %v2167
    %v2169 = vpop.xlane.xlu0 %2168
    %v2170 = vsel %vm559, %v496, 0.0
    %2171 = vadd.xlane.f32.xlu0 %v2170
    %v2172 = vpop.xlane.xlu0 %2171
    %v2173 = vsel %vm559, %v497, 0.0
    %2174 = vadd.xlane.f32.xlu0 %v2173
    %v2175 = vpop.xlane.xlu0 %2174
    %v2176 = vsel %vm559, %v498, 0.0
    %2177 = vadd.xlane.f32.xlu0 %v2176
    %v2178 = vpop.xlane.xlu0 %2177
    %v2179 = vsel %vm559, %v499, 0.0
    %2180 = vadd.xlane.f32.xlu0 %v2179
    %v2181 = vpop.xlane.xlu0 %2180
    %v2182 = vsel %vm559, %v500, 0.0
    %2183 = vadd.xlane.f32.xlu0 %v2182
    %v2184 = vpop.xlane.xlu0 %2183
    %v2185 = vsel %vm559, %v501, 0.0
    %2186 = vadd.xlane.f32.xlu0 %v2185
    %v2187 = vpop.xlane.xlu0 %2186
    %v2188 = vsel %vm559, %v502, 0.0
    %2189 = vadd.xlane.f32.xlu0 %v2188
    %v2190 = vpop.xlane.xlu0 %2189
    %v2191 = vsel %vm559, %v503, 0.0
    %2192 = vadd.xlane.f32.xlu0 %v2191
    %v2193 = vpop.xlane.xlu0 %2192
    %v2194 = vsel %vm559, %v504, 0.0
    %2195 = vadd.xlane.f32.xlu0 %v2194
    %v2196 = vpop.xlane.xlu0 %2195
    %v2197 = vsel %vm559, %v505, 0.0
    %2198 = vadd.xlane.f32.xlu0 %v2197
    %v2199 = vpop.xlane.xlu0 %2198
    %v2200 = vsel %vm559, %v506, 0.0
    %2201 = vadd.xlane.f32.xlu0 %v2200
    %v2202 = vpop.xlane.xlu0 %2201
    %v2203 = vsel %vm559, %v507, 0.0
    %2204 = vadd.xlane.f32.xlu0 %v2203
    %v2205 = vpop.xlane.xlu0 %2204
    %v2206 = vsel %vm559, %v508, 0.0
    %2207 = vadd.xlane.f32.xlu0 %v2206
    %v2208 = vpop.xlane.xlu0 %2207
    %v2209 = vsel %vm559, %v509, 0.0
    %2210 = vadd.xlane.f32.xlu0 %v2209
    %v2211 = vpop.xlane.xlu0 %2210
    %v2212 = vsel %vm559, %v510, 0.0
    %2213 = vadd.xlane.f32.xlu0 %v2212
    %v2214 = vpop.xlane.xlu0 %2213
    %v2215 = vsel %vm559, %v511, 0.0
    %2216 = vadd.xlane.f32.xlu0 %v2215
    %v2217 = vpop.xlane.xlu0 %2216
    %v2218 = vsel %vm559, %v512, 0.0
    %2219 = vadd.xlane.f32.xlu0 %v2218
    %v2220 = vpop.xlane.xlu0 %2219
    %v2221 = vsel %vm559, %v513, 0.0
    %2222 = vadd.xlane.f32.xlu0 %v2221
    %v2223 = vpop.xlane.xlu0 %2222
    %v2224 = vsel %vm559, %v514, 0.0
    %2225 = vadd.xlane.f32.xlu0 %v2224
    %v2226 = vpop.xlane.xlu0 %2225
    %v2227 = vsel %vm559, %v515, 0.0
    %2228 = vadd.xlane.f32.xlu0 %v2227
    %v2229 = vpop.xlane.xlu0 %2228
    %v2230 = vsel %vm559, %v516, 0.0
    %2231 = vadd.xlane.f32.xlu0 %v2230
    %v2232 = vpop.xlane.xlu0 %2231
    %v2233 = vsel %vm559, %v517, 0.0
    %2234 = vadd.xlane.f32.xlu0 %v2233
    %v2235 = vpop.xlane.xlu0 %2234
    %v2236 = vsel %vm559, %v518, 0.0
    %2237 = vadd.xlane.f32.xlu0 %v2236
    %v2238 = vpop.xlane.xlu0 %2237
    %v2239 = vsel %vm559, %v519, 0.0
    %2240 = vadd.xlane.f32.xlu0 %v2239
    %v2241 = vpop.xlane.xlu0 %2240
    %v2242 = vsel %vm559, %v520, 0.0
    %2243 = vadd.xlane.f32.xlu0 %v2242
    %v2244 = vpop.xlane.xlu0 %2243
    %v2245 = vsel %vm559, %v521, 0.0
    %2246 = vadd.xlane.f32.xlu0 %v2245
    %v2247 = vpop.xlane.xlu0 %2246
    %v2248 = vsel %vm559, %v522, 0.0
    %2249 = vadd.xlane.f32.xlu0 %v2248
    %v2250 = vpop.xlane.xlu0 %2249
    %v2251 = vsel %vm559, %v523, 0.0
    %2252 = vadd.xlane.f32.xlu0 %v2251
    %v2253 = vpop.xlane.xlu0 %2252
    %v2254 = vsel %vm559, %v524, 0.0
    %2255 = vadd.xlane.f32.xlu0 %v2254
    %v2256 = vpop.xlane.xlu0 %2255
    %v2257 = vsel %vm559, %v525, 0.0
    %2258 = vadd.xlane.f32.xlu0 %v2257
    %v2259 = vpop.xlane.xlu0 %2258
    %v2260 = vsel %vm559, %v526, 0.0
    %2261 = vadd.xlane.f32.xlu0 %v2260
    %v2262 = vpop.xlane.xlu0 %2261
    %v2263 = vsel %vm559, %v527, 0.0
    %2264 = vadd.xlane.f32.xlu0 %v2263
    %v2265 = vpop.xlane.xlu0 %2264
    %v2266 = vsel %vm559, %v528, 0.0
    %2267 = vadd.xlane.f32.xlu0 %v2266
    %v2268 = vpop.xlane.xlu0 %2267
    %v2269 = vsel %vm559, %v529, 0.0
    %2270 = vadd.xlane.f32.xlu0 %v2269
    %v2271 = vpop.xlane.xlu0 %2270
    %v2272 = vsel %vm559, %v530, 0.0
    %2273 = vadd.xlane.f32.xlu0 %v2272
    %v2274 = vpop.xlane.xlu0 %2273
    %v2275 = vsel %vm559, %v531, 0.0
    %2276 = vadd.xlane.f32.xlu0 %v2275
    %v2277 = vpop.xlane.xlu0 %2276
    %v2278 = vsel %vm559, %v532, 0.0
    %2279 = vadd.xlane.f32.xlu0 %v2278
    %v2280 = vpop.xlane.xlu0 %2279
    %v2281 = vsel %vm559, %v533, 0.0
    %2282 = vadd.xlane.f32.xlu0 %v2281
    %v2283 = vpop.xlane.xlu0 %2282
    %v2284 = vsel %vm559, %v534, 0.0
    %2285 = vadd.xlane.f32.xlu0 %v2284
    %v2286 = vpop.xlane.xlu0 %2285
    %v2287 = vsel %vm559, %v535, 0.0
    %2288 = vadd.xlane.f32.xlu0 %v2287
    %v2289 = vpop.xlane.xlu0 %2288
    %v2290 = vsel %vm559, %v536, 0.0
    %2291 = vadd.xlane.f32.xlu0 %v2290
    %v2292 = vpop.xlane.xlu0 %2291
    %v2293 = vsel %vm559, %v537, 0.0
    %2294 = vadd.xlane.f32.xlu0 %v2293
    %v2295 = vpop.xlane.xlu0 %2294
    %v2296 = vsel %vm559, %v538, 0.0
    %2297 = vadd.xlane.f32.xlu0 %v2296
    %v2298 = vpop.xlane.xlu0 %2297
    %v2299 = vsel %vm559, %v539, 0.0
    %2300 = vadd.xlane.f32.xlu0 %v2299
    %v2301 = vpop.xlane.xlu0 %2300
    %v2302 = vsel %vm559, %v540, 0.0
    %2303 = vadd.xlane.f32.xlu0 %v2302
    %v2304 = vpop.xlane.xlu0 %2303
    %v2305 = vsel %vm559, %v541, 0.0
    %2306 = vadd.xlane.f32.xlu0 %v2305
    %v2307 = vpop.xlane.xlu0 %2306
    %v2308 = vsel %vm559, %v542, 0.0
    %2309 = vadd.xlane.f32.xlu0 %v2308
    %v2310 = vpop.xlane.xlu0 %2309
    %v2311 = vsel %vm559, %v543, 0.0
    %2312 = vadd.xlane.f32.xlu0 %v2311
    %v2313 = vpop.xlane.xlu0 %2312
    %v2314 = vsel %vm559, %v544, 0.0
    %2315 = vadd.xlane.f32.xlu0 %v2314
    %v2316 = vpop.xlane.xlu0 %2315
    %v2317 = vsel %vm559, %v545, 0.0
    %2318 = vadd.xlane.f32.xlu0 %v2317
    %v2319 = vpop.xlane.xlu0 %2318
    %v2320 = vsel %vm559, %v546, 0.0
    %2321 = vadd.xlane.f32.xlu0 %v2320
    %v2322 = vpop.xlane.xlu0 %2321
    %v2323 = vsel %vm559, %v547, 0.0
    %2324 = vadd.xlane.f32.xlu0 %v2323
    %v2325 = vpop.xlane.xlu0 %2324
    %v2326 = vsel %vm559, %v548, 0.0
    %2327 = vadd.xlane.f32.xlu0 %v2326
    %v2328 = vpop.xlane.xlu0 %2327
    %v2329 = vsel %vm559, %v549, 0.0
    %2330 = vadd.xlane.f32.xlu0 %v2329
    %v2331 = vpop.xlane.xlu0 %2330
    %v2332 = vsel %vm559, %v550, 0.0
    %2333 = vadd.xlane.f32.xlu0 %v2332
    %v2334 = vpop.xlane.xlu0 %2333
    %v2335 = vsel %vm559, %v551, 0.0
    %2336 = vadd.xlane.f32.xlu0 %v2335
    %v2337 = vpop.xlane.xlu0 %2336
    %v2338 = vsel %vm559, %v552, 0.0
    %2339 = vadd.xlane.f32.xlu0 %v2338
    %v2340 = vpop.xlane.xlu0 %2339
    %v2341 = vsel %vm559, %v553, 0.0
    %2342 = vadd.xlane.f32.xlu0 %v2341
    %v2343 = vpop.xlane.xlu0 %2342
    %v2344 = vsel %vm559, %v554, 0.0
    %2345 = vadd.xlane.f32.xlu0 %v2344
    %v2346 = vpop.xlane.xlu0 %2345
    %v2347 = vsel %vm559, %v555, 0.0
    %2348 = vadd.xlane.f32.xlu0 %v2347
    %v2349 = vpop.xlane.xlu0 %2348
    %v2350 = vsel %vm559, %v556, 0.0
    %2351 = vadd.xlane.f32.xlu0 %v2350
    %v2352 = vpop.xlane.xlu0 %2351
    %v2353 = vsel %vm559, %v557, 0.0
    %2354 = vadd.xlane.f32.xlu0 %v2353
    %v2355 = vpop.xlane.xlu0 %2354
    %v2356 = vsel %vm559, %v558, 0.0
    %2357 = vadd.xlane.f32.xlu0 %v2356
    %v2358 = vpop.xlane.xlu0 %2357
    %v2359 = vmul.f32 %v1593, %v1334
    %v2360 = vmul.f32 %v1596, %v1334
    %v2361 = vmul.f32 %v1599, %v1334
    %v2362 = vmul.f32 %v1602, %v1334
    %v2363 = vmul.f32 %v1605, %v1334
    %v2364 = vmul.f32 %v1608, %v1334
    %v2365 = vmul.f32 %v1611, %v1334
    %v2366 = vmul.f32 %v1614, %v1334
    %v2367 = vmul.f32 %v1617, %v1334
    %v2368 = vmul.f32 %v1620, %v1334
    %v2369 = vmul.f32 %v1623, %v1334
    %v2370 = vmul.f32 %v1626, %v1334
    %v2371 = vmul.f32 %v1629, %v1334
    %v2372 = vmul.f32 %v1632, %v1334
    %v2373 = vmul.f32 %v1635, %v1334
    %v2374 = vmul.f32 %v1638, %v1334
    %v2375 = vmul.f32 %v1641, %v1334
    %v2376 = vmul.f32 %v1644, %v1334
    %v2377 = vmul.f32 %v1647, %v1334
    %v2378 = vmul.f32 %v1650, %v1334
    %v2379 = vmul.f32 %v1653, %v1334
    %v2380 = vmul.f32 %v1656, %v1334
    %v2381 = vmul.f32 %v1659, %v1334
    %v2382 = vmul.f32 %v1662, %v1334
    %v2383 = vmul.f32 %v1665, %v1334
    %v2384 = vmul.f32 %v1668, %v1334
    %v2385 = vmul.f32 %v1671, %v1334
    %v2386 = vmul.f32 %v1674, %v1334
    %v2387 = vmul.f32 %v1677, %v1334
    %v2388 = vmul.f32 %v1680, %v1334
    %v2389 = vmul.f32 %v1683, %v1334
    %v2390 = vmul.f32 %v1686, %v1334
    %v2391 = vmul.f32 %v1689, %v1334
    %v2392 = vmul.f32 %v1692, %v1334
    %v2393 = vmul.f32 %v1695, %v1334
    %v2394 = vmul.f32 %v1698, %v1334
    %v2395 = vmul.f32 %v1701, %v1334
    %v2396 = vmul.f32 %v1704, %v1334
    %v2397 = vmul.f32 %v1707, %v1334
    %v2398 = vmul.f32 %v1710, %v1334
    %v2399 = vmul.f32 %v1713, %v1334
    %v2400 = vmul.f32 %v1716, %v1334
    %v2401 = vmul.f32 %v1719, %v1334
    %v2402 = vmul.f32 %v1722, %v1334
    %v2403 = vmul.f32 %v1725, %v1334
    %v2404 = vmul.f32 %v1728, %v1334
    %v2405 = vmul.f32 %v1731, %v1334
    %v2406 = vmul.f32 %v1734, %v1334
    %v2407 = vmul.f32 %v1737, %v1334
    %v2408 = vmul.f32 %v1740, %v1334
    %v2409 = vmul.f32 %v1743, %v1334
    %v2410 = vmul.f32 %v1746, %v1334
    %v2411 = vmul.f32 %v1749, %v1334
    %v2412 = vmul.f32 %v1752, %v1334
    %v2413 = vmul.f32 %v1755, %v1334
    %v2414 = vmul.f32 %v1758, %v1334
    %v2415 = vmul.f32 %v1761, %v1334
    %v2416 = vmul.f32 %v1764, %v1334
    %v2417 = vmul.f32 %v1767, %v1334
    %v2418 = vmul.f32 %v1770, %v1334
    %v2419 = vmul.f32 %v1773, %v1334
    %v2420 = vmul.f32 %v1776, %v1334
    %v2421 = vmul.f32 %v1779, %v1334
    %v2422 = vmul.f32 %v1782, %v1334
    %v2423 = vmul.f32 %v1785, %v1334
    %v2424 = vmul.f32 %v1788, %v1334
    %v2425 = vmul.f32 %v1791, %v1334
    %v2426 = vmul.f32 %v1794, %v1334
    %v2427 = vmul.f32 %v1797, %v1334
    %v2428 = vmul.f32 %v1800, %v1334
    %v2429 = vmul.f32 %v1803, %v1334
    %v2430 = vmul.f32 %v1806, %v1334
    %v2431 = vmul.f32 %v1809, %v1334
    %v2432 = vmul.f32 %v1812, %v1334
    %v2433 = vmul.f32 %v1815, %v1334
    %v2434 = vmul.f32 %v1818, %v1334
    %v2435 = vmul.f32 %v1821, %v1334
    %v2436 = vmul.f32 %v1824, %v1334
    %v2437 = vmul.f32 %v1827, %v1334
    %v2438 = vmul.f32 %v1830, %v1334
    %v2439 = vmul.f32 %v1833, %v1334
    %v2440 = vmul.f32 %v1836, %v1334
    %v2441 = vmul.f32 %v1839, %v1334
    %v2442 = vmul.f32 %v1842, %v1334
    %v2443 = vmul.f32 %v1845, %v1334
    %v2444 = vmul.f32 %v1848, %v1334
    %v2445 = vmul.f32 %v1851, %v1334
    %v2446 = vmul.f32 %v1854, %v1334
    %v2447 = vmul.f32 %v1857, %v1334
    %v2448 = vmul.f32 %v1860, %v1334
    %v2449 = vmul.f32 %v1863, %v1334
    %v2450 = vmul.f32 %v1866, %v1334
    %v2451 = vmul.f32 %v1869, %v1334
    %v2452 = vmul.f32 %v1872, %v1334
    %v2453 = vmul.f32 %v1875, %v1334
    %v2454 = vmul.f32 %v1878, %v1334
    %v2455 = vmul.f32 %v1881, %v1334
    %v2456 = vmul.f32 %v1884, %v1334
    %v2457 = vmul.f32 %v1887, %v1334
    %v2458 = vmul.f32 %v1890, %v1334
    %v2459 = vmul.f32 %v1893, %v1334
    %v2460 = vmul.f32 %v1896, %v1334
    %v2461 = vmul.f32 %v1899, %v1334
    %v2462 = vmul.f32 %v1902, %v1334
    %v2463 = vmul.f32 %v1905, %v1334
    %v2464 = vmul.f32 %v1908, %v1334
    %v2465 = vmul.f32 %v1911, %v1334
    %v2466 = vmul.f32 %v1914, %v1334
    %v2467 = vmul.f32 %v1917, %v1334
    %v2468 = vmul.f32 %v1920, %v1334
    %v2469 = vmul.f32 %v1923, %v1334
    %v2470 = vmul.f32 %v1926, %v1334
    %v2471 = vmul.f32 %v1929, %v1334
    %v2472 = vmul.f32 %v1932, %v1334
    %v2473 = vmul.f32 %v1935, %v1334
    %v2474 = vmul.f32 %v1938, %v1334
    %v2475 = vmul.f32 %v1941, %v1334
    %v2476 = vmul.f32 %v1944, %v1334
    %v2477 = vmul.f32 %v1947, %v1334
    %v2478 = vmul.f32 %v1950, %v1334
    %v2479 = vmul.f32 %v1953, %v1334
    %v2480 = vmul.f32 %v1956, %v1334
    %v2481 = vmul.f32 %v1959, %v1334
    %v2482 = vmul.f32 %v1962, %v1334
    %v2483 = vmul.f32 %v1965, %v1334
    %v2484 = vmul.f32 %v1968, %v1334
    %v2485 = vmul.f32 %v1971, %v1334
    %v2486 = vmul.f32 %v1974, %v1334
    %v2487 = vmul.f32 %v1977, %v1334
    %v2488 = vmul.f32 %v1980, %v1334
    %v2489 = vmul.f32 %v1983, %v1334
    %v2490 = vmul.f32 %v1986, %v1334
    %v2491 = vmul.f32 %v1989, %v1334
    %v2492 = vmul.f32 %v1992, %v1334
    %v2493 = vmul.f32 %v1995, %v1334
    %v2494 = vmul.f32 %v1998, %v1334
    %v2495 = vmul.f32 %v2001, %v1334
    %v2496 = vmul.f32 %v2004, %v1334
    %v2497 = vmul.f32 %v2007, %v1334
    %v2498 = vmul.f32 %v2010, %v1334
    %v2499 = vmul.f32 %v2013, %v1334
    %v2500 = vmul.f32 %v2016, %v1334
    %v2501 = vmul.f32 %v2019, %v1334
    %v2502 = vmul.f32 %v2022, %v1334
    %v2503 = vmul.f32 %v2025, %v1334
    %v2504 = vmul.f32 %v2028, %v1334
    %v2505 = vmul.f32 %v2031, %v1334
    %v2506 = vmul.f32 %v2034, %v1334
    %v2507 = vmul.f32 %v2037, %v1334
    %v2508 = vmul.f32 %v2040, %v1334
    %v2509 = vmul.f32 %v2043, %v1334
    %v2510 = vmul.f32 %v2046, %v1334
    %v2511 = vmul.f32 %v2049, %v1334
    %v2512 = vmul.f32 %v2052, %v1334
    %v2513 = vmul.f32 %v2055, %v1334
    %v2514 = vmul.f32 %v2058, %v1334
    %v2515 = vmul.f32 %v2061, %v1334
    %v2516 = vmul.f32 %v2064, %v1334
    %v2517 = vmul.f32 %v2067, %v1334
    %v2518 = vmul.f32 %v2070, %v1334
    %v2519 = vmul.f32 %v2073, %v1334
    %v2520 = vmul.f32 %v2076, %v1334
    %v2521 = vmul.f32 %v2079, %v1334
    %v2522 = vmul.f32 %v2082, %v1334
    %v2523 = vmul.f32 %v2085, %v1334
    %v2524 = vmul.f32 %v2088, %v1334
    %v2525 = vmul.f32 %v2091, %v1334
    %v2526 = vmul.f32 %v2094, %v1334
    %v2527 = vmul.f32 %v2097, %v1334
    %v2528 = vmul.f32 %v2100, %v1334
    %v2529 = vmul.f32 %v2103, %v1334
    %v2530 = vmul.f32 %v2106, %v1334
    %v2531 = vmul.f32 %v2109, %v1334
    %v2532 = vmul.f32 %v2112, %v1334
    %v2533 = vmul.f32 %v2115, %v1334
    %v2534 = vmul.f32 %v2118, %v1334
    %v2535 = vmul.f32 %v2121, %v1334
    %v2536 = vmul.f32 %v2124, %v1334
    %v2537 = vmul.f32 %v2127, %v1334
    %v2538 = vmul.f32 %v2130, %v1334
    %v2539 = vmul.f32 %v2133, %v1334
    %v2540 = vmul.f32 %v2136, %v1334
    %v2541 = vmul.f32 %v2139, %v1334
    %v2542 = vmul.f32 %v2142, %v1334
    %v2543 = vmul.f32 %v2145, %v1334
    %v2544 = vmul.f32 %v2148, %v1334
    %v2545 = vmul.f32 %v2151, %v1334
    %v2546 = vmul.f32 %v2154, %v1334
    %v2547 = vmul.f32 %v2157, %v1334
    %v2548 = vmul.f32 %v2160, %v1334
    %v2549 = vmul.f32 %v2163, %v1334
    %v2550 = vmul.f32 %v2166, %v1334
    %v2551 = vmul.f32 %v2169, %v1334
    %v2552 = vmul.f32 %v2172, %v1334
    %v2553 = vmul.f32 %v2175, %v1334
    %v2554 = vmul.f32 %v2178, %v1334
    %v2555 = vmul.f32 %v2181, %v1334
    %v2556 = vmul.f32 %v2184, %v1334
    %v2557 = vmul.f32 %v2187, %v1334
    %v2558 = vmul.f32 %v2190, %v1334
    %v2559 = vmul.f32 %v2193, %v1334
    %v2560 = vmul.f32 %v2196, %v1334
    %v2561 = vmul.f32 %v2199, %v1334
    %v2562 = vmul.f32 %v2202, %v1334
    %v2563 = vmul.f32 %v2205, %v1334
    %v2564 = vmul.f32 %v2208, %v1334
    %v2565 = vmul.f32 %v2211, %v1334
    %v2566 = vmul.f32 %v2214, %v1334
    %v2567 = vmul.f32 %v2217, %v1334
    %v2568 = vmul.f32 %v2220, %v1334
    %v2569 = vmul.f32 %v2223, %v1334
    %v2570 = vmul.f32 %v2226, %v1334
    %v2571 = vmul.f32 %v2229, %v1334
    %v2572 = vmul.f32 %v2232, %v1334
    %v2573 = vmul.f32 %v2235, %v1334
    %v2574 = vmul.f32 %v2238, %v1334
    %v2575 = vmul.f32 %v2241, %v1334
    %v2576 = vmul.f32 %v2244, %v1334
    %v2577 = vmul.f32 %v2247, %v1334
    %v2578 = vmul.f32 %v2250, %v1334
    %v2579 = vmul.f32 %v2253, %v1334
    %v2580 = vmul.f32 %v2256, %v1334
    %v2581 = vmul.f32 %v2259, %v1334
    %v2582 = vmul.f32 %v2262, %v1334
    %v2583 = vmul.f32 %v2265, %v1334
    %v2584 = vmul.f32 %v2268, %v1334
    %v2585 = vmul.f32 %v2271, %v1334
    %v2586 = vmul.f32 %v2274, %v1334
    %v2587 = vmul.f32 %v2277, %v1334
    %v2588 = vmul.f32 %v2280, %v1334
    %v2589 = vmul.f32 %v2283, %v1334
    %v2590 = vmul.f32 %v2286, %v1334
    %v2591 = vmul.f32 %v2289, %v1334
    %v2592 = vmul.f32 %v2292, %v1334
    %v2593 = vmul.f32 %v2295, %v1334
    %v2594 = vmul.f32 %v2298, %v1334
    %v2595 = vmul.f32 %v2301, %v1334
    %v2596 = vmul.f32 %v2304, %v1334
    %v2597 = vmul.f32 %v2307, %v1334
    %v2598 = vmul.f32 %v2310, %v1334
    %v2599 = vmul.f32 %v2313, %v1334
    %v2600 = vmul.f32 %v2316, %v1334
    %v2601 = vmul.f32 %v2319, %v1334
    %v2602 = vmul.f32 %v2322, %v1334
    %v2603 = vmul.f32 %v2325, %v1334
    %v2604 = vmul.f32 %v2328, %v1334
    %v2605 = vmul.f32 %v2331, %v1334
    %v2606 = vmul.f32 %v2334, %v1334
    %v2607 = vmul.f32 %v2337, %v1334
    %v2608 = vmul.f32 %v2340, %v1334
    %v2609 = vmul.f32 %v2343, %v1334
    %v2610 = vmul.f32 %v2346, %v1334
    %v2611 = vmul.f32 %v2349, %v1334
    %v2612 = vmul.f32 %v2352, %v1334
    %v2613 = vmul.f32 %v2355, %v1334
    %v2614 = vmul.f32 %v2358, %v1334
    %v2615 = vpack.c.bf16 %v1336, %v1335
    %v2616 = vpack.c.bf16 %v1338, %v1337
    %v2617 = vpack.c.bf16 %v1340, %v1339
    %v2618 = vpack.c.bf16 %v1342, %v1341
    %v2619 = vpack.c.bf16 %v1344, %v1343
    %v2620 = vpack.c.bf16 %v1346, %v1345
    %v2621 = vpack.c.bf16 %v1348, %v1347
    %v2622 = vpack.c.bf16 %v1350, %v1349
    %v2623 = vpack.c.bf16 %v1352, %v1351
    %v2624 = vpack.c.bf16 %v1354, %v1353
    %v2625 = vpack.c.bf16 %v1356, %v1355
    %v2626 = vpack.c.bf16 %v1358, %v1357
    %v2627 = vpack.c.bf16 %v1360, %v1359
    %v2628 = vpack.c.bf16 %v1362, %v1361
    %v2629 = vpack.c.bf16 %v1364, %v1363
    %v2630 = vpack.c.bf16 %v1366, %v1365
    %v2631 = vpack.c.bf16 %v1368, %v1367
    %v2632 = vpack.c.bf16 %v1370, %v1369
    %v2633 = vpack.c.bf16 %v1372, %v1371
    %v2634 = vpack.c.bf16 %v1374, %v1373
    %v2635 = vpack.c.bf16 %v1376, %v1375
    %v2636 = vpack.c.bf16 %v1378, %v1377
    %v2637 = vpack.c.bf16 %v1380, %v1379
    %v2638 = vpack.c.bf16 %v1382, %v1381
    %v2639 = vpack.c.bf16 %v1384, %v1383
    %v2640 = vpack.c.bf16 %v1386, %v1385
    %v2641 = vpack.c.bf16 %v1388, %v1387
    %v2642 = vpack.c.bf16 %v1390, %v1389
    %v2643 = vpack.c.bf16 %v1392, %v1391
    %v2644 = vpack.c.bf16 %v1394, %v1393
    %v2645 = vpack.c.bf16 %v1396, %v1395
    %v2646 = vpack.c.bf16 %v1398, %v1397
    %v2647 = vpack.c.bf16 %v1400, %v1399
    %v2648 = vpack.c.bf16 %v1402, %v1401
    %v2649 = vpack.c.bf16 %v1404, %v1403
    %v2650 = vpack.c.bf16 %v1406, %v1405
    %v2651 = vpack.c.bf16 %v1408, %v1407
    %v2652 = vpack.c.bf16 %v1410, %v1409
    %v2653 = vpack.c.bf16 %v1412, %v1411
    %v2654 = vpack.c.bf16 %v1414, %v1413
    %v2655 = vpack.c.bf16 %v1416, %v1415
    %v2656 = vpack.c.bf16 %v1418, %v1417
    %v2657 = vpack.c.bf16 %v1420, %v1419
    %v2658 = vpack.c.bf16 %v1422, %v1421
    %v2659 = vpack.c.bf16 %v1424, %v1423
    %v2660 = vpack.c.bf16 %v1426, %v1425
    %v2661 = vpack.c.bf16 %v1428, %v1427
    %v2662 = vpack.c.bf16 %v1430, %v1429
    %v2663 = vpack.c.bf16 %v1432, %v1431
    %v2664 = vpack.c.bf16 %v1434, %v1433
    %v2665 = vpack.c.bf16 %v1436, %v1435
    %v2666 = vpack.c.bf16 %v1438, %v1437
    %v2667 = vpack.c.bf16 %v1440, %v1439
    %v2668 = vpack.c.bf16 %v1442, %v1441
    %v2669 = vpack.c.bf16 %v1444, %v1443
    %v2670 = vpack.c.bf16 %v1446, %v1445
    %v2671 = vpack.c.bf16 %v1448, %v1447
    %v2672 = vpack.c.bf16 %v1450, %v1449
    %v2673 = vpack.c.bf16 %v1452, %v1451
    %v2674 = vpack.c.bf16 %v1454, %v1453
    %v2675 = vpack.c.bf16 %v1456, %v1455
    %v2676 = vpack.c.bf16 %v1458, %v1457
    %v2677 = vpack.c.bf16 %v1460, %v1459
    %v2678 = vpack.c.bf16 %v1462, %v1461
    %v2679 = vpack.c.bf16 %v1464, %v1463
    %v2680 = vpack.c.bf16 %v1466, %v1465
    %v2681 = vpack.c.bf16 %v1468, %v1467
    %v2682 = vpack.c.bf16 %v1470, %v1469
    %v2683 = vpack.c.bf16 %v1472, %v1471
    %v2684 = vpack.c.bf16 %v1474, %v1473
    %v2685 = vpack.c.bf16 %v1476, %v1475
    %v2686 = vpack.c.bf16 %v1478, %v1477
    %v2687 = vpack.c.bf16 %v1480, %v1479
    %v2688 = vpack.c.bf16 %v1482, %v1481
    %v2689 = vpack.c.bf16 %v1484, %v1483
    %v2690 = vpack.c.bf16 %v1486, %v1485
    %v2691 = vpack.c.bf16 %v1488, %v1487
    %v2692 = vpack.c.bf16 %v1490, %v1489
    %v2693 = vpack.c.bf16 %v1492, %v1491
    %v2694 = vpack.c.bf16 %v1494, %v1493
    %v2695 = vpack.c.bf16 %v1496, %v1495
    %v2696 = vpack.c.bf16 %v1498, %v1497
    %v2697 = vpack.c.bf16 %v1500, %v1499
    %v2698 = vpack.c.bf16 %v1502, %v1501
    %v2699 = vpack.c.bf16 %v1504, %v1503
    %v2700 = vpack.c.bf16 %v1506, %v1505
    %v2701 = vpack.c.bf16 %v1508, %v1507
    %v2702 = vpack.c.bf16 %v1510, %v1509
    %v2703 = vpack.c.bf16 %v1512, %v1511
    %v2704 = vpack.c.bf16 %v1514, %v1513
    %v2705 = vpack.c.bf16 %v1516, %v1515
    %v2706 = vpack.c.bf16 %v1518, %v1517
    %v2707 = vpack.c.bf16 %v1520, %v1519
    %v2708 = vpack.c.bf16 %v1522, %v1521
    %v2709 = vpack.c.bf16 %v1524, %v1523
    %v2710 = vpack.c.bf16 %v1526, %v1525
    %v2711 = vpack.c.bf16 %v1528, %v1527
    %v2712 = vpack.c.bf16 %v1530, %v1529
    %v2713 = vpack.c.bf16 %v1532, %v1531
    %v2714 = vpack.c.bf16 %v1534, %v1533
    %v2715 = vpack.c.bf16 %v1536, %v1535
    %v2716 = vpack.c.bf16 %v1538, %v1537
    %v2717 = vpack.c.bf16 %v1540, %v1539
    %v2718 = vpack.c.bf16 %v1542, %v1541
    %v2719 = vpack.c.bf16 %v1544, %v1543
    %v2720 = vpack.c.bf16 %v1546, %v1545
    %v2721 = vpack.c.bf16 %v1548, %v1547
    %v2722 = vpack.c.bf16 %v1550, %v1549
    %v2723 = vpack.c.bf16 %v1552, %v1551
    %v2724 = vpack.c.bf16 %v1554, %v1553
    %v2725 = vpack.c.bf16 %v1556, %v1555
    %v2726 = vpack.c.bf16 %v1558, %v1557
    %v2727 = vpack.c.bf16 %v1560, %v1559
    %v2728 = vpack.c.bf16 %v1562, %v1561
    %v2729 = vpack.c.bf16 %v1564, %v1563
    %v2730 = vpack.c.bf16 %v1566, %v1565
    %v2731 = vpack.c.bf16 %v1568, %v1567
    %v2732 = vpack.c.bf16 %v1570, %v1569
    %v2733 = vpack.c.bf16 %v1572, %v1571
    %v2734 = vpack.c.bf16 %v1574, %v1573
    %v2735 = vpack.c.bf16 %v1576, %v1575
    %v2736 = vpack.c.bf16 %v1578, %v1577
    %v2737 = vpack.c.bf16 %v1580, %v1579
    %v2738 = vpack.c.bf16 %v1582, %v1581
    %v2739 = vpack.c.bf16 %v1584, %v1583
    %v2740 = vpack.c.bf16 %v1586, %v1585
    %v2741 = vpack.c.bf16 %v1588, %v1587
    %v2742 = vpack.c.bf16 %v1590, %v1589
    %v2743 = vld [vmem:[%s4] sm:$0xff]
    %v2744 = vld [vmem:[%s4 + $0x8] sm:$0xff]
    %v2745 = vld [vmem:[%s4 + $0x10] sm:$0xff]
    %v2746 = vld [vmem:[%s4 + $0x18] sm:$0xff]
    %v2747 = vld [vmem:[%s4 + $0x20] sm:$0xff]
    %v2748 = vld [vmem:[%s4 + $0x28] sm:$0xff]
    %v2749 = vld [vmem:[%s4 + $0x30] sm:$0xff]
    %v2750 = vld [vmem:[%s4 + $0x38] sm:$0xff]
    %v2751 = vld [vmem:[%s4 + $0x40] sm:$0xff]
    %v2752 = vld [vmem:[%s4 + $0x48] sm:$0xff]
    %v2753 = vld [vmem:[%s4 + $0x50] sm:$0xff]
    %v2754 = vld [vmem:[%s4 + $0x58] sm:$0xff]
    %v2755 = vld [vmem:[%s4 + $0x60] sm:$0xff]
    %v2756 = vld [vmem:[%s4 + $0x68] sm:$0xff]
    %v2757 = vld [vmem:[%s4 + $0x70] sm:$0xff]
    %v2758 = vld [vmem:[%s4 + $0x78] sm:$0xff]
    %v2759 = vld [vmem:[%s4 + $0x80] sm:$0xff]
    %v2760 = vld [vmem:[%s4 + $0x88] sm:$0xff]
    %v2761 = vld [vmem:[%s4 + $0x90] sm:$0xff]
    %v2762 = vld [vmem:[%s4 + $0x98] sm:$0xff]
    %v2763 = vld [vmem:[%s4 + $0xa0] sm:$0xff]
    %v2764 = vld [vmem:[%s4 + $0xa8] sm:$0xff]
    %v2765 = vld [vmem:[%s4 + $0xb0] sm:$0xff]
    %v2766 = vld [vmem:[%s4 + $0xb8] sm:$0xff]
    %v2767 = vld [vmem:[%s4 + $0xc0] sm:$0xff]
    %v2768 = vld [vmem:[%s4 + $0xc8] sm:$0xff]
    %v2769 = vld [vmem:[%s4 + $0xd0] sm:$0xff]
    %v2770 = vld [vmem:[%s4 + $0xd8] sm:$0xff]
    %v2771 = vld [vmem:[%s4 + $0xe0] sm:$0xff]
    %v2772 = vld [vmem:[%s4 + $0xe8] sm:$0xff]
    %v2773 = vld [vmem:[%s4 + $0xf0] sm:$0xff]
    %v2774 = vld [vmem:[%s4 + $0xf8] sm:$0xff]
    %v2775 = vld [vmem:[%s4 + $0x100] sm:$0xff]
    %v2776 = vld [vmem:[%s4 + $0x108] sm:$0xff]
    %v2777 = vld [vmem:[%s4 + $0x110] sm:$0xff]
    %v2778 = vld [vmem:[%s4 + $0x118] sm:$0xff]
    %v2779 = vld [vmem:[%s4 + $0x120] sm:$0xff]
    %v2780 = vld [vmem:[%s4 + $0x128] sm:$0xff]
    %v2781 = vld [vmem:[%s4 + $0x130] sm:$0xff]
    %v2782 = vld [vmem:[%s4 + $0x138] sm:$0xff]
    %v2783 = vld [vmem:[%s4 + $0x140] sm:$0xff]
    %v2784 = vld [vmem:[%s4 + $0x148] sm:$0xff]
    %v2785 = vld [vmem:[%s4 + $0x150] sm:$0xff]
    %v2786 = vld [vmem:[%s4 + $0x158] sm:$0xff]
    %v2787 = vld [vmem:[%s4 + $0x160] sm:$0xff]
    %v2788 = vld [vmem:[%s4 + $0x168] sm:$0xff]
    %v2789 = vld [vmem:[%s4 + $0x170] sm:$0xff]
    %v2790 = vld [vmem:[%s4 + $0x178] sm:$0xff]
    %v2791 = vld [vmem:[%s4 + $0x180] sm:$0xff]
    %v2792 = vld [vmem:[%s4 + $0x188] sm:$0xff]
    %v2793 = vld [vmem:[%s4 + $0x190] sm:$0xff]
    %v2794 = vld [vmem:[%s4 + $0x198] sm:$0xff]
    %v2795 = vld [vmem:[%s4 + $0x1a0] sm:$0xff]
    %v2796 = vld [vmem:[%s4 + $0x1a8] sm:$0xff]
    %v2797 = vld [vmem:[%s4 + $0x1b0] sm:$0xff]
    %v2798 = vld [vmem:[%s4 + $0x1b8] sm:$0xff]
    %v2799 = vld [vmem:[%s4 + $0x1c0] sm:$0xff]
    %v2800 = vld [vmem:[%s4 + $0x1c8] sm:$0xff]
    %v2801 = vld [vmem:[%s4 + $0x1d0] sm:$0xff]
    %v2802 = vld [vmem:[%s4 + $0x1d8] sm:$0xff]
    %v2803 = vld [vmem:[%s4 + $0x1e0] sm:$0xff]
    %v2804 = vld [vmem:[%s4 + $0x1e8] sm:$0xff]
    %v2805 = vld [vmem:[%s4 + $0x1f0] sm:$0xff]
    %v2806 = vld [vmem:[%s4 + $0x1f8] sm:$0xff]
    %v2807 = vld [vmem:[%s5] sm:$0x3]
    %v2809 = vperm.slane %v2807, 0
    %v2810 = vperm.slane %v2807, 1
    %v2941 = vunpack.c.l.b16 %v2615
    %v2942 = vunpack.c.h.b16 %v2615
    %v2943 = vunpack.c.l.b16 %v2616
    %v2944 = vunpack.c.h.b16 %v2616
    %v2945 = vunpack.c.l.b16 %v2617
    %v2946 = vunpack.c.h.b16 %v2617
    %v2947 = vunpack.c.l.b16 %v2618
    %v2948 = vunpack.c.h.b16 %v2618
    %v2949 = vunpack.c.l.b16 %v2619
    %v2950 = vunpack.c.h.b16 %v2619
    %v2951 = vunpack.c.l.b16 %v2620
    %v2952 = vunpack.c.h.b16 %v2620
    %v2953 = vunpack.c.l.b16 %v2621
    %v2954 = vunpack.c.h.b16 %v2621
    %v2955 = vunpack.c.l.b16 %v2622
    %v2956 = vunpack.c.h.b16 %v2622
    %v2957 = vunpack.c.l.b16 %v2623
    %v2958 = vunpack.c.h.b16 %v2623
    %v2959 = vunpack.c.l.b16 %v2624
    %v2960 = vunpack.c.h.b16 %v2624
    %v2961 = vunpack.c.l.b16 %v2625
    %v2962 = vunpack.c.h.b16 %v2625
    %v2963 = vunpack.c.l.b16 %v2626
    %v2964 = vunpack.c.h.b16 %v2626
    %v2965 = vunpack.c.l.b16 %v2627
    %v2966 = vunpack.c.h.b16 %v2627
    %v2967 = vunpack.c.l.b16 %v2628
    %v2968 = vunpack.c.h.b16 %v2628
    %v2969 = vunpack.c.l.b16 %v2629
    %v2970 = vunpack.c.h.b16 %v2629
    %v2971 = vunpack.c.l.b16 %v2630
    %v2972 = vunpack.c.h.b16 %v2630
    %v2973 = vunpack.c.l.b16 %v2631
    %v2974 = vunpack.c.h.b16 %v2631
    %v2975 = vunpack.c.l.b16 %v2632
    %v2976 = vunpack.c.h.b16 %v2632
    %v2977 = vunpack.c.l.b16 %v2633
    %v2978 = vunpack.c.h.b16 %v2633
    %v2979 = vunpack.c.l.b16 %v2634
    %v2980 = vunpack.c.h.b16 %v2634
    %v2981 = vunpack.c.l.b16 %v2635
    %v2982 = vunpack.c.h.b16 %v2635
    %v2983 = vunpack.c.l.b16 %v2636
    %v2984 = vunpack.c.h.b16 %v2636
    %v2985 = vunpack.c.l.b16 %v2637
    %v2986 = vunpack.c.h.b16 %v2637
    %v2987 = vunpack.c.l.b16 %v2638
    %v2988 = vunpack.c.h.b16 %v2638
    %v2989 = vunpack.c.l.b16 %v2639
    %v2990 = vunpack.c.h.b16 %v2639
    %v2991 = vunpack.c.l.b16 %v2640
    %v2992 = vunpack.c.h.b16 %v2640
    %v2993 = vunpack.c.l.b16 %v2641
    %v2994 = vunpack.c.h.b16 %v2641
    %v2995 = vunpack.c.l.b16 %v2642
    %v2996 = vunpack.c.h.b16 %v2642
    %v2997 = vunpack.c.l.b16 %v2643
    %v2998 = vunpack.c.h.b16 %v2643
    %v2999 = vunpack.c.l.b16 %v2644
    %v3000 = vunpack.c.h.b16 %v2644
    %v3001 = vunpack.c.l.b16 %v2645
    %v3002 = vunpack.c.h.b16 %v2645
    %v3003 = vunpack.c.l.b16 %v2646
    %v3004 = vunpack.c.h.b16 %v2646
    %v3005 = vunpack.c.l.b16 %v2647
    %v3006 = vunpack.c.h.b16 %v2647
    %v3007 = vunpack.c.l.b16 %v2648
    %v3008 = vunpack.c.h.b16 %v2648
    %v3009 = vunpack.c.l.b16 %v2649
    %v3010 = vunpack.c.h.b16 %v2649
    %v3011 = vunpack.c.l.b16 %v2650
    %v3012 = vunpack.c.h.b16 %v2650
    %v3013 = vunpack.c.l.b16 %v2651
    %v3014 = vunpack.c.h.b16 %v2651
    %v3015 = vunpack.c.l.b16 %v2652
    %v3016 = vunpack.c.h.b16 %v2652
    %v3017 = vunpack.c.l.b16 %v2653
    %v3018 = vunpack.c.h.b16 %v2653
    %v3019 = vunpack.c.l.b16 %v2654
    %v3020 = vunpack.c.h.b16 %v2654
    %v3021 = vunpack.c.l.b16 %v2655
    %v3022 = vunpack.c.h.b16 %v2655
    %v3023 = vunpack.c.l.b16 %v2656
    %v3024 = vunpack.c.h.b16 %v2656
    %v3025 = vunpack.c.l.b16 %v2657
    %v3026 = vunpack.c.h.b16 %v2657
    %v3027 = vunpack.c.l.b16 %v2658
    %v3028 = vunpack.c.h.b16 %v2658
    %v3029 = vunpack.c.l.b16 %v2659
    %v3030 = vunpack.c.h.b16 %v2659
    %v3031 = vunpack.c.l.b16 %v2660
    %v3032 = vunpack.c.h.b16 %v2660
    %v3033 = vunpack.c.l.b16 %v2661
    %v3034 = vunpack.c.h.b16 %v2661
    %v3035 = vunpack.c.l.b16 %v2662
    %v3036 = vunpack.c.h.b16 %v2662
    %v3037 = vunpack.c.l.b16 %v2663
    %v3038 = vunpack.c.h.b16 %v2663
    %v3039 = vunpack.c.l.b16 %v2664
    %v3040 = vunpack.c.h.b16 %v2664
    %v3041 = vunpack.c.l.b16 %v2665
    %v3042 = vunpack.c.h.b16 %v2665
    %v3043 = vunpack.c.l.b16 %v2666
    %v3044 = vunpack.c.h.b16 %v2666
    %v3045 = vunpack.c.l.b16 %v2667
    %v3046 = vunpack.c.h.b16 %v2667
    %v3047 = vunpack.c.l.b16 %v2668
    %v3048 = vunpack.c.h.b16 %v2668
    %v3049 = vunpack.c.l.b16 %v2669
    %v3050 = vunpack.c.h.b16 %v2669
    %v3051 = vunpack.c.l.b16 %v2670
    %v3052 = vunpack.c.h.b16 %v2670
    %v3053 = vunpack.c.l.b16 %v2671
    %v3054 = vunpack.c.h.b16 %v2671
    %v3055 = vunpack.c.l.b16 %v2672
    %v3056 = vunpack.c.h.b16 %v2672
    %v3057 = vunpack.c.l.b16 %v2673
    %v3058 = vunpack.c.h.b16 %v2673
    %v3059 = vunpack.c.l.b16 %v2674
    %v3060 = vunpack.c.h.b16 %v2674
    %v3061 = vunpack.c.l.b16 %v2675
    %v3062 = vunpack.c.h.b16 %v2675
    %v3063 = vunpack.c.l.b16 %v2676
    %v3064 = vunpack.c.h.b16 %v2676
    %v3065 = vunpack.c.l.b16 %v2677
    %v3066 = vunpack.c.h.b16 %v2677
    %v3067 = vunpack.c.l.b16 %v2678
    %v3068 = vunpack.c.h.b16 %v2678
    %v3069 = vunpack.c.l.b16 %v2679
    %v3070 = vunpack.c.h.b16 %v2679
    %v3071 = vunpack.c.l.b16 %v2680
    %v3072 = vunpack.c.h.b16 %v2680
    %v3073 = vunpack.c.l.b16 %v2681
    %v3074 = vunpack.c.h.b16 %v2681
    %v3075 = vunpack.c.l.b16 %v2682
    %v3076 = vunpack.c.h.b16 %v2682
    %v3077 = vunpack.c.l.b16 %v2683
    %v3078 = vunpack.c.h.b16 %v2683
    %v3079 = vunpack.c.l.b16 %v2684
    %v3080 = vunpack.c.h.b16 %v2684
    %v3081 = vunpack.c.l.b16 %v2685
    %v3082 = vunpack.c.h.b16 %v2685
    %v3083 = vunpack.c.l.b16 %v2686
    %v3084 = vunpack.c.h.b16 %v2686
    %v3085 = vunpack.c.l.b16 %v2687
    %v3086 = vunpack.c.h.b16 %v2687
    %v3087 = vunpack.c.l.b16 %v2688
    %v3088 = vunpack.c.h.b16 %v2688
    %v3089 = vunpack.c.l.b16 %v2689
    %v3090 = vunpack.c.h.b16 %v2689
    %v3091 = vunpack.c.l.b16 %v2690
    %v3092 = vunpack.c.h.b16 %v2690
    %v3093 = vunpack.c.l.b16 %v2691
    %v3094 = vunpack.c.h.b16 %v2691
    %v3095 = vunpack.c.l.b16 %v2692
    %v3096 = vunpack.c.h.b16 %v2692
    %v3097 = vunpack.c.l.b16 %v2693
    %v3098 = vunpack.c.h.b16 %v2693
    %v3099 = vunpack.c.l.b16 %v2694
    %v3100 = vunpack.c.h.b16 %v2694
    %v3101 = vunpack.c.l.b16 %v2695
    %v3102 = vunpack.c.h.b16 %v2695
    %v3103 = vunpack.c.l.b16 %v2696
    %v3104 = vunpack.c.h.b16 %v2696
    %v3105 = vunpack.c.l.b16 %v2697
    %v3106 = vunpack.c.h.b16 %v2697
    %v3107 = vunpack.c.l.b16 %v2698
    %v3108 = vunpack.c.h.b16 %v2698
    %v3109 = vunpack.c.l.b16 %v2699
    %v3110 = vunpack.c.h.b16 %v2699
    %v3111 = vunpack.c.l.b16 %v2700
    %v3112 = vunpack.c.h.b16 %v2700
    %v3113 = vunpack.c.l.b16 %v2701
    %v3114 = vunpack.c.h.b16 %v2701
    %v3115 = vunpack.c.l.b16 %v2702
    %v3116 = vunpack.c.h.b16 %v2702
    %v3117 = vunpack.c.l.b16 %v2703
    %v3118 = vunpack.c.h.b16 %v2703
    %v3119 = vunpack.c.l.b16 %v2704
    %v3120 = vunpack.c.h.b16 %v2704
    %v3121 = vunpack.c.l.b16 %v2705
    %v3122 = vunpack.c.h.b16 %v2705
    %v3123 = vunpack.c.l.b16 %v2706
    %v3124 = vunpack.c.h.b16 %v2706
    %v3125 = vunpack.c.l.b16 %v2707
    %v3126 = vunpack.c.h.b16 %v2707
    %v3127 = vunpack.c.l.b16 %v2708
    %v3128 = vunpack.c.h.b16 %v2708
    %v3129 = vunpack.c.l.b16 %v2709
    %v3130 = vunpack.c.h.b16 %v2709
    %v3131 = vunpack.c.l.b16 %v2710
    %v3132 = vunpack.c.h.b16 %v2710
    %v3133 = vunpack.c.l.b16 %v2711
    %v3134 = vunpack.c.h.b16 %v2711
    %v3135 = vunpack.c.l.b16 %v2712
    %v3136 = vunpack.c.h.b16 %v2712
    %v3137 = vunpack.c.l.b16 %v2713
    %v3138 = vunpack.c.h.b16 %v2713
    %v3139 = vunpack.c.l.b16 %v2714
    %v3140 = vunpack.c.h.b16 %v2714
    %v3141 = vunpack.c.l.b16 %v2715
    %v3142 = vunpack.c.h.b16 %v2715
    %v3143 = vunpack.c.l.b16 %v2716
    %v3144 = vunpack.c.h.b16 %v2716
    %v3145 = vunpack.c.l.b16 %v2717
    %v3146 = vunpack.c.h.b16 %v2717
    %v3147 = vunpack.c.l.b16 %v2718
    %v3148 = vunpack.c.h.b16 %v2718
    %v3149 = vunpack.c.l.b16 %v2719
    %v3150 = vunpack.c.h.b16 %v2719
    %v3151 = vunpack.c.l.b16 %v2720
    %v3152 = vunpack.c.h.b16 %v2720
    %v3153 = vunpack.c.l.b16 %v2721
    %v3154 = vunpack.c.h.b16 %v2721
    %v3155 = vunpack.c.l.b16 %v2722
    %v3156 = vunpack.c.h.b16 %v2722
    %v3157 = vunpack.c.l.b16 %v2723
    %v3158 = vunpack.c.h.b16 %v2723
    %v3159 = vunpack.c.l.b16 %v2724
    %v3160 = vunpack.c.h.b16 %v2724
    %v3161 = vunpack.c.l.b16 %v2725
    %v3162 = vunpack.c.h.b16 %v2725
    %v3163 = vunpack.c.l.b16 %v2726
    %v3164 = vunpack.c.h.b16 %v2726
    %v3165 = vunpack.c.l.b16 %v2727
    %v3166 = vunpack.c.h.b16 %v2727
    %v3167 = vunpack.c.l.b16 %v2728
    %v3168 = vunpack.c.h.b16 %v2728
    %v3169 = vunpack.c.l.b16 %v2729
    %v3170 = vunpack.c.h.b16 %v2729
    %v3171 = vunpack.c.l.b16 %v2730
    %v3172 = vunpack.c.h.b16 %v2730
    %v3173 = vunpack.c.l.b16 %v2731
    %v3174 = vunpack.c.h.b16 %v2731
    %v3175 = vunpack.c.l.b16 %v2732
    %v3176 = vunpack.c.h.b16 %v2732
    %v3177 = vunpack.c.l.b16 %v2733
    %v3178 = vunpack.c.h.b16 %v2733
    %v3179 = vunpack.c.l.b16 %v2734
    %v3180 = vunpack.c.h.b16 %v2734
    %v3181 = vunpack.c.l.b16 %v2735
    %v3182 = vunpack.c.h.b16 %v2735
    %v3183 = vunpack.c.l.b16 %v2736
    %v3184 = vunpack.c.h.b16 %v2736
    %v3185 = vunpack.c.l.b16 %v2737
    %v3186 = vunpack.c.h.b16 %v2737
    %v3187 = vunpack.c.l.b16 %v2738
    %v3188 = vunpack.c.h.b16 %v2738
    %v3189 = vunpack.c.l.b16 %v2739
    %v3190 = vunpack.c.h.b16 %v2739
    %v3191 = vunpack.c.l.b16 %v2740
    %v3192 = vunpack.c.h.b16 %v2740
    %v3193 = vunpack.c.l.b16 %v2741
    %v3194 = vunpack.c.h.b16 %v2741
    %v3195 = vunpack.c.l.b16 %v2742
    %v3196 = vunpack.c.h.b16 %v2742
    %v3197 = vlaneseq
    %v3198 = vand.u32 %v3197, 127
    %v3199 = vperm.slane %v2941, %v3198
    %v3200 = vadd.s32 %v3198, 4294967288
    %v3201 = vperm.slane %v2942, %v3200
    %vm3202 = vcmask 130112
    %v3203 = vsel %vm3202, %v3201, %v3199
    %v3204 = vadd.s32 %v3198, 4294967280
    %v3205 = vperm.slane %v2943, %v3204
    %vm3206 = vcmask 195712
    %v3207 = vsel %vm3206, %v3205, %v3203
    %v3208 = vadd.s32 %v3198, 4294967272
    %v3209 = vperm.slane %v2944, %v3208
    %vm3210 = vcmask 261312
    %v3211 = vsel %vm3210, %v3209, %v3207
    %v3212 = vadd.s32 %v3198, 4294967264
    %v3213 = vperm.slane %v2945, %v3212
    %vm3214 = vcmask 326912
    %v3215 = vsel %vm3214, %v3213, %v3211
    %v3216 = vadd.s32 %v3198, 4294967256
    %v3217 = vperm.slane %v2946, %v3216
    %vm3218 = vcmask 392512
    %v3219 = vsel %vm3218, %v3217, %v3215
    %v3220 = vadd.s32 %v3198, 4294967248
    %v3221 = vperm.slane %v2947, %v3220
    %vm3222 = vcmask 458112
    %v3223 = vsel %vm3222, %v3221, %v3219
    %v3224 = vadd.s32 %v3198, 4294967240
    %v3225 = vperm.slane %v2948, %v3224
    %vm3226 = vcmask 523712
    %v3227 = vsel %vm3226, %v3225, %v3223
    %v3228 = vadd.s32 %v3198, 4294967232
    %v3229 = vperm.slane %v2949, %v3228
    %vm3230 = vcmask 589312
    %v3231 = vsel %vm3230, %v3229, %v3227
    %v3232 = vadd.s32 %v3198, 4294967224
    %v3233 = vperm.slane %v2950, %v3232
    %vm3234 = vcmask 654912
    %v3235 = vsel %vm3234, %v3233, %v3231
    %v3236 = vadd.s32 %v3198, 4294967216
    %v3237 = vperm.slane %v2951, %v3236
    %vm3238 = vcmask 720512
    %v3239 = vsel %vm3238, %v3237, %v3235
    %v3240 = vadd.s32 %v3198, 4294967208
    %v3241 = vperm.slane %v2952, %v3240
    %vm3242 = vcmask 786112
    %v3243 = vsel %vm3242, %v3241, %v3239
    %v3244 = vadd.s32 %v3198, 4294967200
    %v3245 = vperm.slane %v2953, %v3244
    %vm3246 = vcmask 851712
    %v3247 = vsel %vm3246, %v3245, %v3243
    %v3248 = vadd.s32 %v3198, 4294967192
    %v3249 = vperm.slane %v2954, %v3248
    %vm3250 = vcmask 917312
    %v3251 = vsel %vm3250, %v3249, %v3247
    %v3252 = vadd.s32 %v3198, 4294967184
    %v3253 = vperm.slane %v2955, %v3252
    %vm3254 = vcmask 982912
    %v3255 = vsel %vm3254, %v3253, %v3251
    %v3256 = vadd.s32 %v3198, 4294967176
    %v3257 = vperm.slane %v2956, %v3256
    %vm3258 = vcmask 1048512
    %v3259 = vsel %vm3258, %v3257, %v3255
    %v3260 = vperm.slane %v2957, %v3198
    %v3261 = vperm.slane %v2958, %v3200
    %v3262 = vsel %vm3202, %v3261, %v3260
    %v3263 = vperm.slane %v2959, %v3204
    %v3264 = vsel %vm3206, %v3263, %v3262
    %v3265 = vperm.slane %v2960, %v3208
    %v3266 = vsel %vm3210, %v3265, %v3264
    %v3267 = vperm.slane %v2961, %v3212
    %v3268 = vsel %vm3214, %v3267, %v3266
    %v3269 = vperm.slane %v2962, %v3216
    %v3270 = vsel %vm3218, %v3269, %v3268
    %v3271 = vperm.slane %v2963, %v3220
    %v3272 = vsel %vm3222, %v3271, %v3270
    %v3273 = vperm.slane %v2964, %v3224
    %v3274 = vsel %vm3226, %v3273, %v3272
    %v3275 = vperm.slane %v2965, %v3228
    %v3276 = vsel %vm3230, %v3275, %v3274
    %v3277 = vperm.slane %v2966, %v3232
    %v3278 = vsel %vm3234, %v3277, %v3276
    %v3279 = vperm.slane %v2967, %v3236
    %v3280 = vsel %vm3238, %v3279, %v3278
    %v3281 = vperm.slane %v2968, %v3240
    %v3282 = vsel %vm3242, %v3281, %v3280
    %v3283 = vperm.slane %v2969, %v3244
    %v3284 = vsel %vm3246, %v3283, %v3282
    %v3285 = vperm.slane %v2970, %v3248
    %v3286 = vsel %vm3250, %v3285, %v3284
    %v3287 = vperm.slane %v2971, %v3252
    %v3288 = vsel %vm3254, %v3287, %v3286
    %v3289 = vperm.slane %v2972, %v3256
    %v3290 = vsel %vm3258, %v3289, %v3288
    %v3291 = vperm.slane %v2973, %v3198
    %v3292 = vperm.slane %v2974, %v3200
    %v3293 = vsel %vm3202, %v3292, %v3291
    %v3294 = vperm.slane %v2975, %v3204
    %v3295 = vsel %vm3206, %v3294, %v3293
    %v3296 = vperm.slane %v2976, %v3208
    %v3297 = vsel %vm3210, %v3296, %v3295
    %v3298 = vperm.slane %v2977, %v3212
    %v3299 = vsel %vm3214, %v3298, %v3297
    %v3300 = vperm.slane %v2978, %v3216
    %v3301 = vsel %vm3218, %v3300, %v3299
    %v3302 = vperm.slane %v2979, %v3220
    %v3303 = vsel %vm3222, %v3302, %v3301
    %v3304 = vperm.slane %v2980, %v3224
    %v3305 = vsel %vm3226, %v3304, %v3303
    %v3306 = vperm.slane %v2981, %v3228
    %v3307 = vsel %vm3230, %v3306, %v3305
    %v3308 = vperm.slane %v2982, %v3232
    %v3309 = vsel %vm3234, %v3308, %v3307
    %v3310 = vperm.slane %v2983, %v3236
    %v3311 = vsel %vm3238, %v3310, %v3309
    %v3312 = vperm.slane %v2984, %v3240
    %v3313 = vsel %vm3242, %v3312, %v3311
    %v3314 = vperm.slane %v2985, %v3244
    %v3315 = vsel %vm3246, %v3314, %v3313
    %v3316 = vperm.slane %v2986, %v3248
    %v3317 = vsel %vm3250, %v3316, %v3315
    %v3318 = vperm.slane %v2987, %v3252
    %v3319 = vsel %vm3254, %v3318, %v3317
    %v3320 = vperm.slane %v2988, %v3256
    %v3321 = vsel %vm3258, %v3320, %v3319
    %v3322 = vperm.slane %v2989, %v3198
    %v3323 = vperm.slane %v2990, %v3200
    %v3324 = vsel %vm3202, %v3323, %v3322
    %v3325 = vperm.slane %v2991, %v3204
    %v3326 = vsel %vm3206, %v3325, %v3324
    %v3327 = vperm.slane %v2992, %v3208
    %v3328 = vsel %vm3210, %v3327, %v3326
    %v3329 = vperm.slane %v2993, %v3212
    %v3330 = vsel %vm3214, %v3329, %v3328
    %v3331 = vperm.slane %v2994, %v3216
    %v3332 = vsel %vm3218, %v3331, %v3330
    %v3333 = vperm.slane %v2995, %v3220
    %v3334 = vsel %vm3222, %v3333, %v3332
    %v3335 = vperm.slane %v2996, %v3224
    %v3336 = vsel %vm3226, %v3335, %v3334
    %v3337 = vperm.slane %v2997, %v3228
    %v3338 = vsel %vm3230, %v3337, %v3336
    %v3339 = vperm.slane %v2998, %v3232
    %v3340 = vsel %vm3234, %v3339, %v3338
    %v3341 = vperm.slane %v2999, %v3236
    %v3342 = vsel %vm3238, %v3341, %v3340
    %v3343 = vperm.slane %v3000, %v3240
    %v3344 = vsel %vm3242, %v3343, %v3342
    %v3345 = vperm.slane %v3001, %v3244
    %v3346 = vsel %vm3246, %v3345, %v3344
    %v3347 = vperm.slane %v3002, %v3248
    %v3348 = vsel %vm3250, %v3347, %v3346
    %v3349 = vperm.slane %v3003, %v3252
    %v3350 = vsel %vm3254, %v3349, %v3348
    %v3351 = vperm.slane %v3004, %v3256
    %v3352 = vsel %vm3258, %v3351, %v3350
    %v3353 = vperm.slane %v3005, %v3198
    %v3354 = vperm.slane %v3006, %v3200
    %v3355 = vsel %vm3202, %v3354, %v3353
    %v3356 = vperm.slane %v3007, %v3204
    %v3357 = vsel %vm3206, %v3356, %v3355
    %v3358 = vperm.slane %v3008, %v3208
    %v3359 = vsel %vm3210, %v3358, %v3357
    %v3360 = vperm.slane %v3009, %v3212
    %v3361 = vsel %vm3214, %v3360, %v3359
    %v3362 = vperm.slane %v3010, %v3216
    %v3363 = vsel %vm3218, %v3362, %v3361
    %v3364 = vperm.slane %v3011, %v3220
    %v3365 = vsel %vm3222, %v3364, %v3363
    %v3366 = vperm.slane %v3012, %v3224
    %v3367 = vsel %vm3226, %v3366, %v3365
    %v3368 = vperm.slane %v3013, %v3228
    %v3369 = vsel %vm3230, %v3368, %v3367
    %v3370 = vperm.slane %v3014, %v3232
    %v3371 = vsel %vm3234, %v3370, %v3369
    %v3372 = vperm.slane %v3015, %v3236
    %v3373 = vsel %vm3238, %v3372, %v3371
    %v3374 = vperm.slane %v3016, %v3240
    %v3375 = vsel %vm3242, %v3374, %v3373
    %v3376 = vperm.slane %v3017, %v3244
    %v3377 = vsel %vm3246, %v3376, %v3375
    %v3378 = vperm.slane %v3018, %v3248
    %v3379 = vsel %vm3250, %v3378, %v3377
    %v3380 = vperm.slane %v3019, %v3252
    %v3381 = vsel %vm3254, %v3380, %v3379
    %v3382 = vperm.slane %v3020, %v3256
    %v3383 = vsel %vm3258, %v3382, %v3381
    %v3384 = vperm.slane %v3021, %v3198
    %v3385 = vperm.slane %v3022, %v3200
    %v3386 = vsel %vm3202, %v3385, %v3384
    %v3387 = vperm.slane %v3023, %v3204
    %v3388 = vsel %vm3206, %v3387, %v3386
    %v3389 = vperm.slane %v3024, %v3208
    %v3390 = vsel %vm3210, %v3389, %v3388
    %v3391 = vperm.slane %v3025, %v3212
    %v3392 = vsel %vm3214, %v3391, %v3390
    %v3393 = vperm.slane %v3026, %v3216
    %v3394 = vsel %vm3218, %v3393, %v3392
    %v3395 = vperm.slane %v3027, %v3220
    %v3396 = vsel %vm3222, %v3395, %v3394
    %v3397 = vperm.slane %v3028, %v3224
    %v3398 = vsel %vm3226, %v3397, %v3396
    %v3399 = vperm.slane %v3029, %v3228
    %v3400 = vsel %vm3230, %v3399, %v3398
    %v3401 = vperm.slane %v3030, %v3232
    %v3402 = vsel %vm3234, %v3401, %v3400
    %v3403 = vperm.slane %v3031, %v3236
    %v3404 = vsel %vm3238, %v3403, %v3402
    %v3405 = vperm.slane %v3032, %v3240
    %v3406 = vsel %vm3242, %v3405, %v3404
    %v3407 = vperm.slane %v3033, %v3244
    %v3408 = vsel %vm3246, %v3407, %v3406
    %v3409 = vperm.slane %v3034, %v3248
    %v3410 = vsel %vm3250, %v3409, %v3408
    %v3411 = vperm.slane %v3035, %v3252
    %v3412 = vsel %vm3254, %v3411, %v3410
    %v3413 = vperm.slane %v3036, %v3256
    %v3414 = vsel %vm3258, %v3413, %v3412
    %v3415 = vperm.slane %v3037, %v3198
    %v3416 = vperm.slane %v3038, %v3200
    %v3417 = vsel %vm3202, %v3416, %v3415
    %v3418 = vperm.slane %v3039, %v3204
    %v3419 = vsel %vm3206, %v3418, %v3417
    %v3420 = vperm.slane %v3040, %v3208
    %v3421 = vsel %vm3210, %v3420, %v3419
    %v3422 = vperm.slane %v3041, %v3212
    %v3423 = vsel %vm3214, %v3422, %v3421
    %v3424 = vperm.slane %v3042, %v3216
    %v3425 = vsel %vm3218, %v3424, %v3423
    %v3426 = vperm.slane %v3043, %v3220
    %v3427 = vsel %vm3222, %v3426, %v3425
    %v3428 = vperm.slane %v3044, %v3224
    %v3429 = vsel %vm3226, %v3428, %v3427
    %v3430 = vperm.slane %v3045, %v3228
    %v3431 = vsel %vm3230, %v3430, %v3429
    %v3432 = vperm.slane %v3046, %v3232
    %v3433 = vsel %vm3234, %v3432, %v3431
    %v3434 = vperm.slane %v3047, %v3236
    %v3435 = vsel %vm3238, %v3434, %v3433
    %v3436 = vperm.slane %v3048, %v3240
    %v3437 = vsel %vm3242, %v3436, %v3435
    %v3438 = vperm.slane %v3049, %v3244
    %v3439 = vsel %vm3246, %v3438, %v3437
    %v3440 = vperm.slane %v3050, %v3248
    %v3441 = vsel %vm3250, %v3440, %v3439
    %v3442 = vperm.slane %v3051, %v3252
    %v3443 = vsel %vm3254, %v3442, %v3441
    %v3444 = vperm.slane %v3052, %v3256
    %v3445 = vsel %vm3258, %v3444, %v3443
    %v3446 = vperm.slane %v3053, %v3198
    %v3447 = vperm.slane %v3054, %v3200
    %v3448 = vsel %vm3202, %v3447, %v3446
    %v3449 = vperm.slane %v3055, %v3204
    %v3450 = vsel %vm3206, %v3449, %v3448
    %v3451 = vperm.slane %v3056, %v3208
    %v3452 = vsel %vm3210, %v3451, %v3450
    %v3453 = vperm.slane %v3057, %v3212
    %v3454 = vsel %vm3214, %v3453, %v3452
    %v3455 = vperm.slane %v3058, %v3216
    %v3456 = vsel %vm3218, %v3455, %v3454
    %v3457 = vperm.slane %v3059, %v3220
    %v3458 = vsel %vm3222, %v3457, %v3456
    %v3459 = vperm.slane %v3060, %v3224
    %v3460 = vsel %vm3226, %v3459, %v3458
    %v3461 = vperm.slane %v3061, %v3228
    %v3462 = vsel %vm3230, %v3461, %v3460
    %v3463 = vperm.slane %v3062, %v3232
    %v3464 = vsel %vm3234, %v3463, %v3462
    %v3465 = vperm.slane %v3063, %v3236
    %v3466 = vsel %vm3238, %v3465, %v3464
    %v3467 = vperm.slane %v3064, %v3240
    %v3468 = vsel %vm3242, %v3467, %v3466
    %v3469 = vperm.slane %v3065, %v3244
    %v3470 = vsel %vm3246, %v3469, %v3468
    %v3471 = vperm.slane %v3066, %v3248
    %v3472 = vsel %vm3250, %v3471, %v3470
    %v3473 = vperm.slane %v3067, %v3252
    %v3474 = vsel %vm3254, %v3473, %v3472
    %v3475 = vperm.slane %v3068, %v3256
    %v3476 = vsel %vm3258, %v3475, %v3474
    %v3477 = vperm.slane %v3069, %v3198
    %v3478 = vperm.slane %v3070, %v3200
    %v3479 = vsel %vm3202, %v3478, %v3477
    %v3480 = vperm.slane %v3071, %v3204
    %v3481 = vsel %vm3206, %v3480, %v3479
    %v3482 = vperm.slane %v3072, %v3208
    %v3483 = vsel %vm3210, %v3482, %v3481
    %v3484 = vperm.slane %v3073, %v3212
    %v3485 = vsel %vm3214, %v3484, %v3483
    %v3486 = vperm.slane %v3074, %v3216
    %v3487 = vsel %vm3218, %v3486, %v3485
    %v3488 = vperm.slane %v3075, %v3220
    %v3489 = vsel %vm3222, %v3488, %v3487
    %v3490 = vperm.slane %v3076, %v3224
    %v3491 = vsel %vm3226, %v3490, %v3489
    %v3492 = vperm.slane %v3077, %v3228
    %v3493 = vsel %vm3230, %v3492, %v3491
    %v3494 = vperm.slane %v3078, %v3232
    %v3495 = vsel %vm3234, %v3494, %v3493
    %v3496 = vperm.slane %v3079, %v3236
    %v3497 = vsel %vm3238, %v3496, %v3495
    %v3498 = vperm.slane %v3080, %v3240
    %v3499 = vsel %vm3242, %v3498, %v3497
    %v3500 = vperm.slane %v3081, %v3244
    %v3501 = vsel %vm3246, %v3500, %v3499
    %v3502 = vperm.slane %v3082, %v3248
    %v3503 = vsel %vm3250, %v3502, %v3501
    %v3504 = vperm.slane %v3083, %v3252
    %v3505 = vsel %vm3254, %v3504, %v3503
    %v3506 = vperm.slane %v3084, %v3256
    %v3507 = vsel %vm3258, %v3506, %v3505
    %v3508 = vperm.slane %v3085, %v3198
    %v3509 = vperm.slane %v3086, %v3200
    %v3510 = vsel %vm3202, %v3509, %v3508
    %v3511 = vperm.slane %v3087, %v3204
    %v3512 = vsel %vm3206, %v3511, %v3510
    %v3513 = vperm.slane %v3088, %v3208
    %v3514 = vsel %vm3210, %v3513, %v3512
    %v3515 = vperm.slane %v3089, %v3212
    %v3516 = vsel %vm3214, %v3515, %v3514
    %v3517 = vperm.slane %v3090, %v3216
    %v3518 = vsel %vm3218, %v3517, %v3516
    %v3519 = vperm.slane %v3091, %v3220
    %v3520 = vsel %vm3222, %v3519, %v3518
    %v3521 = vperm.slane %v3092, %v3224
    %v3522 = vsel %vm3226, %v3521, %v3520
    %v3523 = vperm.slane %v3093, %v3228
    %v3524 = vsel %vm3230, %v3523, %v3522
    %v3525 = vperm.slane %v3094, %v3232
    %v3526 = vsel %vm3234, %v3525, %v3524
    %v3527 = vperm.slane %v3095, %v3236
    %v3528 = vsel %vm3238, %v3527, %v3526
    %v3529 = vperm.slane %v3096, %v3240
    %v3530 = vsel %vm3242, %v3529, %v3528
    %v3531 = vperm.slane %v3097, %v3244
    %v3532 = vsel %vm3246, %v3531, %v3530
    %v3533 = vperm.slane %v3098, %v3248
    %v3534 = vsel %vm3250, %v3533, %v3532
    %v3535 = vperm.slane %v3099, %v3252
    %v3536 = vsel %vm3254, %v3535, %v3534
    %v3537 = vperm.slane %v3100, %v3256
    %v3538 = vsel %vm3258, %v3537, %v3536
    %v3539 = vperm.slane %v3101, %v3198
    %v3540 = vperm.slane %v3102, %v3200
    %v3541 = vsel %vm3202, %v3540, %v3539
    %v3542 = vperm.slane %v3103, %v3204
    %v3543 = vsel %vm3206, %v3542, %v3541
    %v3544 = vperm.slane %v3104, %v3208
    %v3545 = vsel %vm3210, %v3544, %v3543
    %v3546 = vperm.slane %v3105, %v3212
    %v3547 = vsel %vm3214, %v3546, %v3545
    %v3548 = vperm.slane %v3106, %v3216
    %v3549 = vsel %vm3218, %v3548, %v3547
    %v3550 = vperm.slane %v3107, %v3220
    %v3551 = vsel %vm3222, %v3550, %v3549
    %v3552 = vperm.slane %v3108, %v3224
    %v3553 = vsel %vm3226, %v3552, %v3551
    %v3554 = vperm.slane %v3109, %v3228
    %v3555 = vsel %vm3230, %v3554, %v3553
    %v3556 = vperm.slane %v3110, %v3232
    %v3557 = vsel %vm3234, %v3556, %v3555
    %v3558 = vperm.slane %v3111, %v3236
    %v3559 = vsel %vm3238, %v3558, %v3557
    %v3560 = vperm.slane %v3112, %v3240
    %v3561 = vsel %vm3242, %v3560, %v3559
    %v3562 = vperm.slane %v3113, %v3244
    %v3563 = vsel %vm3246, %v3562, %v3561
    %v3564 = vperm.slane %v3114, %v3248
    %v3565 = vsel %vm3250, %v3564, %v3563
    %v3566 = vperm.slane %v3115, %v3252
    %v3567 = vsel %vm3254, %v3566, %v3565
    %v3568 = vperm.slane %v3116, %v3256
    %v3569 = vsel %vm3258, %v3568, %v3567
    %v3570 = vperm.slane %v3117, %v3198
    %v3571 = vperm.slane %v3118, %v3200
    %v3572 = vsel %vm3202, %v3571, %v3570
    %v3573 = vperm.slane %v3119, %v3204
    %v3574 = vsel %vm3206, %v3573, %v3572
    %v3575 = vperm.slane %v3120, %v3208
    %v3576 = vsel %vm3210, %v3575, %v3574
    %v3577 = vperm.slane %v3121, %v3212
    %v3578 = vsel %vm3214, %v3577, %v3576
    %v3579 = vperm.slane %v3122, %v3216
    %v3580 = vsel %vm3218, %v3579, %v3578
    %v3581 = vperm.slane %v3123, %v3220
    %v3582 = vsel %vm3222, %v3581, %v3580
    %v3583 = vperm.slane %v3124, %v3224
    %v3584 = vsel %vm3226, %v3583, %v3582
    %v3585 = vperm.slane %v3125, %v3228
    %v3586 = vsel %vm3230, %v3585, %v3584
    %v3587 = vperm.slane %v3126, %v3232
    %v3588 = vsel %vm3234, %v3587, %v3586
    %v3589 = vperm.slane %v3127, %v3236
    %v3590 = vsel %vm3238, %v3589, %v3588
    %v3591 = vperm.slane %v3128, %v3240
    %v3592 = vsel %vm3242, %v3591, %v3590
    %v3593 = vperm.slane %v3129, %v3244
    %v3594 = vsel %vm3246, %v3593, %v3592
    %v3595 = vperm.slane %v3130, %v3248
    %v3596 = vsel %vm3250, %v3595, %v3594
    %v3597 = vperm.slane %v3131, %v3252
    %v3598 = vsel %vm3254, %v3597, %v3596
    %v3599 = vperm.slane %v3132, %v3256
    %v3600 = vsel %vm3258, %v3599, %v3598
    %v3601 = vperm.slane %v3133, %v3198
    %v3602 = vperm.slane %v3134, %v3200
    %v3603 = vsel %vm3202, %v3602, %v3601
    %v3604 = vperm.slane %v3135, %v3204
    %v3605 = vsel %vm3206, %v3604, %v3603
    %v3606 = vperm.slane %v3136, %v3208
    %v3607 = vsel %vm3210, %v3606, %v3605
    %v3608 = vperm.slane %v3137, %v3212
    %v3609 = vsel %vm3214, %v3608, %v3607
    %v3610 = vperm.slane %v3138, %v3216
    %v3611 = vsel %vm3218, %v3610, %v3609
    %v3612 = vperm.slane %v3139, %v3220
    %v3613 = vsel %vm3222, %v3612, %v3611
    %v3614 = vperm.slane %v3140, %v3224
    %v3615 = vsel %vm3226, %v3614, %v3613
    %v3616 = vperm.slane %v3141, %v3228
    %v3617 = vsel %vm3230, %v3616, %v3615
    %v3618 = vperm.slane %v3142, %v3232
    %v3619 = vsel %vm3234, %v3618, %v3617
    %v3620 = vperm.slane %v3143, %v3236
    %v3621 = vsel %vm3238, %v3620, %v3619
    %v3622 = vperm.slane %v3144, %v3240
    %v3623 = vsel %vm3242, %v3622, %v3621
    %v3624 = vperm.slane %v3145, %v3244
    %v3625 = vsel %vm3246, %v3624, %v3623
    %v3626 = vperm.slane %v3146, %v3248
    %v3627 = vsel %vm3250, %v3626, %v3625
    %v3628 = vperm.slane %v3147, %v3252
    %v3629 = vsel %vm3254, %v3628, %v3627
    %v3630 = vperm.slane %v3148, %v3256
    %v3631 = vsel %vm3258, %v3630, %v3629
    %v3632 = vperm.slane %v3149, %v3198
    %v3633 = vperm.slane %v3150, %v3200
    %v3634 = vsel %vm3202, %v3633, %v3632
    %v3635 = vperm.slane %v3151, %v3204
    %v3636 = vsel %vm3206, %v3635, %v3634
    %v3637 = vperm.slane %v3152, %v3208
    %v3638 = vsel %vm3210, %v3637, %v3636
    %v3639 = vperm.slane %v3153, %v3212
    %v3640 = vsel %vm3214, %v3639, %v3638
    %v3641 = vperm.slane %v3154, %v3216
    %v3642 = vsel %vm3218, %v3641, %v3640
    %v3643 = vperm.slane %v3155, %v3220
    %v3644 = vsel %vm3222, %v3643, %v3642
    %v3645 = vperm.slane %v3156, %v3224
    %v3646 = vsel %vm3226, %v3645, %v3644
    %v3647 = vperm.slane %v3157, %v3228
    %v3648 = vsel %vm3230, %v3647, %v3646
    %v3649 = vperm.slane %v3158, %v3232
    %v3650 = vsel %vm3234, %v3649, %v3648
    %v3651 = vperm.slane %v3159, %v3236
    %v3652 = vsel %vm3238, %v3651, %v3650
    %v3653 = vperm.slane %v3160, %v3240
    %v3654 = vsel %vm3242, %v3653, %v3652
    %v3655 = vperm.slane %v3161, %v3244
    %v3656 = vsel %vm3246, %v3655, %v3654
    %v3657 = vperm.slane %v3162, %v3248
    %v3658 = vsel %vm3250, %v3657, %v3656
    %v3659 = vperm.slane %v3163, %v3252
    %v3660 = vsel %vm3254, %v3659, %v3658
    %v3661 = vperm.slane %v3164, %v3256
    %v3662 = vsel %vm3258, %v3661, %v3660
    %v3663 = vperm.slane %v3165, %v3198
    %v3664 = vperm.slane %v3166, %v3200
    %v3665 = vsel %vm3202, %v3664, %v3663
    %v3666 = vperm.slane %v3167, %v3204
    %v3667 = vsel %vm3206, %v3666, %v3665
    %v3668 = vperm.slane %v3168, %v3208
    %v3669 = vsel %vm3210, %v3668, %v3667
    %v3670 = vperm.slane %v3169, %v3212
    %v3671 = vsel %vm3214, %v3670, %v3669
    %v3672 = vperm.slane %v3170, %v3216
    %v3673 = vsel %vm3218, %v3672, %v3671
    %v3674 = vperm.slane %v3171, %v3220
    %v3675 = vsel %vm3222, %v3674, %v3673
    %v3676 = vperm.slane %v3172, %v3224
    %v3677 = vsel %vm3226, %v3676, %v3675
    %v3678 = vperm.slane %v3173, %v3228
    %v3679 = vsel %vm3230, %v3678, %v3677
    %v3680 = vperm.slane %v3174, %v3232
    %v3681 = vsel %vm3234, %v3680, %v3679
    %v3682 = vperm.slane %v3175, %v3236
    %v3683 = vsel %vm3238, %v3682, %v3681
    %v3684 = vperm.slane %v3176, %v3240
    %v3685 = vsel %vm3242, %v3684, %v3683
    %v3686 = vperm.slane %v3177, %v3244
    %v3687 = vsel %vm3246, %v3686, %v3685
    %v3688 = vperm.slane %v3178, %v3248
    %v3689 = vsel %vm3250, %v3688, %v3687
    %v3690 = vperm.slane %v3179, %v3252
    %v3691 = vsel %vm3254, %v3690, %v3689
    %v3692 = vperm.slane %v3180, %v3256
    %v3693 = vsel %vm3258, %v3692, %v3691
    %v3694 = vperm.slane %v3181, %v3198
    %v3695 = vperm.slane %v3182, %v3200
    %v3696 = vsel %vm3202, %v3695, %v3694
    %v3697 = vperm.slane %v3183, %v3204
    %v3698 = vsel %vm3206, %v3697, %v3696
    %v3699 = vperm.slane %v3184, %v3208
    %v3700 = vsel %vm3210, %v3699, %v3698
    %v3701 = vperm.slane %v3185, %v3212
    %v3702 = vsel %vm3214, %v3701, %v3700
    %v3703 = vperm.slane %v3186, %v3216
    %v3704 = vsel %vm3218, %v3703, %v3702
    %v3705 = vperm.slane %v3187, %v3220
    %v3706 = vsel %vm3222, %v3705, %v3704
    %v3707 = vperm.slane %v3188, %v3224
    %v3708 = vsel %vm3226, %v3707, %v3706
    %v3709 = vperm.slane %v3189, %v3228
    %v3710 = vsel %vm3230, %v3709, %v3708
    %v3711 = vperm.slane %v3190, %v3232
    %v3712 = vsel %vm3234, %v3711, %v3710
    %v3713 = vperm.slane %v3191, %v3236
    %v3714 = vsel %vm3238, %v3713, %v3712
    %v3715 = vperm.slane %v3192, %v3240
    %v3716 = vsel %vm3242, %v3715, %v3714
    %v3717 = vperm.slane %v3193, %v3244
    %v3718 = vsel %vm3246, %v3717, %v3716
    %v3719 = vperm.slane %v3194, %v3248
    %v3720 = vsel %vm3250, %v3719, %v3718
    %v3721 = vperm.slane %v3195, %v3252
    %v3722 = vsel %vm3254, %v3721, %v3720
    %v3723 = vperm.slane %v3196, %v3256
    %v3724 = vsel %vm3258, %v3723, %v3722
    %vm3725 = vcmask 1041409
    %v3726 = vsel %vm3725, %v3383, %v3259
    %vm3727 = vcmask 1042434
    %v3728 = vsel %vm3727, %v3507, %v3726
    %vm3729 = vcmask 1043459
    %v3730 = vsel %vm3729, %v3631, %v3728
    %v3731 = vsel %vm3725, %v3414, %v3290
    %v3732 = vsel %vm3727, %v3538, %v3731
    %v3733 = vsel %vm3729, %v3662, %v3732
    %v3734 = vsel %vm3725, %v3445, %v3321
    %v3735 = vsel %vm3727, %v3569, %v3734
    %v3736 = vsel %vm3729, %v3693, %v3735
    %v3737 = vsel %vm3725, %v3476, %v3352
    %v3738 = vsel %vm3727, %v3600, %v3737
    %v3739 = vsel %vm3729, %v3724, %v3738
    %v3740 = vpack.c.b16 %v3730, %v3730
    %v3741 = vpack.c.b16 %v3733, %v3733
    %v3742 = vpack.c.b16 %v3736, %v3736
    %v3743 = vpack.c.b16 %v3739, %v3739
    %v3812 = vunpack.c.l.b16 %v2743
    %v3813 = vunpack.c.h.b16 %v2743
    %v3814 = vunpack.c.l.b16 %v2744
    %v3815 = vunpack.c.h.b16 %v2744
    %v3816 = vunpack.c.l.b16 %v2745
    %v3817 = vunpack.c.h.b16 %v2745
    %v3818 = vunpack.c.l.b16 %v2746
    %v3819 = vunpack.c.h.b16 %v2746
    %v3820 = vunpack.c.l.b16 %v2747
    %v3821 = vunpack.c.h.b16 %v2747
    %v3822 = vunpack.c.l.b16 %v2748
    %v3823 = vunpack.c.h.b16 %v2748
    %v3824 = vunpack.c.l.b16 %v2749
    %v3825 = vunpack.c.h.b16 %v2749
    %v3826 = vunpack.c.l.b16 %v2750
    %v3827 = vunpack.c.h.b16 %v2750
    %v3828 = vunpack.c.l.b16 %v2751
    %v3829 = vunpack.c.h.b16 %v2751
    %v3830 = vunpack.c.l.b16 %v2752
    %v3831 = vunpack.c.h.b16 %v2752
    %v3832 = vunpack.c.l.b16 %v2753
    %v3833 = vunpack.c.h.b16 %v2753
    %v3834 = vunpack.c.l.b16 %v2754
    %v3835 = vunpack.c.h.b16 %v2754
    %v3836 = vunpack.c.l.b16 %v2755
    %v3837 = vunpack.c.h.b16 %v2755
    %v3838 = vunpack.c.l.b16 %v2756
    %v3839 = vunpack.c.h.b16 %v2756
    %v3840 = vunpack.c.l.b16 %v2757
    %v3841 = vunpack.c.h.b16 %v2757
    %v3842 = vunpack.c.l.b16 %v2758
    %v3843 = vunpack.c.h.b16 %v2758
    %v3844 = vunpack.c.l.b16 %v2759
    %v3845 = vunpack.c.h.b16 %v2759
    %v3846 = vunpack.c.l.b16 %v2760
    %v3847 = vunpack.c.h.b16 %v2760
    %v3848 = vunpack.c.l.b16 %v2761
    %v3849 = vunpack.c.h.b16 %v2761
    %v3850 = vunpack.c.l.b16 %v2762
    %v3851 = vunpack.c.h.b16 %v2762
    %v3852 = vunpack.c.l.b16 %v2763
    %v3853 = vunpack.c.h.b16 %v2763
    %v3854 = vunpack.c.l.b16 %v2764
    %v3855 = vunpack.c.h.b16 %v2764
    %v3856 = vunpack.c.l.b16 %v2765
    %v3857 = vunpack.c.h.b16 %v2765
    %v3858 = vunpack.c.l.b16 %v2766
    %v3859 = vunpack.c.h.b16 %v2766
    %v3860 = vunpack.c.l.b16 %v2767
    %v3861 = vunpack.c.h.b16 %v2767
    %v3862 = vunpack.c.l.b16 %v2768
    %v3863 = vunpack.c.h.b16 %v2768
    %v3864 = vunpack.c.l.b16 %v2769
    %v3865 = vunpack.c.h.b16 %v2769
    %v3866 = vunpack.c.l.b16 %v2770
    %v3867 = vunpack.c.h.b16 %v2770
    %v3868 = vunpack.c.l.b16 %v2771
    %v3869 = vunpack.c.h.b16 %v2771
    %v3870 = vunpack.c.l.b16 %v2772
    %v3871 = vunpack.c.h.b16 %v2772
    %v3872 = vunpack.c.l.b16 %v2773
    %v3873 = vunpack.c.h.b16 %v2773
    %v3874 = vunpack.c.l.b16 %v2774
    %v3875 = vunpack.c.h.b16 %v2774
    %v3876 = vunpack.c.l.b16 %v2775
    %v3877 = vunpack.c.h.b16 %v2775
    %v3878 = vunpack.c.l.b16 %v2776
    %v3879 = vunpack.c.h.b16 %v2776
    %v3880 = vunpack.c.l.b16 %v2777
    %v3881 = vunpack.c.h.b16 %v2777
    %v3882 = vunpack.c.l.b16 %v2778
    %v3883 = vunpack.c.h.b16 %v2778
    %v3884 = vunpack.c.l.b16 %v2779
    %v3885 = vunpack.c.h.b16 %v2779
    %v3886 = vunpack.c.l.b16 %v2780
    %v3887 = vunpack.c.h.b16 %v2780
    %v3888 = vunpack.c.l.b16 %v2781
    %v3889 = vunpack.c.h.b16 %v2781
    %v3890 = vunpack.c.l.b16 %v2782
    %v3891 = vunpack.c.h.b16 %v2782
    %v3892 = vunpack.c.l.b16 %v2783
    %v3893 = vunpack.c.h.b16 %v2783
    %v3894 = vunpack.c.l.b16 %v2784
    %v3895 = vunpack.c.h.b16 %v2784
    %v3896 = vunpack.c.l.b16 %v2785
    %v3897 = vunpack.c.h.b16 %v2785
    %v3898 = vunpack.c.l.b16 %v2786
    %v3899 = vunpack.c.h.b16 %v2786
    %v3900 = vunpack.c.l.b16 %v2787
    %v3901 = vunpack.c.h.b16 %v2787
    %v3902 = vunpack.c.l.b16 %v2788
    %v3903 = vunpack.c.h.b16 %v2788
    %v3904 = vunpack.c.l.b16 %v2789
    %v3905 = vunpack.c.h.b16 %v2789
    %v3906 = vunpack.c.l.b16 %v2790
    %v3907 = vunpack.c.h.b16 %v2790
    %v3908 = vunpack.c.l.b16 %v2791
    %v3909 = vunpack.c.h.b16 %v2791
    %v3910 = vunpack.c.l.b16 %v2792
    %v3911 = vunpack.c.h.b16 %v2792
    %v3912 = vunpack.c.l.b16 %v2793
    %v3913 = vunpack.c.h.b16 %v2793
    %v3914 = vunpack.c.l.b16 %v2794
    %v3915 = vunpack.c.h.b16 %v2794
    %v3916 = vunpack.c.l.b16 %v2795
    %v3917 = vunpack.c.h.b16 %v2795
    %v3918 = vunpack.c.l.b16 %v2796
    %v3919 = vunpack.c.h.b16 %v2796
    %v3920 = vunpack.c.l.b16 %v2797
    %v3921 = vunpack.c.h.b16 %v2797
    %v3922 = vunpack.c.l.b16 %v2798
    %v3923 = vunpack.c.h.b16 %v2798
    %v3924 = vunpack.c.l.b16 %v2799
    %v3925 = vunpack.c.h.b16 %v2799
    %v3926 = vunpack.c.l.b16 %v2800
    %v3927 = vunpack.c.h.b16 %v2800
    %v3928 = vunpack.c.l.b16 %v2801
    %v3929 = vunpack.c.h.b16 %v2801
    %v3930 = vunpack.c.l.b16 %v2802
    %v3931 = vunpack.c.h.b16 %v2802
    %v3932 = vunpack.c.l.b16 %v2803
    %v3933 = vunpack.c.h.b16 %v2803
    %v3934 = vunpack.c.l.b16 %v2804
    %v3935 = vunpack.c.h.b16 %v2804
    %v3936 = vunpack.c.l.b16 %v2805
    %v3937 = vunpack.c.h.b16 %v2805
    %v3938 = vunpack.c.l.b16 %v2806
    %v3939 = vunpack.c.h.b16 %v2806
    %v3940 = vpack.c.b16 %v3814, %v3812
    %v3941 = vpack.c.b16 %v3815, %v3813
    %v3942 = vpack.c.b16 %v3818, %v3816
    %v3943 = vpack.c.b16 %v3819, %v3817
    %v3944 = vpack.c.b16 %v3822, %v3820
    %v3945 = vpack.c.b16 %v3823, %v3821
    %v3946 = vpack.c.b16 %v3826, %v3824
    %v3947 = vpack.c.b16 %v3827, %v3825
    %v3948 = vpack.c.b16 %v3830, %v3828
    %v3949 = vpack.c.b16 %v3831, %v3829
    %v3950 = vpack.c.b16 %v3834, %v3832
    %v3951 = vpack.c.b16 %v3835, %v3833
    %v3952 = vpack.c.b16 %v3838, %v3836
    %v3953 = vpack.c.b16 %v3839, %v3837
    %v3954 = vpack.c.b16 %v3842, %v3840
    %v3955 = vpack.c.b16 %v3843, %v3841
    %v3956 = vpack.c.b16 %v3846, %v3844
    %v3957 = vpack.c.b16 %v3847, %v3845
    %v3958 = vpack.c.b16 %v3850, %v3848
    %v3959 = vpack.c.b16 %v3851, %v3849
    %v3960 = vpack.c.b16 %v3854, %v3852
    %v3961 = vpack.c.b16 %v3855, %v3853
    %v3962 = vpack.c.b16 %v3858, %v3856
    %v3963 = vpack.c.b16 %v3859, %v3857
    %v3964 = vpack.c.b16 %v3862, %v3860
    %v3965 = vpack.c.b16 %v3863, %v3861
    %v3966 = vpack.c.b16 %v3866, %v3864
    %v3967 = vpack.c.b16 %v3867, %v3865
    %v3968 = vpack.c.b16 %v3870, %v3868
    %v3969 = vpack.c.b16 %v3871, %v3869
    %v3970 = vpack.c.b16 %v3874, %v3872
    %v3971 = vpack.c.b16 %v3875, %v3873
    %v3972 = vpack.c.b16 %v3878, %v3876
    %v3973 = vpack.c.b16 %v3879, %v3877
    %v3974 = vpack.c.b16 %v3882, %v3880
    %v3975 = vpack.c.b16 %v3883, %v3881
    %v3976 = vpack.c.b16 %v3886, %v3884
    %v3977 = vpack.c.b16 %v3887, %v3885
    %v3978 = vpack.c.b16 %v3890, %v3888
    %v3979 = vpack.c.b16 %v3891, %v3889
    %v3980 = vpack.c.b16 %v3894, %v3892
    %v3981 = vpack.c.b16 %v3895, %v3893
    %v3982 = vpack.c.b16 %v3898, %v3896
    %v3983 = vpack.c.b16 %v3899, %v3897
    %v3984 = vpack.c.b16 %v3902, %v3900
    %v3985 = vpack.c.b16 %v3903, %v3901
    %v3986 = vpack.c.b16 %v3906, %v3904
    %v3987 = vpack.c.b16 %v3907, %v3905
    %v3988 = vpack.c.b16 %v3910, %v3908
    %v3989 = vpack.c.b16 %v3911, %v3909
    %v3990 = vpack.c.b16 %v3914, %v3912
    %v3991 = vpack.c.b16 %v3915, %v3913
    %v3992 = vpack.c.b16 %v3918, %v3916
    %v3993 = vpack.c.b16 %v3919, %v3917
    %v3994 = vpack.c.b16 %v3922, %v3920
    %v3995 = vpack.c.b16 %v3923, %v3921
    %v3996 = vpack.c.b16 %v3926, %v3924
    %v3997 = vpack.c.b16 %v3927, %v3925
    %v3998 = vpack.c.b16 %v3930, %v3928
    %v3999 = vpack.c.b16 %v3931, %v3929
    %v4000 = vpack.c.b16 %v3934, %v3932
    %v4001 = vpack.c.b16 %v3935, %v3933
    %v4002 = vpack.c.b16 %v3938, %v3936
    %v4003 = vpack.c.b16 %v3939, %v3937
    %4068 = vmatpush.bf16.msra.mxu0 %v3954
    %4069 = vmatpush.bf16.msra.mxu0 %v3952
    %4070 = vmatpush.bf16.msra.mxu0 %v3950
    %4071 = vmatpush.bf16.msra.mxu0 %v3948
    %4072 = vmatpush.bf16.msra.mxu0 %v3946
    %4073 = vmatpush.bf16.msra.mxu0 %v3944
    %4074 = vmatpush.bf16.msra.mxu0 %v3942
    %4075 = vmatpush.bf16.msra.mxu0 %v3940
    %4076 = vmatmul.bf16.gmra.mxu0 %v3740
    %v4077 = vpop.f32.mrf.mxu0
    %v4078 = vadd.f32 %v2809, %v4077
    %v4079 = vpop.f32.mrf.mxu0
    %4080 = vdwg.mxu0
    %4081 = vmatpush.bf16.msra.mxu0 %v3970
    %4082 = vmatpush.bf16.msra.mxu0 %v3968
    %4083 = vmatpush.bf16.msra.mxu0 %v3966
    %4084 = vmatpush.bf16.msra.mxu0 %v3964
    %4085 = vmatpush.bf16.msra.mxu0 %v3962
    %4086 = vmatpush.bf16.msra.mxu0 %v3960
    %4087 = vmatpush.bf16.msra.mxu0 %v3958
    %4088 = vmatpush.bf16.msra.mxu0 %v3956
    %4089 = vmatmul.bf16.gmra.mxu0 %v3741
    %v4090 = vpop.f32.mrf.mxu0
    %v4091 = vadd.f32 %v4078, %v4090
    %v4092 = vpop.f32.mrf.mxu0
    %4093 = vdwg.mxu0
    %4094 = vmatpush.bf16.msra.mxu0 %v3986
    %4095 = vmatpush.bf16.msra.mxu0 %v3984
    %4096 = vmatpush.bf16.msra.mxu0 %v3982
    %4097 = vmatpush.bf16.msra.mxu0 %v3980
    %4098 = vmatpush.bf16.msra.mxu0 %v3978
    %4099 = vmatpush.bf16.msra.mxu0 %v3976
    %4100 = vmatpush.bf16.msra.mxu0 %v3974
    %4101 = vmatpush.bf16.msra.mxu0 %v3972
    %4102 = vmatmul.bf16.gmra.mxu0 %v3742
    %v4103 = vpop.f32.mrf.mxu0
    %v4104 = vadd.f32 %v4091, %v4103
    %v4105 = vpop.f32.mrf.mxu0
    %4106 = vdwg.mxu0
    %4107 = vmatpush.bf16.msra.mxu0 %v4002
    %4108 = vmatpush.bf16.msra.mxu0 %v4000
    %4109 = vmatpush.bf16.msra.mxu0 %v3998
    %4110 = vmatpush.bf16.msra.mxu0 %v3996
    %4111 = vmatpush.bf16.msra.mxu0 %v3994
    %4112 = vmatpush.bf16.msra.mxu0 %v3992
    %4113 = vmatpush.bf16.msra.mxu0 %v3990
    %4114 = vmatpush.bf16.msra.mxu0 %v3988
    %4115 = vmatmul.bf16.gmra.mxu0 %v3743
    %v4116 = vpop.f32.mrf.mxu0
    %v4117 = vadd.f32 %v4104, %v4116
    %v4118 = vpop.f32.mrf.mxu0
    %4119 = vdwg.mxu0
    %4120 = vmatpush.bf16.msra.mxu0 %v3955
    %4121 = vmatpush.bf16.msra.mxu0 %v3953
    %4122 = vmatpush.bf16.msra.mxu0 %v3951
    %4123 = vmatpush.bf16.msra.mxu0 %v3949
    %4124 = vmatpush.bf16.msra.mxu0 %v3947
    %4125 = vmatpush.bf16.msra.mxu0 %v3945
    %4126 = vmatpush.bf16.msra.mxu0 %v3943
    %4127 = vmatpush.bf16.msra.mxu0 %v3941
    %4128 = vmatmul.bf16.gmra.mxu0 %v3740
    %v4129 = vpop.f32.mrf.mxu0
    %v4130 = vadd.f32 %v2810, %v4129
    %v4131 = vpop.f32.mrf.mxu0
    %4132 = vdwg.mxu0
    %4133 = vmatpush.bf16.msra.mxu0 %v3971
    %4134 = vmatpush.bf16.msra.mxu0 %v3969
    %4135 = vmatpush.bf16.msra.mxu0 %v3967
    %4136 = vmatpush.bf16.msra.mxu0 %v3965
    %4137 = vmatpush.bf16.msra.mxu0 %v3963
    %4138 = vmatpush.bf16.msra.mxu0 %v3961
    %4139 = vmatpush.bf16.msra.mxu0 %v3959
    %4140 = vmatpush.bf16.msra.mxu0 %v3957
    %4141 = vmatmul.bf16.gmra.mxu0 %v3741
    %v4142 = vpop.f32.mrf.mxu0
    %v4143 = vadd.f32 %v4130, %v4142
    %v4144 = vpop.f32.mrf.mxu0
    %4145 = vdwg.mxu0
    %4146 = vmatpush.bf16.msra.mxu0 %v3987
    %4147 = vmatpush.bf16.msra.mxu0 %v3985
    %4148 = vmatpush.bf16.msra.mxu0 %v3983
    %4149 = vmatpush.bf16.msra.mxu0 %v3981
    %4150 = vmatpush.bf16.msra.mxu0 %v3979
    %4151 = vmatpush.bf16.msra.mxu0 %v3977
    %4152 = vmatpush.bf16.msra.mxu0 %v3975
    %4153 = vmatpush.bf16.msra.mxu0 %v3973
    %4154 = vmatmul.bf16.gmra.mxu0 %v3742
    %v4155 = vpop.f32.mrf.mxu0
    %v4156 = vadd.f32 %v4143, %v4155
    %v4157 = vpop.f32.mrf.mxu0
    %4158 = vdwg.mxu0
    %4159 = vmatpush.bf16.msra.mxu0 %v4003
    %4160 = vmatpush.bf16.msra.mxu0 %v4001
    %4161 = vmatpush.bf16.msra.mxu0 %v3999
    %4162 = vmatpush.bf16.msra.mxu0 %v3997
    %4163 = vmatpush.bf16.msra.mxu0 %v3995
    %4164 = vmatpush.bf16.msra.mxu0 %v3993
    %4165 = vmatpush.bf16.msra.mxu0 %v3991
    %4166 = vmatpush.bf16.msra.mxu0 %v3989
    %4167 = vmatmul.bf16.gmra.mxu0 %v3743
    %v4168 = vpop.f32.mrf.mxu0
    %v4169 = vadd.f32 %v4156, %v4168
    %v4170 = vpop.f32.mrf.mxu0
    %4171 = vdwg.mxu0
    %v4172 = vmax.f32 %v4117, 0.0
    %v4173 = vmax.f32 %v4169, 0.0
    %v4174 = vpack.c.bf16 %v4172, %v4172
    %v4175 = vpack.c.bf16 %v4173, %v4173
    %v4176 = vld [vmem:[%s6] sm:$0xf]
    %v4177 = vld [vmem:[%s6 + $0x4] sm:$0xf]
    %v4178 = vld [vmem:[%s6 + $0x8] sm:$0xf]
    %v4179 = vld [vmem:[%s6 + $0xc] sm:$0xf]
    %v4180 = vld [vmem:[%s6 + $0x10] sm:$0xf]
    %v4181 = vld [vmem:[%s6 + $0x14] sm:$0xf]
    %v4182 = vld [vmem:[%s6 + $0x18] sm:$0xf]
    %v4183 = vld [vmem:[%s6 + $0x1c] sm:$0xf]
    %v4184 = vld [vmem:[%s6 + $0x20] sm:$0xf]
    %v4185 = vld [vmem:[%s6 + $0x24] sm:$0xf]
    %v4186 = vld [vmem:[%s6 + $0x28] sm:$0xf]
    %v4187 = vld [vmem:[%s6 + $0x2c] sm:$0xf]
    %v4188 = vld [vmem:[%s6 + $0x30] sm:$0xf]
    %v4189 = vld [vmem:[%s6 + $0x34] sm:$0xf]
    %v4190 = vld [vmem:[%s6 + $0x38] sm:$0xf]
    %v4191 = vld [vmem:[%s6 + $0x3c] sm:$0xf]
    %v4192 = vld [vmem:[%s6 + $0x40] sm:$0xf]
    %v4193 = vld [vmem:[%s6 + $0x44] sm:$0xf]
    %v4194 = vld [vmem:[%s6 + $0x48] sm:$0xf]
    %v4195 = vld [vmem:[%s6 + $0x4c] sm:$0xf]
    %v4196 = vld [vmem:[%s6 + $0x50] sm:$0xf]
    %v4197 = vld [vmem:[%s6 + $0x54] sm:$0xf]
    %v4198 = vld [vmem:[%s6 + $0x58] sm:$0xf]
    %v4199 = vld [vmem:[%s6 + $0x5c] sm:$0xf]
    %v4200 = vld [vmem:[%s6 + $0x60] sm:$0xf]
    %v4201 = vld [vmem:[%s6 + $0x64] sm:$0xf]
    %v4202 = vld [vmem:[%s6 + $0x68] sm:$0xf]
    %v4203 = vld [vmem:[%s6 + $0x6c] sm:$0xf]
    %v4204 = vld [vmem:[%s6 + $0x70] sm:$0xf]
    %v4205 = vld [vmem:[%s6 + $0x74] sm:$0xf]
    %v4206 = vld [vmem:[%s6 + $0x78] sm:$0xf]
    %v4207 = vld [vmem:[%s6 + $0x7c] sm:$0xf]
    %v4208 = vld [vmem:[%s7] sm:$0x1]
    %v4210 = vperm.slane %v4208, 0
    %v4244 = vunpack.c.l.b16 %v4176
    %v4245 = vunpack.c.l.b16 %v4177
    %v4246 = vunpack.c.l.b16 %v4178
    %v4247 = vunpack.c.l.b16 %v4179
    %v4248 = vunpack.c.l.b16 %v4180
    %v4249 = vunpack.c.l.b16 %v4181
    %v4250 = vunpack.c.l.b16 %v4182
    %v4251 = vunpack.c.l.b16 %v4183
    %v4252 = vunpack.c.l.b16 %v4184
    %v4253 = vunpack.c.l.b16 %v4185
    %v4254 = vunpack.c.l.b16 %v4186
    %v4255 = vunpack.c.l.b16 %v4187
    %v4256 = vunpack.c.l.b16 %v4188
    %v4257 = vunpack.c.l.b16 %v4189
    %v4258 = vunpack.c.l.b16 %v4190
    %v4259 = vunpack.c.l.b16 %v4191
    %v4260 = vunpack.c.l.b16 %v4192
    %v4261 = vunpack.c.l.b16 %v4193
    %v4262 = vunpack.c.l.b16 %v4194
    %v4263 = vunpack.c.l.b16 %v4195
    %v4264 = vunpack.c.l.b16 %v4196
    %v4265 = vunpack.c.l.b16 %v4197
    %v4266 = vunpack.c.l.b16 %v4198
    %v4267 = vunpack.c.l.b16 %v4199
    %v4268 = vunpack.c.l.b16 %v4200
    %v4269 = vunpack.c.l.b16 %v4201
    %v4270 = vunpack.c.l.b16 %v4202
    %v4271 = vunpack.c.l.b16 %v4203
    %v4272 = vunpack.c.l.b16 %v4204
    %v4273 = vunpack.c.l.b16 %v4205
    %v4274 = vunpack.c.l.b16 %v4206
    %v4275 = vunpack.c.l.b16 %v4207
    %v4276 = vpack.c.b16 %v4245, %v4244
    %v4277 = vpack.c.b16 %v4247, %v4246
    %v4278 = vpack.c.b16 %v4249, %v4248
    %v4279 = vpack.c.b16 %v4251, %v4250
    %v4280 = vpack.c.b16 %v4253, %v4252
    %v4281 = vpack.c.b16 %v4255, %v4254
    %v4282 = vpack.c.b16 %v4257, %v4256
    %v4283 = vpack.c.b16 %v4259, %v4258
    %v4284 = vpack.c.b16 %v4261, %v4260
    %v4285 = vpack.c.b16 %v4263, %v4262
    %v4286 = vpack.c.b16 %v4265, %v4264
    %v4287 = vpack.c.b16 %v4267, %v4266
    %v4288 = vpack.c.b16 %v4269, %v4268
    %v4289 = vpack.c.b16 %v4271, %v4270
    %v4290 = vpack.c.b16 %v4273, %v4272
    %v4291 = vpack.c.b16 %v4275, %v4274
    %4308 = vmatpush.bf16.msra.mxu0 %v4283
    %4309 = vmatpush.bf16.msra.mxu0 %v4282
    %4310 = vmatpush.bf16.msra.mxu0 %v4281
    %4311 = vmatpush.bf16.msra.mxu0 %v4280
    %4312 = vmatpush.bf16.msra.mxu0 %v4279
    %4313 = vmatpush.bf16.msra.mxu0 %v4278
    %4314 = vmatpush.bf16.msra.mxu0 %v4277
    %4315 = vmatpush.bf16.msra.mxu0 %v4276
    %4316 = vmatmul.bf16.gmra.mxu0 %v4174
    %v4317 = vpop.f32.mrf.mxu0
    %v4318 = vadd.f32 %v4210, %v4317
    %v4319 = vpop.f32.mrf.mxu0
    %4320 = vdwg.mxu0
    %4321 = vmatpush.bf16.msra.mxu0 %v4291
    %4322 = vmatpush.bf16.msra.mxu0 %v4290
    %4323 = vmatpush.bf16.msra.mxu0 %v4289
    %4324 = vmatpush.bf16.msra.mxu0 %v4288
    %4325 = vmatpush.bf16.msra.mxu0 %v4287
    %4326 = vmatpush.bf16.msra.mxu0 %v4286
    %4327 = vmatpush.bf16.msra.mxu0 %v4285
    %4328 = vmatpush.bf16.msra.mxu0 %v4284
    %4329 = vmatmul.bf16.gmra.mxu0 %v4175
    %v4330 = vpop.f32.mrf.mxu0
    %v4331 = vadd.f32 %v4318, %v4330
    %v4332 = vpop.f32.mrf.mxu0
    %4333 = vdwg.mxu0
    %v4334 = vmul.f32 %v4331, %v4331
    %vm4335 = vcmask 1043456
    %v4336 = vsel %vm4335, %v4334, 0.0
    %4337 = vadd.xlane.f32.xlu0 %v4336
    %v4338 = vpop.xlane.xlu0 %4337
    %v4339 = vmax.f32 %v4338, 1e-24
    %v4340 = vrsqrt.pop %v4339
    %v4341 = vmul.f32 %v4340, %v4339
    %v4342 = vmul.f32 %v4341, %v4340
    %v4343 = vmul.f32 0.5, %v4342
    %v4344 = vsub.f32 1.5, %v4343
    %v4345 = vmul.f32 %v4340, %v4344
    %vm4346 = vweird.f32 %v4339
    %vm4347 = vweird.f32 %v4340
    %vm4348 = vmor %vm4346, %vm4347
    %v4349 = vsel %vm4348, %v4340, %v4345
    %v4350 = vmul.f32 %v4331, %v4349
    %v4351 = vpack.c.bf16 %v2360, %v2359
    %v4352 = vpack.c.bf16 %v2362, %v2361
    %v4353 = vpack.c.bf16 %v2364, %v2363
    %v4354 = vpack.c.bf16 %v2366, %v2365
    %v4355 = vpack.c.bf16 %v2368, %v2367
    %v4356 = vpack.c.bf16 %v2370, %v2369
    %v4357 = vpack.c.bf16 %v2372, %v2371
    %v4358 = vpack.c.bf16 %v2374, %v2373
    %v4359 = vpack.c.bf16 %v2376, %v2375
    %v4360 = vpack.c.bf16 %v2378, %v2377
    %v4361 = vpack.c.bf16 %v2380, %v2379
    %v4362 = vpack.c.bf16 %v2382, %v2381
    %v4363 = vpack.c.bf16 %v2384, %v2383
    %v4364 = vpack.c.bf16 %v2386, %v2385
    %v4365 = vpack.c.bf16 %v2388, %v2387
    %v4366 = vpack.c.bf16 %v2390, %v2389
    %v4367 = vpack.c.bf16 %v2392, %v2391
    %v4368 = vpack.c.bf16 %v2394, %v2393
    %v4369 = vpack.c.bf16 %v2396, %v2395
    %v4370 = vpack.c.bf16 %v2398, %v2397
    %v4371 = vpack.c.bf16 %v2400, %v2399
    %v4372 = vpack.c.bf16 %v2402, %v2401
    %v4373 = vpack.c.bf16 %v2404, %v2403
    %v4374 = vpack.c.bf16 %v2406, %v2405
    %v4375 = vpack.c.bf16 %v2408, %v2407
    %v4376 = vpack.c.bf16 %v2410, %v2409
    %v4377 = vpack.c.bf16 %v2412, %v2411
    %v4378 = vpack.c.bf16 %v2414, %v2413
    %v4379 = vpack.c.bf16 %v2416, %v2415
    %v4380 = vpack.c.bf16 %v2418, %v2417
    %v4381 = vpack.c.bf16 %v2420, %v2419
    %v4382 = vpack.c.bf16 %v2422, %v2421
    %v4383 = vpack.c.bf16 %v2424, %v2423
    %v4384 = vpack.c.bf16 %v2426, %v2425
    %v4385 = vpack.c.bf16 %v2428, %v2427
    %v4386 = vpack.c.bf16 %v2430, %v2429
    %v4387 = vpack.c.bf16 %v2432, %v2431
    %v4388 = vpack.c.bf16 %v2434, %v2433
    %v4389 = vpack.c.bf16 %v2436, %v2435
    %v4390 = vpack.c.bf16 %v2438, %v2437
    %v4391 = vpack.c.bf16 %v2440, %v2439
    %v4392 = vpack.c.bf16 %v2442, %v2441
    %v4393 = vpack.c.bf16 %v2444, %v2443
    %v4394 = vpack.c.bf16 %v2446, %v2445
    %v4395 = vpack.c.bf16 %v2448, %v2447
    %v4396 = vpack.c.bf16 %v2450, %v2449
    %v4397 = vpack.c.bf16 %v2452, %v2451
    %v4398 = vpack.c.bf16 %v2454, %v2453
    %v4399 = vpack.c.bf16 %v2456, %v2455
    %v4400 = vpack.c.bf16 %v2458, %v2457
    %v4401 = vpack.c.bf16 %v2460, %v2459
    %v4402 = vpack.c.bf16 %v2462, %v2461
    %v4403 = vpack.c.bf16 %v2464, %v2463
    %v4404 = vpack.c.bf16 %v2466, %v2465
    %v4405 = vpack.c.bf16 %v2468, %v2467
    %v4406 = vpack.c.bf16 %v2470, %v2469
    %v4407 = vpack.c.bf16 %v2472, %v2471
    %v4408 = vpack.c.bf16 %v2474, %v2473
    %v4409 = vpack.c.bf16 %v2476, %v2475
    %v4410 = vpack.c.bf16 %v2478, %v2477
    %v4411 = vpack.c.bf16 %v2480, %v2479
    %v4412 = vpack.c.bf16 %v2482, %v2481
    %v4413 = vpack.c.bf16 %v2484, %v2483
    %v4414 = vpack.c.bf16 %v2486, %v2485
    %v4415 = vpack.c.bf16 %v2488, %v2487
    %v4416 = vpack.c.bf16 %v2490, %v2489
    %v4417 = vpack.c.bf16 %v2492, %v2491
    %v4418 = vpack.c.bf16 %v2494, %v2493
    %v4419 = vpack.c.bf16 %v2496, %v2495
    %v4420 = vpack.c.bf16 %v2498, %v2497
    %v4421 = vpack.c.bf16 %v2500, %v2499
    %v4422 = vpack.c.bf16 %v2502, %v2501
    %v4423 = vpack.c.bf16 %v2504, %v2503
    %v4424 = vpack.c.bf16 %v2506, %v2505
    %v4425 = vpack.c.bf16 %v2508, %v2507
    %v4426 = vpack.c.bf16 %v2510, %v2509
    %v4427 = vpack.c.bf16 %v2512, %v2511
    %v4428 = vpack.c.bf16 %v2514, %v2513
    %v4429 = vpack.c.bf16 %v2516, %v2515
    %v4430 = vpack.c.bf16 %v2518, %v2517
    %v4431 = vpack.c.bf16 %v2520, %v2519
    %v4432 = vpack.c.bf16 %v2522, %v2521
    %v4433 = vpack.c.bf16 %v2524, %v2523
    %v4434 = vpack.c.bf16 %v2526, %v2525
    %v4435 = vpack.c.bf16 %v2528, %v2527
    %v4436 = vpack.c.bf16 %v2530, %v2529
    %v4437 = vpack.c.bf16 %v2532, %v2531
    %v4438 = vpack.c.bf16 %v2534, %v2533
    %v4439 = vpack.c.bf16 %v2536, %v2535
    %v4440 = vpack.c.bf16 %v2538, %v2537
    %v4441 = vpack.c.bf16 %v2540, %v2539
    %v4442 = vpack.c.bf16 %v2542, %v2541
    %v4443 = vpack.c.bf16 %v2544, %v2543
    %v4444 = vpack.c.bf16 %v2546, %v2545
    %v4445 = vpack.c.bf16 %v2548, %v2547
    %v4446 = vpack.c.bf16 %v2550, %v2549
    %v4447 = vpack.c.bf16 %v2552, %v2551
    %v4448 = vpack.c.bf16 %v2554, %v2553
    %v4449 = vpack.c.bf16 %v2556, %v2555
    %v4450 = vpack.c.bf16 %v2558, %v2557
    %v4451 = vpack.c.bf16 %v2560, %v2559
    %v4452 = vpack.c.bf16 %v2562, %v2561
    %v4453 = vpack.c.bf16 %v2564, %v2563
    %v4454 = vpack.c.bf16 %v2566, %v2565
    %v4455 = vpack.c.bf16 %v2568, %v2567
    %v4456 = vpack.c.bf16 %v2570, %v2569
    %v4457 = vpack.c.bf16 %v2572, %v2571
    %v4458 = vpack.c.bf16 %v2574, %v2573
    %v4459 = vpack.c.bf16 %v2576, %v2575
    %v4460 = vpack.c.bf16 %v2578, %v2577
    %v4461 = vpack.c.bf16 %v2580, %v2579
    %v4462 = vpack.c.bf16 %v2582, %v2581
    %v4463 = vpack.c.bf16 %v2584, %v2583
    %v4464 = vpack.c.bf16 %v2586, %v2585
    %v4465 = vpack.c.bf16 %v2588, %v2587
    %v4466 = vpack.c.bf16 %v2590, %v2589
    %v4467 = vpack.c.bf16 %v2592, %v2591
    %v4468 = vpack.c.bf16 %v2594, %v2593
    %v4469 = vpack.c.bf16 %v2596, %v2595
    %v4470 = vpack.c.bf16 %v2598, %v2597
    %v4471 = vpack.c.bf16 %v2600, %v2599
    %v4472 = vpack.c.bf16 %v2602, %v2601
    %v4473 = vpack.c.bf16 %v2604, %v2603
    %v4474 = vpack.c.bf16 %v2606, %v2605
    %v4475 = vpack.c.bf16 %v2608, %v2607
    %v4476 = vpack.c.bf16 %v2610, %v2609
    %v4477 = vpack.c.bf16 %v2612, %v2611
    %v4478 = vpack.c.bf16 %v2614, %v2613
    %v4479 = vld [vmem:[%s8] sm:$0xff]
    %v4480 = vld [vmem:[%s8 + $0x8] sm:$0xff]
    %v4481 = vld [vmem:[%s8 + $0x10] sm:$0xff]
    %v4482 = vld [vmem:[%s8 + $0x18] sm:$0xff]
    %v4483 = vld [vmem:[%s8 + $0x20] sm:$0xff]
    %v4484 = vld [vmem:[%s8 + $0x28] sm:$0xff]
    %v4485 = vld [vmem:[%s8 + $0x30] sm:$0xff]
    %v4486 = vld [vmem:[%s8 + $0x38] sm:$0xff]
    %v4487 = vld [vmem:[%s8 + $0x40] sm:$0xff]
    %v4488 = vld [vmem:[%s8 + $0x48] sm:$0xff]
    %v4489 = vld [vmem:[%s8 + $0x50] sm:$0xff]
    %v4490 = vld [vmem:[%s8 + $0x58] sm:$0xff]
    %v4491 = vld [vmem:[%s8 + $0x60] sm:$0xff]
    %v4492 = vld [vmem:[%s8 + $0x68] sm:$0xff]
    %v4493 = vld [vmem:[%s8 + $0x70] sm:$0xff]
    %v4494 = vld [vmem:[%s8 + $0x78] sm:$0xff]
    %v4495 = vld [vmem:[%s8 + $0x80] sm:$0xff]
    %v4496 = vld [vmem:[%s8 + $0x88] sm:$0xff]
    %v4497 = vld [vmem:[%s8 + $0x90] sm:$0xff]
    %v4498 = vld [vmem:[%s8 + $0x98] sm:$0xff]
    %v4499 = vld [vmem:[%s8 + $0xa0] sm:$0xff]
    %v4500 = vld [vmem:[%s8 + $0xa8] sm:$0xff]
    %v4501 = vld [vmem:[%s8 + $0xb0] sm:$0xff]
    %v4502 = vld [vmem:[%s8 + $0xb8] sm:$0xff]
    %v4503 = vld [vmem:[%s8 + $0xc0] sm:$0xff]
    %v4504 = vld [vmem:[%s8 + $0xc8] sm:$0xff]
    %v4505 = vld [vmem:[%s8 + $0xd0] sm:$0xff]
    %v4506 = vld [vmem:[%s8 + $0xd8] sm:$0xff]
    %v4507 = vld [vmem:[%s8 + $0xe0] sm:$0xff]
    %v4508 = vld [vmem:[%s8 + $0xe8] sm:$0xff]
    %v4509 = vld [vmem:[%s8 + $0xf0] sm:$0xff]
    %v4510 = vld [vmem:[%s8 + $0xf8] sm:$0xff]
    %v4511 = vld [vmem:[%s8 + $0x100] sm:$0xff]
    %v4512 = vld [vmem:[%s8 + $0x108] sm:$0xff]
    %v4513 = vld [vmem:[%s8 + $0x110] sm:$0xff]
    %v4514 = vld [vmem:[%s8 + $0x118] sm:$0xff]
    %v4515 = vld [vmem:[%s8 + $0x120] sm:$0xff]
    %v4516 = vld [vmem:[%s8 + $0x128] sm:$0xff]
    %v4517 = vld [vmem:[%s8 + $0x130] sm:$0xff]
    %v4518 = vld [vmem:[%s8 + $0x138] sm:$0xff]
    %v4519 = vld [vmem:[%s8 + $0x140] sm:$0xff]
    %v4520 = vld [vmem:[%s8 + $0x148] sm:$0xff]
    %v4521 = vld [vmem:[%s8 + $0x150] sm:$0xff]
    %v4522 = vld [vmem:[%s8 + $0x158] sm:$0xff]
    %v4523 = vld [vmem:[%s8 + $0x160] sm:$0xff]
    %v4524 = vld [vmem:[%s8 + $0x168] sm:$0xff]
    %v4525 = vld [vmem:[%s8 + $0x170] sm:$0xff]
    %v4526 = vld [vmem:[%s8 + $0x178] sm:$0xff]
    %v4527 = vld [vmem:[%s8 + $0x180] sm:$0xff]
    %v4528 = vld [vmem:[%s8 + $0x188] sm:$0xff]
    %v4529 = vld [vmem:[%s8 + $0x190] sm:$0xff]
    %v4530 = vld [vmem:[%s8 + $0x198] sm:$0xff]
    %v4531 = vld [vmem:[%s8 + $0x1a0] sm:$0xff]
    %v4532 = vld [vmem:[%s8 + $0x1a8] sm:$0xff]
    %v4533 = vld [vmem:[%s8 + $0x1b0] sm:$0xff]
    %v4534 = vld [vmem:[%s8 + $0x1b8] sm:$0xff]
    %v4535 = vld [vmem:[%s8 + $0x1c0] sm:$0xff]
    %v4536 = vld [vmem:[%s8 + $0x1c8] sm:$0xff]
    %v4537 = vld [vmem:[%s8 + $0x1d0] sm:$0xff]
    %v4538 = vld [vmem:[%s8 + $0x1d8] sm:$0xff]
    %v4539 = vld [vmem:[%s8 + $0x1e0] sm:$0xff]
    %v4540 = vld [vmem:[%s8 + $0x1e8] sm:$0xff]
    %v4541 = vld [vmem:[%s8 + $0x1f0] sm:$0xff]
    %v4542 = vld [vmem:[%s8 + $0x1f8] sm:$0xff]
    %v4543 = vld [vmem:[%s9] sm:$0x3]
    %v4545 = vperm.slane %v4543, 0
    %v4546 = vperm.slane %v4543, 1
    %v4677 = vunpack.c.l.b16 %v4351
    %v4678 = vunpack.c.h.b16 %v4351
    %v4679 = vunpack.c.l.b16 %v4352
    %v4680 = vunpack.c.h.b16 %v4352
    %v4681 = vunpack.c.l.b16 %v4353
    %v4682 = vunpack.c.h.b16 %v4353
    %v4683 = vunpack.c.l.b16 %v4354
    %v4684 = vunpack.c.h.b16 %v4354
    %v4685 = vunpack.c.l.b16 %v4355
    %v4686 = vunpack.c.h.b16 %v4355
    %v4687 = vunpack.c.l.b16 %v4356
    %v4688 = vunpack.c.h.b16 %v4356
    %v4689 = vunpack.c.l.b16 %v4357
    %v4690 = vunpack.c.h.b16 %v4357
    %v4691 = vunpack.c.l.b16 %v4358
    %v4692 = vunpack.c.h.b16 %v4358
    %v4693 = vunpack.c.l.b16 %v4359
    %v4694 = vunpack.c.h.b16 %v4359
    %v4695 = vunpack.c.l.b16 %v4360
    %v4696 = vunpack.c.h.b16 %v4360
    %v4697 = vunpack.c.l.b16 %v4361
    %v4698 = vunpack.c.h.b16 %v4361
    %v4699 = vunpack.c.l.b16 %v4362
    %v4700 = vunpack.c.h.b16 %v4362
    %v4701 = vunpack.c.l.b16 %v4363
    %v4702 = vunpack.c.h.b16 %v4363
    %v4703 = vunpack.c.l.b16 %v4364
    %v4704 = vunpack.c.h.b16 %v4364
    %v4705 = vunpack.c.l.b16 %v4365
    %v4706 = vunpack.c.h.b16 %v4365
    %v4707 = vunpack.c.l.b16 %v4366
    %v4708 = vunpack.c.h.b16 %v4366
    %v4709 = vunpack.c.l.b16 %v4367
    %v4710 = vunpack.c.h.b16 %v4367
    %v4711 = vunpack.c.l.b16 %v4368
    %v4712 = vunpack.c.h.b16 %v4368
    %v4713 = vunpack.c.l.b16 %v4369
    %v4714 = vunpack.c.h.b16 %v4369
    %v4715 = vunpack.c.l.b16 %v4370
    %v4716 = vunpack.c.h.b16 %v4370
    %v4717 = vunpack.c.l.b16 %v4371
    %v4718 = vunpack.c.h.b16 %v4371
    %v4719 = vunpack.c.l.b16 %v4372
    %v4720 = vunpack.c.h.b16 %v4372
    %v4721 = vunpack.c.l.b16 %v4373
    %v4722 = vunpack.c.h.b16 %v4373
    %v4723 = vunpack.c.l.b16 %v4374
    %v4724 = vunpack.c.h.b16 %v4374
    %v4725 = vunpack.c.l.b16 %v4375
    %v4726 = vunpack.c.h.b16 %v4375
    %v4727 = vunpack.c.l.b16 %v4376
    %v4728 = vunpack.c.h.b16 %v4376
    %v4729 = vunpack.c.l.b16 %v4377
    %v4730 = vunpack.c.h.b16 %v4377
    %v4731 = vunpack.c.l.b16 %v4378
    %v4732 = vunpack.c.h.b16 %v4378
    %v4733 = vunpack.c.l.b16 %v4379
    %v4734 = vunpack.c.h.b16 %v4379
    %v4735 = vunpack.c.l.b16 %v4380
    %v4736 = vunpack.c.h.b16 %v4380
    %v4737 = vunpack.c.l.b16 %v4381
    %v4738 = vunpack.c.h.b16 %v4381
    %v4739 = vunpack.c.l.b16 %v4382
    %v4740 = vunpack.c.h.b16 %v4382
    %v4741 = vunpack.c.l.b16 %v4383
    %v4742 = vunpack.c.h.b16 %v4383
    %v4743 = vunpack.c.l.b16 %v4384
    %v4744 = vunpack.c.h.b16 %v4384
    %v4745 = vunpack.c.l.b16 %v4385
    %v4746 = vunpack.c.h.b16 %v4385
    %v4747 = vunpack.c.l.b16 %v4386
    %v4748 = vunpack.c.h.b16 %v4386
    %v4749 = vunpack.c.l.b16 %v4387
    %v4750 = vunpack.c.h.b16 %v4387
    %v4751 = vunpack.c.l.b16 %v4388
    %v4752 = vunpack.c.h.b16 %v4388
    %v4753 = vunpack.c.l.b16 %v4389
    %v4754 = vunpack.c.h.b16 %v4389
    %v4755 = vunpack.c.l.b16 %v4390
    %v4756 = vunpack.c.h.b16 %v4390
    %v4757 = vunpack.c.l.b16 %v4391
    %v4758 = vunpack.c.h.b16 %v4391
    %v4759 = vunpack.c.l.b16 %v4392
    %v4760 = vunpack.c.h.b16 %v4392
    %v4761 = vunpack.c.l.b16 %v4393
    %v4762 = vunpack.c.h.b16 %v4393
    %v4763 = vunpack.c.l.b16 %v4394
    %v4764 = vunpack.c.h.b16 %v4394
    %v4765 = vunpack.c.l.b16 %v4395
    %v4766 = vunpack.c.h.b16 %v4395
    %v4767 = vunpack.c.l.b16 %v4396
    %v4768 = vunpack.c.h.b16 %v4396
    %v4769 = vunpack.c.l.b16 %v4397
    %v4770 = vunpack.c.h.b16 %v4397
    %v4771 = vunpack.c.l.b16 %v4398
    %v4772 = vunpack.c.h.b16 %v4398
    %v4773 = vunpack.c.l.b16 %v4399
    %v4774 = vunpack.c.h.b16 %v4399
    %v4775 = vunpack.c.l.b16 %v4400
    %v4776 = vunpack.c.h.b16 %v4400
    %v4777 = vunpack.c.l.b16 %v4401
    %v4778 = vunpack.c.h.b16 %v4401
    %v4779 = vunpack.c.l.b16 %v4402
    %v4780 = vunpack.c.h.b16 %v4402
    %v4781 = vunpack.c.l.b16 %v4403
    %v4782 = vunpack.c.h.b16 %v4403
    %v4783 = vunpack.c.l.b16 %v4404
    %v4784 = vunpack.c.h.b16 %v4404
    %v4785 = vunpack.c.l.b16 %v4405
    %v4786 = vunpack.c.h.b16 %v4405
    %v4787 = vunpack.c.l.b16 %v4406
    %v4788 = vunpack.c.h.b16 %v4406
    %v4789 = vunpack.c.l.b16 %v4407
    %v4790 = vunpack.c.h.b16 %v4407
    %v4791 = vunpack.c.l.b16 %v4408
    %v4792 = vunpack.c.h.b16 %v4408
    %v4793 = vunpack.c.l.b16 %v4409
    %v4794 = vunpack.c.h.b16 %v4409
    %v4795 = vunpack.c.l.b16 %v4410
    %v4796 = vunpack.c.h.b16 %v4410
    %v4797 = vunpack.c.l.b16 %v4411
    %v4798 = vunpack.c.h.b16 %v4411
    %v4799 = vunpack.c.l.b16 %v4412
    %v4800 = vunpack.c.h.b16 %v4412
    %v4801 = vunpack.c.l.b16 %v4413
    %v4802 = vunpack.c.h.b16 %v4413
    %v4803 = vunpack.c.l.b16 %v4414
    %v4804 = vunpack.c.h.b16 %v4414
    %v4805 = vunpack.c.l.b16 %v4415
    %v4806 = vunpack.c.h.b16 %v4415
    %v4807 = vunpack.c.l.b16 %v4416
    %v4808 = vunpack.c.h.b16 %v4416
    %v4809 = vunpack.c.l.b16 %v4417
    %v4810 = vunpack.c.h.b16 %v4417
    %v4811 = vunpack.c.l.b16 %v4418
    %v4812 = vunpack.c.h.b16 %v4418
    %v4813 = vunpack.c.l.b16 %v4419
    %v4814 = vunpack.c.h.b16 %v4419
    %v4815 = vunpack.c.l.b16 %v4420
    %v4816 = vunpack.c.h.b16 %v4420
    %v4817 = vunpack.c.l.b16 %v4421
    %v4818 = vunpack.c.h.b16 %v4421
    %v4819 = vunpack.c.l.b16 %v4422
    %v4820 = vunpack.c.h.b16 %v4422
    %v4821 = vunpack.c.l.b16 %v4423
    %v4822 = vunpack.c.h.b16 %v4423
    %v4823 = vunpack.c.l.b16 %v4424
    %v4824 = vunpack.c.h.b16 %v4424
    %v4825 = vunpack.c.l.b16 %v4425
    %v4826 = vunpack.c.h.b16 %v4425
    %v4827 = vunpack.c.l.b16 %v4426
    %v4828 = vunpack.c.h.b16 %v4426
    %v4829 = vunpack.c.l.b16 %v4427
    %v4830 = vunpack.c.h.b16 %v4427
    %v4831 = vunpack.c.l.b16 %v4428
    %v4832 = vunpack.c.h.b16 %v4428
    %v4833 = vunpack.c.l.b16 %v4429
    %v4834 = vunpack.c.h.b16 %v4429
    %v4835 = vunpack.c.l.b16 %v4430
    %v4836 = vunpack.c.h.b16 %v4430
    %v4837 = vunpack.c.l.b16 %v4431
    %v4838 = vunpack.c.h.b16 %v4431
    %v4839 = vunpack.c.l.b16 %v4432
    %v4840 = vunpack.c.h.b16 %v4432
    %v4841 = vunpack.c.l.b16 %v4433
    %v4842 = vunpack.c.h.b16 %v4433
    %v4843 = vunpack.c.l.b16 %v4434
    %v4844 = vunpack.c.h.b16 %v4434
    %v4845 = vunpack.c.l.b16 %v4435
    %v4846 = vunpack.c.h.b16 %v4435
    %v4847 = vunpack.c.l.b16 %v4436
    %v4848 = vunpack.c.h.b16 %v4436
    %v4849 = vunpack.c.l.b16 %v4437
    %v4850 = vunpack.c.h.b16 %v4437
    %v4851 = vunpack.c.l.b16 %v4438
    %v4852 = vunpack.c.h.b16 %v4438
    %v4853 = vunpack.c.l.b16 %v4439
    %v4854 = vunpack.c.h.b16 %v4439
    %v4855 = vunpack.c.l.b16 %v4440
    %v4856 = vunpack.c.h.b16 %v4440
    %v4857 = vunpack.c.l.b16 %v4441
    %v4858 = vunpack.c.h.b16 %v4441
    %v4859 = vunpack.c.l.b16 %v4442
    %v4860 = vunpack.c.h.b16 %v4442
    %v4861 = vunpack.c.l.b16 %v4443
    %v4862 = vunpack.c.h.b16 %v4443
    %v4863 = vunpack.c.l.b16 %v4444
    %v4864 = vunpack.c.h.b16 %v4444
    %v4865 = vunpack.c.l.b16 %v4445
    %v4866 = vunpack.c.h.b16 %v4445
    %v4867 = vunpack.c.l.b16 %v4446
    %v4868 = vunpack.c.h.b16 %v4446
    %v4869 = vunpack.c.l.b16 %v4447
    %v4870 = vunpack.c.h.b16 %v4447
    %v4871 = vunpack.c.l.b16 %v4448
    %v4872 = vunpack.c.h.b16 %v4448
    %v4873 = vunpack.c.l.b16 %v4449
    %v4874 = vunpack.c.h.b16 %v4449
    %v4875 = vunpack.c.l.b16 %v4450
    %v4876 = vunpack.c.h.b16 %v4450
    %v4877 = vunpack.c.l.b16 %v4451
    %v4878 = vunpack.c.h.b16 %v4451
    %v4879 = vunpack.c.l.b16 %v4452
    %v4880 = vunpack.c.h.b16 %v4452
    %v4881 = vunpack.c.l.b16 %v4453
    %v4882 = vunpack.c.h.b16 %v4453
    %v4883 = vunpack.c.l.b16 %v4454
    %v4884 = vunpack.c.h.b16 %v4454
    %v4885 = vunpack.c.l.b16 %v4455
    %v4886 = vunpack.c.h.b16 %v4455
    %v4887 = vunpack.c.l.b16 %v4456
    %v4888 = vunpack.c.h.b16 %v4456
    %v4889 = vunpack.c.l.b16 %v4457
    %v4890 = vunpack.c.h.b16 %v4457
    %v4891 = vunpack.c.l.b16 %v4458
    %v4892 = vunpack.c.h.b16 %v4458
    %v4893 = vunpack.c.l.b16 %v4459
    %v4894 = vunpack.c.h.b16 %v4459
    %v4895 = vunpack.c.l.b16 %v4460
    %v4896 = vunpack.c.h.b16 %v4460
    %v4897 = vunpack.c.l.b16 %v4461
    %v4898 = vunpack.c.h.b16 %v4461
    %v4899 = vunpack.c.l.b16 %v4462
    %v4900 = vunpack.c.h.b16 %v4462
    %v4901 = vunpack.c.l.b16 %v4463
    %v4902 = vunpack.c.h.b16 %v4463
    %v4903 = vunpack.c.l.b16 %v4464
    %v4904 = vunpack.c.h.b16 %v4464
    %v4905 = vunpack.c.l.b16 %v4465
    %v4906 = vunpack.c.h.b16 %v4465
    %v4907 = vunpack.c.l.b16 %v4466
    %v4908 = vunpack.c.h.b16 %v4466
    %v4909 = vunpack.c.l.b16 %v4467
    %v4910 = vunpack.c.h.b16 %v4467
    %v4911 = vunpack.c.l.b16 %v4468
    %v4912 = vunpack.c.h.b16 %v4468
    %v4913 = vunpack.c.l.b16 %v4469
    %v4914 = vunpack.c.h.b16 %v4469
    %v4915 = vunpack.c.l.b16 %v4470
    %v4916 = vunpack.c.h.b16 %v4470
    %v4917 = vunpack.c.l.b16 %v4471
    %v4918 = vunpack.c.h.b16 %v4471
    %v4919 = vunpack.c.l.b16 %v4472
    %v4920 = vunpack.c.h.b16 %v4472
    %v4921 = vunpack.c.l.b16 %v4473
    %v4922 = vunpack.c.h.b16 %v4473
    %v4923 = vunpack.c.l.b16 %v4474
    %v4924 = vunpack.c.h.b16 %v4474
    %v4925 = vunpack.c.l.b16 %v4475
    %v4926 = vunpack.c.h.b16 %v4475
    %v4927 = vunpack.c.l.b16 %v4476
    %v4928 = vunpack.c.h.b16 %v4476
    %v4929 = vunpack.c.l.b16 %v4477
    %v4930 = vunpack.c.h.b16 %v4477
    %v4931 = vunpack.c.l.b16 %v4478
    %v4932 = vunpack.c.h.b16 %v4478
    %v4933 = vperm.slane %v4677, %v3198
    %v4934 = vperm.slane %v4678, %v3200
    %v4935 = vsel %vm3202, %v4934, %v4933
    %v4936 = vperm.slane %v4679, %v3204
    %v4937 = vsel %vm3206, %v4936, %v4935
    %v4938 = vperm.slane %v4680, %v3208
    %v4939 = vsel %vm3210, %v4938, %v4937
    %v4940 = vperm.slane %v4681, %v3212
    %v4941 = vsel %vm3214, %v4940, %v4939
    %v4942 = vperm.slane %v4682, %v3216
    %v4943 = vsel %vm3218, %v4942, %v4941
    %v4944 = vperm.slane %v4683, %v3220
    %v4945 = vsel %vm3222, %v4944, %v4943
    %v4946 = vperm.slane %v4684, %v3224
    %v4947 = vsel %vm3226, %v4946, %v4945
    %v4948 = vperm.slane %v4685, %v3228
    %v4949 = vsel %vm3230, %v4948, %v4947
    %v4950 = vperm.slane %v4686, %v3232
    %v4951 = vsel %vm3234, %v4950, %v4949
    %v4952 = vperm.slane %v4687, %v3236
    %v4953 = vsel %vm3238, %v4952, %v4951
    %v4954 = vperm.slane %v4688, %v3240
    %v4955 = vsel %vm3242, %v4954, %v4953
    %v4956 = vperm.slane %v4689, %v3244
    %v4957 = vsel %vm3246, %v4956, %v4955
    %v4958 = vperm.slane %v4690, %v3248
    %v4959 = vsel %vm3250, %v4958, %v4957
    %v4960 = vperm.slane %v4691, %v3252
    %v4961 = vsel %vm3254, %v4960, %v4959
    %v4962 = vperm.slane %v4692, %v3256
    %v4963 = vsel %vm3258, %v4962, %v4961
    %v4964 = vperm.slane %v4693, %v3198
    %v4965 = vperm.slane %v4694, %v3200
    %v4966 = vsel %vm3202, %v4965, %v4964
    %v4967 = vperm.slane %v4695, %v3204
    %v4968 = vsel %vm3206, %v4967, %v4966
    %v4969 = vperm.slane %v4696, %v3208
    %v4970 = vsel %vm3210, %v4969, %v4968
    %v4971 = vperm.slane %v4697, %v3212
    %v4972 = vsel %vm3214, %v4971, %v4970
    %v4973 = vperm.slane %v4698, %v3216
    %v4974 = vsel %vm3218, %v4973, %v4972
    %v4975 = vperm.slane %v4699, %v3220
    %v4976 = vsel %vm3222, %v4975, %v4974
    %v4977 = vperm.slane %v4700, %v3224
    %v4978 = vsel %vm3226, %v4977, %v4976
    %v4979 = vperm.slane %v4701, %v3228
    %v4980 = vsel %vm3230, %v4979, %v4978
    %v4981 = vperm.slane %v4702, %v3232
    %v4982 = vsel %vm3234, %v4981, %v4980
    %v4983 = vperm.slane %v4703, %v3236
    %v4984 = vsel %vm3238, %v4983, %v4982
    %v4985 = vperm.slane %v4704, %v3240
    %v4986 = vsel %vm3242, %v4985, %v4984
    %v4987 = vperm.slane %v4705, %v3244
    %v4988 = vsel %vm3246, %v4987, %v4986
    %v4989 = vperm.slane %v4706, %v3248
    %v4990 = vsel %vm3250, %v4989, %v4988
    %v4991 = vperm.slane %v4707, %v3252
    %v4992 = vsel %vm3254, %v4991, %v4990
    %v4993 = vperm.slane %v4708, %v3256
    %v4994 = vsel %vm3258, %v4993, %v4992
    %v4995 = vperm.slane %v4709, %v3198
    %v4996 = vperm.slane %v4710, %v3200
    %v4997 = vsel %vm3202, %v4996, %v4995
    %v4998 = vperm.slane %v4711, %v3204
    %v4999 = vsel %vm3206, %v4998, %v4997
    %v5000 = vperm.slane %v4712, %v3208
    %v5001 = vsel %vm3210, %v5000, %v4999
    %v5002 = vperm.slane %v4713, %v3212
    %v5003 = vsel %vm3214, %v5002, %v5001
    %v5004 = vperm.slane %v4714, %v3216
    %v5005 = vsel %vm3218, %v5004, %v5003
    %v5006 = vperm.slane %v4715, %v3220
    %v5007 = vsel %vm3222, %v5006, %v5005
    %v5008 = vperm.slane %v4716, %v3224
    %v5009 = vsel %vm3226, %v5008, %v5007
    %v5010 = vperm.slane %v4717, %v3228
    %v5011 = vsel %vm3230, %v5010, %v5009
    %v5012 = vperm.slane %v4718, %v3232
    %v5013 = vsel %vm3234, %v5012, %v5011
    %v5014 = vperm.slane %v4719, %v3236
    %v5015 = vsel %vm3238, %v5014, %v5013
    %v5016 = vperm.slane %v4720, %v3240
    %v5017 = vsel %vm3242, %v5016, %v5015
    %v5018 = vperm.slane %v4721, %v3244
    %v5019 = vsel %vm3246, %v5018, %v5017
    %v5020 = vperm.slane %v4722, %v3248
    %v5021 = vsel %vm3250, %v5020, %v5019
    %v5022 = vperm.slane %v4723, %v3252
    %v5023 = vsel %vm3254, %v5022, %v5021
    %v5024 = vperm.slane %v4724, %v3256
    %v5025 = vsel %vm3258, %v5024, %v5023
    %v5026 = vperm.slane %v4725, %v3198
    %v5027 = vperm.slane %v4726, %v3200
    %v5028 = vsel %vm3202, %v5027, %v5026
    %v5029 = vperm.slane %v4727, %v3204
    %v5030 = vsel %vm3206, %v5029, %v5028
    %v5031 = vperm.slane %v4728, %v3208
    %v5032 = vsel %vm3210, %v5031, %v5030
    %v5033 = vperm.slane %v4729, %v3212
    %v5034 = vsel %vm3214, %v5033, %v5032
    %v5035 = vperm.slane %v4730, %v3216
    %v5036 = vsel %vm3218, %v5035, %v5034
    %v5037 = vperm.slane %v4731, %v3220
    %v5038 = vsel %vm3222, %v5037, %v5036
    %v5039 = vperm.slane %v4732, %v3224
    %v5040 = vsel %vm3226, %v5039, %v5038
    %v5041 = vperm.slane %v4733, %v3228
    %v5042 = vsel %vm3230, %v5041, %v5040
    %v5043 = vperm.slane %v4734, %v3232
    %v5044 = vsel %vm3234, %v5043, %v5042
    %v5045 = vperm.slane %v4735, %v3236
    %v5046 = vsel %vm3238, %v5045, %v5044
    %v5047 = vperm.slane %v4736, %v3240
    %v5048 = vsel %vm3242, %v5047, %v5046
    %v5049 = vperm.slane %v4737, %v3244
    %v5050 = vsel %vm3246, %v5049, %v5048
    %v5051 = vperm.slane %v4738, %v3248
    %v5052 = vsel %vm3250, %v5051, %v5050
    %v5053 = vperm.slane %v4739, %v3252
    %v5054 = vsel %vm3254, %v5053, %v5052
    %v5055 = vperm.slane %v4740, %v3256
    %v5056 = vsel %vm3258, %v5055, %v5054
    %v5057 = vperm.slane %v4741, %v3198
    %v5058 = vperm.slane %v4742, %v3200
    %v5059 = vsel %vm3202, %v5058, %v5057
    %v5060 = vperm.slane %v4743, %v3204
    %v5061 = vsel %vm3206, %v5060, %v5059
    %v5062 = vperm.slane %v4744, %v3208
    %v5063 = vsel %vm3210, %v5062, %v5061
    %v5064 = vperm.slane %v4745, %v3212
    %v5065 = vsel %vm3214, %v5064, %v5063
    %v5066 = vperm.slane %v4746, %v3216
    %v5067 = vsel %vm3218, %v5066, %v5065
    %v5068 = vperm.slane %v4747, %v3220
    %v5069 = vsel %vm3222, %v5068, %v5067
    %v5070 = vperm.slane %v4748, %v3224
    %v5071 = vsel %vm3226, %v5070, %v5069
    %v5072 = vperm.slane %v4749, %v3228
    %v5073 = vsel %vm3230, %v5072, %v5071
    %v5074 = vperm.slane %v4750, %v3232
    %v5075 = vsel %vm3234, %v5074, %v5073
    %v5076 = vperm.slane %v4751, %v3236
    %v5077 = vsel %vm3238, %v5076, %v5075
    %v5078 = vperm.slane %v4752, %v3240
    %v5079 = vsel %vm3242, %v5078, %v5077
    %v5080 = vperm.slane %v4753, %v3244
    %v5081 = vsel %vm3246, %v5080, %v5079
    %v5082 = vperm.slane %v4754, %v3248
    %v5083 = vsel %vm3250, %v5082, %v5081
    %v5084 = vperm.slane %v4755, %v3252
    %v5085 = vsel %vm3254, %v5084, %v5083
    %v5086 = vperm.slane %v4756, %v3256
    %v5087 = vsel %vm3258, %v5086, %v5085
    %v5088 = vperm.slane %v4757, %v3198
    %v5089 = vperm.slane %v4758, %v3200
    %v5090 = vsel %vm3202, %v5089, %v5088
    %v5091 = vperm.slane %v4759, %v3204
    %v5092 = vsel %vm3206, %v5091, %v5090
    %v5093 = vperm.slane %v4760, %v3208
    %v5094 = vsel %vm3210, %v5093, %v5092
    %v5095 = vperm.slane %v4761, %v3212
    %v5096 = vsel %vm3214, %v5095, %v5094
    %v5097 = vperm.slane %v4762, %v3216
    %v5098 = vsel %vm3218, %v5097, %v5096
    %v5099 = vperm.slane %v4763, %v3220
    %v5100 = vsel %vm3222, %v5099, %v5098
    %v5101 = vperm.slane %v4764, %v3224
    %v5102 = vsel %vm3226, %v5101, %v5100
    %v5103 = vperm.slane %v4765, %v3228
    %v5104 = vsel %vm3230, %v5103, %v5102
    %v5105 = vperm.slane %v4766, %v3232
    %v5106 = vsel %vm3234, %v5105, %v5104
    %v5107 = vperm.slane %v4767, %v3236
    %v5108 = vsel %vm3238, %v5107, %v5106
    %v5109 = vperm.slane %v4768, %v3240
    %v5110 = vsel %vm3242, %v5109, %v5108
    %v5111 = vperm.slane %v4769, %v3244
    %v5112 = vsel %vm3246, %v5111, %v5110
    %v5113 = vperm.slane %v4770, %v3248
    %v5114 = vsel %vm3250, %v5113, %v5112
    %v5115 = vperm.slane %v4771, %v3252
    %v5116 = vsel %vm3254, %v5115, %v5114
    %v5117 = vperm.slane %v4772, %v3256
    %v5118 = vsel %vm3258, %v5117, %v5116
    %v5119 = vperm.slane %v4773, %v3198
    %v5120 = vperm.slane %v4774, %v3200
    %v5121 = vsel %vm3202, %v5120, %v5119
    %v5122 = vperm.slane %v4775, %v3204
    %v5123 = vsel %vm3206, %v5122, %v5121
    %v5124 = vperm.slane %v4776, %v3208
    %v5125 = vsel %vm3210, %v5124, %v5123
    %v5126 = vperm.slane %v4777, %v3212
    %v5127 = vsel %vm3214, %v5126, %v5125
    %v5128 = vperm.slane %v4778, %v3216
    %v5129 = vsel %vm3218, %v5128, %v5127
    %v5130 = vperm.slane %v4779, %v3220
    %v5131 = vsel %vm3222, %v5130, %v5129
    %v5132 = vperm.slane %v4780, %v3224
    %v5133 = vsel %vm3226, %v5132, %v5131
    %v5134 = vperm.slane %v4781, %v3228
    %v5135 = vsel %vm3230, %v5134, %v5133
    %v5136 = vperm.slane %v4782, %v3232
    %v5137 = vsel %vm3234, %v5136, %v5135
    %v5138 = vperm.slane %v4783, %v3236
    %v5139 = vsel %vm3238, %v5138, %v5137
    %v5140 = vperm.slane %v4784, %v3240
    %v5141 = vsel %vm3242, %v5140, %v5139
    %v5142 = vperm.slane %v4785, %v3244
    %v5143 = vsel %vm3246, %v5142, %v5141
    %v5144 = vperm.slane %v4786, %v3248
    %v5145 = vsel %vm3250, %v5144, %v5143
    %v5146 = vperm.slane %v4787, %v3252
    %v5147 = vsel %vm3254, %v5146, %v5145
    %v5148 = vperm.slane %v4788, %v3256
    %v5149 = vsel %vm3258, %v5148, %v5147
    %v5150 = vperm.slane %v4789, %v3198
    %v5151 = vperm.slane %v4790, %v3200
    %v5152 = vsel %vm3202, %v5151, %v5150
    %v5153 = vperm.slane %v4791, %v3204
    %v5154 = vsel %vm3206, %v5153, %v5152
    %v5155 = vperm.slane %v4792, %v3208
    %v5156 = vsel %vm3210, %v5155, %v5154
    %v5157 = vperm.slane %v4793, %v3212
    %v5158 = vsel %vm3214, %v5157, %v5156
    %v5159 = vperm.slane %v4794, %v3216
    %v5160 = vsel %vm3218, %v5159, %v5158
    %v5161 = vperm.slane %v4795, %v3220
    %v5162 = vsel %vm3222, %v5161, %v5160
    %v5163 = vperm.slane %v4796, %v3224
    %v5164 = vsel %vm3226, %v5163, %v5162
    %v5165 = vperm.slane %v4797, %v3228
    %v5166 = vsel %vm3230, %v5165, %v5164
    %v5167 = vperm.slane %v4798, %v3232
    %v5168 = vsel %vm3234, %v5167, %v5166
    %v5169 = vperm.slane %v4799, %v3236
    %v5170 = vsel %vm3238, %v5169, %v5168
    %v5171 = vperm.slane %v4800, %v3240
    %v5172 = vsel %vm3242, %v5171, %v5170
    %v5173 = vperm.slane %v4801, %v3244
    %v5174 = vsel %vm3246, %v5173, %v5172
    %v5175 = vperm.slane %v4802, %v3248
    %v5176 = vsel %vm3250, %v5175, %v5174
    %v5177 = vperm.slane %v4803, %v3252
    %v5178 = vsel %vm3254, %v5177, %v5176
    %v5179 = vperm.slane %v4804, %v3256
    %v5180 = vsel %vm3258, %v5179, %v5178
    %v5181 = vperm.slane %v4805, %v3198
    %v5182 = vperm.slane %v4806, %v3200
    %v5183 = vsel %vm3202, %v5182, %v5181
    %v5184 = vperm.slane %v4807, %v3204
    %v5185 = vsel %vm3206, %v5184, %v5183
    %v5186 = vperm.slane %v4808, %v3208
    %v5187 = vsel %vm3210, %v5186, %v5185
    %v5188 = vperm.slane %v4809, %v3212
    %v5189 = vsel %vm3214, %v5188, %v5187
    %v5190 = vperm.slane %v4810, %v3216
    %v5191 = vsel %vm3218, %v5190, %v5189
    %v5192 = vperm.slane %v4811, %v3220
    %v5193 = vsel %vm3222, %v5192, %v5191
    %v5194 = vperm.slane %v4812, %v3224
    %v5195 = vsel %vm3226, %v5194, %v5193
    %v5196 = vperm.slane %v4813, %v3228
    %v5197 = vsel %vm3230, %v5196, %v5195
    %v5198 = vperm.slane %v4814, %v3232
    %v5199 = vsel %vm3234, %v5198, %v5197
    %v5200 = vperm.slane %v4815, %v3236
    %v5201 = vsel %vm3238, %v5200, %v5199
    %v5202 = vperm.slane %v4816, %v3240
    %v5203 = vsel %vm3242, %v5202, %v5201
    %v5204 = vperm.slane %v4817, %v3244
    %v5205 = vsel %vm3246, %v5204, %v5203
    %v5206 = vperm.slane %v4818, %v3248
    %v5207 = vsel %vm3250, %v5206, %v5205
    %v5208 = vperm.slane %v4819, %v3252
    %v5209 = vsel %vm3254, %v5208, %v5207
    %v5210 = vperm.slane %v4820, %v3256
    %v5211 = vsel %vm3258, %v5210, %v5209
    %v5212 = vperm.slane %v4821, %v3198
    %v5213 = vperm.slane %v4822, %v3200
    %v5214 = vsel %vm3202, %v5213, %v5212
    %v5215 = vperm.slane %v4823, %v3204
    %v5216 = vsel %vm3206, %v5215, %v5214
    %v5217 = vperm.slane %v4824, %v3208
    %v5218 = vsel %vm3210, %v5217, %v5216
    %v5219 = vperm.slane %v4825, %v3212
    %v5220 = vsel %vm3214, %v5219, %v5218
    %v5221 = vperm.slane %v4826, %v3216
    %v5222 = vsel %vm3218, %v5221, %v5220
    %v5223 = vperm.slane %v4827, %v3220
    %v5224 = vsel %vm3222, %v5223, %v5222
    %v5225 = vperm.slane %v4828, %v3224
    %v5226 = vsel %vm3226, %v5225, %v5224
    %v5227 = vperm.slane %v4829, %v3228
    %v5228 = vsel %vm3230, %v5227, %v5226
    %v5229 = vperm.slane %v4830, %v3232
    %v5230 = vsel %vm3234, %v5229, %v5228
    %v5231 = vperm.slane %v4831, %v3236
    %v5232 = vsel %vm3238, %v5231, %v5230
    %v5233 = vperm.slane %v4832, %v3240
    %v5234 = vsel %vm3242, %v5233, %v5232
    %v5235 = vperm.slane %v4833, %v3244
    %v5236 = vsel %vm3246, %v5235, %v5234
    %v5237 = vperm.slane %v4834, %v3248
    %v5238 = vsel %vm3250, %v5237, %v5236
    %v5239 = vperm.slane %v4835, %v3252
    %v5240 = vsel %vm3254, %v5239, %v5238
    %v5241 = vperm.slane %v4836, %v3256
    %v5242 = vsel %vm3258, %v5241, %v5240
    %v5243 = vperm.slane %v4837, %v3198
    %v5244 = vperm.slane %v4838, %v3200
    %v5245 = vsel %vm3202, %v5244, %v5243
    %v5246 = vperm.slane %v4839, %v3204
    %v5247 = vsel %vm3206, %v5246, %v5245
    %v5248 = vperm.slane %v4840, %v3208
    %v5249 = vsel %vm3210, %v5248, %v5247
    %v5250 = vperm.slane %v4841, %v3212
    %v5251 = vsel %vm3214, %v5250, %v5249
    %v5252 = vperm.slane %v4842, %v3216
    %v5253 = vsel %vm3218, %v5252, %v5251
    %v5254 = vperm.slane %v4843, %v3220
    %v5255 = vsel %vm3222, %v5254, %v5253
    %v5256 = vperm.slane %v4844, %v3224
    %v5257 = vsel %vm3226, %v5256, %v5255
    %v5258 = vperm.slane %v4845, %v3228
    %v5259 = vsel %vm3230, %v5258, %v5257
    %v5260 = vperm.slane %v4846, %v3232
    %v5261 = vsel %vm3234, %v5260, %v5259
    %v5262 = vperm.slane %v4847, %v3236
    %v5263 = vsel %vm3238, %v5262, %v5261
    %v5264 = vperm.slane %v4848, %v3240
    %v5265 = vsel %vm3242, %v5264, %v5263
    %v5266 = vperm.slane %v4849, %v3244
    %v5267 = vsel %vm3246, %v5266, %v5265
    %v5268 = vperm.slane %v4850, %v3248
    %v5269 = vsel %vm3250, %v5268, %v5267
    %v5270 = vperm.slane %v4851, %v3252
    %v5271 = vsel %vm3254, %v5270, %v5269
    %v5272 = vperm.slane %v4852, %v3256
    %v5273 = vsel %vm3258, %v5272, %v5271
    %v5274 = vperm.slane %v4853, %v3198
    %v5275 = vperm.slane %v4854, %v3200
    %v5276 = vsel %vm3202, %v5275, %v5274
    %v5277 = vperm.slane %v4855, %v3204
    %v5278 = vsel %vm3206, %v5277, %v5276
    %v5279 = vperm.slane %v4856, %v3208
    %v5280 = vsel %vm3210, %v5279, %v5278
    %v5281 = vperm.slane %v4857, %v3212
    %v5282 = vsel %vm3214, %v5281, %v5280
    %v5283 = vperm.slane %v4858, %v3216
    %v5284 = vsel %vm3218, %v5283, %v5282
    %v5285 = vperm.slane %v4859, %v3220
    %v5286 = vsel %vm3222, %v5285, %v5284
    %v5287 = vperm.slane %v4860, %v3224
    %v5288 = vsel %vm3226, %v5287, %v5286
    %v5289 = vperm.slane %v4861, %v3228
    %v5290 = vsel %vm3230, %v5289, %v5288
    %v5291 = vperm.slane %v4862, %v3232
    %v5292 = vsel %vm3234, %v5291, %v5290
    %v5293 = vperm.slane %v4863, %v3236
    %v5294 = vsel %vm3238, %v5293, %v5292
    %v5295 = vperm.slane %v4864, %v3240
    %v5296 = vsel %vm3242, %v5295, %v5294
    %v5297 = vperm.slane %v4865, %v3244
    %v5298 = vsel %vm3246, %v5297, %v5296
    %v5299 = vperm.slane %v4866, %v3248
    %v5300 = vsel %vm3250, %v5299, %v5298
    %v5301 = vperm.slane %v4867, %v3252
    %v5302 = vsel %vm3254, %v5301, %v5300
    %v5303 = vperm.slane %v4868, %v3256
    %v5304 = vsel %vm3258, %v5303, %v5302
    %v5305 = vperm.slane %v4869, %v3198
    %v5306 = vperm.slane %v4870, %v3200
    %v5307 = vsel %vm3202, %v5306, %v5305
    %v5308 = vperm.slane %v4871, %v3204
    %v5309 = vsel %vm3206, %v5308, %v5307
    %v5310 = vperm.slane %v4872, %v3208
    %v5311 = vsel %vm3210, %v5310, %v5309
    %v5312 = vperm.slane %v4873, %v3212
    %v5313 = vsel %vm3214, %v5312, %v5311
    %v5314 = vperm.slane %v4874, %v3216
    %v5315 = vsel %vm3218, %v5314, %v5313
    %v5316 = vperm.slane %v4875, %v3220
    %v5317 = vsel %vm3222, %v5316, %v5315
    %v5318 = vperm.slane %v4876, %v3224
    %v5319 = vsel %vm3226, %v5318, %v5317
    %v5320 = vperm.slane %v4877, %v3228
    %v5321 = vsel %vm3230, %v5320, %v5319
    %v5322 = vperm.slane %v4878, %v3232
    %v5323 = vsel %vm3234, %v5322, %v5321
    %v5324 = vperm.slane %v4879, %v3236
    %v5325 = vsel %vm3238, %v5324, %v5323
    %v5326 = vperm.slane %v4880, %v3240
    %v5327 = vsel %vm3242, %v5326, %v5325
    %v5328 = vperm.slane %v4881, %v3244
    %v5329 = vsel %vm3246, %v5328, %v5327
    %v5330 = vperm.slane %v4882, %v3248
    %v5331 = vsel %vm3250, %v5330, %v5329
    %v5332 = vperm.slane %v4883, %v3252
    %v5333 = vsel %vm3254, %v5332, %v5331
    %v5334 = vperm.slane %v4884, %v3256
    %v5335 = vsel %vm3258, %v5334, %v5333
    %v5336 = vperm.slane %v4885, %v3198
    %v5337 = vperm.slane %v4886, %v3200
    %v5338 = vsel %vm3202, %v5337, %v5336
    %v5339 = vperm.slane %v4887, %v3204
    %v5340 = vsel %vm3206, %v5339, %v5338
    %v5341 = vperm.slane %v4888, %v3208
    %v5342 = vsel %vm3210, %v5341, %v5340
    %v5343 = vperm.slane %v4889, %v3212
    %v5344 = vsel %vm3214, %v5343, %v5342
    %v5345 = vperm.slane %v4890, %v3216
    %v5346 = vsel %vm3218, %v5345, %v5344
    %v5347 = vperm.slane %v4891, %v3220
    %v5348 = vsel %vm3222, %v5347, %v5346
    %v5349 = vperm.slane %v4892, %v3224
    %v5350 = vsel %vm3226, %v5349, %v5348
    %v5351 = vperm.slane %v4893, %v3228
    %v5352 = vsel %vm3230, %v5351, %v5350
    %v5353 = vperm.slane %v4894, %v3232
    %v5354 = vsel %vm3234, %v5353, %v5352
    %v5355 = vperm.slane %v4895, %v3236
    %v5356 = vsel %vm3238, %v5355, %v5354
    %v5357 = vperm.slane %v4896, %v3240
    %v5358 = vsel %vm3242, %v5357, %v5356
    %v5359 = vperm.slane %v4897, %v3244
    %v5360 = vsel %vm3246, %v5359, %v5358
    %v5361 = vperm.slane %v4898, %v3248
    %v5362 = vsel %vm3250, %v5361, %v5360
    %v5363 = vperm.slane %v4899, %v3252
    %v5364 = vsel %vm3254, %v5363, %v5362
    %v5365 = vperm.slane %v4900, %v3256
    %v5366 = vsel %vm3258, %v5365, %v5364
    %v5367 = vperm.slane %v4901, %v3198
    %v5368 = vperm.slane %v4902, %v3200
    %v5369 = vsel %vm3202, %v5368, %v5367
    %v5370 = vperm.slane %v4903, %v3204
    %v5371 = vsel %vm3206, %v5370, %v5369
    %v5372 = vperm.slane %v4904, %v3208
    %v5373 = vsel %vm3210, %v5372, %v5371
    %v5374 = vperm.slane %v4905, %v3212
    %v5375 = vsel %vm3214, %v5374, %v5373
    %v5376 = vperm.slane %v4906, %v3216
    %v5377 = vsel %vm3218, %v5376, %v5375
    %v5378 = vperm.slane %v4907, %v3220
    %v5379 = vsel %vm3222, %v5378, %v5377
    %v5380 = vperm.slane %v4908, %v3224
    %v5381 = vsel %vm3226, %v5380, %v5379
    %v5382 = vperm.slane %v4909, %v3228
    %v5383 = vsel %vm3230, %v5382, %v5381
    %v5384 = vperm.slane %v4910, %v3232
    %v5385 = vsel %vm3234, %v5384, %v5383
    %v5386 = vperm.slane %v4911, %v3236
    %v5387 = vsel %vm3238, %v5386, %v5385
    %v5388 = vperm.slane %v4912, %v3240
    %v5389 = vsel %vm3242, %v5388, %v5387
    %v5390 = vperm.slane %v4913, %v3244
    %v5391 = vsel %vm3246, %v5390, %v5389
    %v5392 = vperm.slane %v4914, %v3248
    %v5393 = vsel %vm3250, %v5392, %v5391
    %v5394 = vperm.slane %v4915, %v3252
    %v5395 = vsel %vm3254, %v5394, %v5393
    %v5396 = vperm.slane %v4916, %v3256
    %v5397 = vsel %vm3258, %v5396, %v5395
    %v5398 = vperm.slane %v4917, %v3198
    %v5399 = vperm.slane %v4918, %v3200
    %v5400 = vsel %vm3202, %v5399, %v5398
    %v5401 = vperm.slane %v4919, %v3204
    %v5402 = vsel %vm3206, %v5401, %v5400
    %v5403 = vperm.slane %v4920, %v3208
    %v5404 = vsel %vm3210, %v5403, %v5402
    %v5405 = vperm.slane %v4921, %v3212
    %v5406 = vsel %vm3214, %v5405, %v5404
    %v5407 = vperm.slane %v4922, %v3216
    %v5408 = vsel %vm3218, %v5407, %v5406
    %v5409 = vperm.slane %v4923, %v3220
    %v5410 = vsel %vm3222, %v5409, %v5408
    %v5411 = vperm.slane %v4924, %v3224
    %v5412 = vsel %vm3226, %v5411, %v5410
    %v5413 = vperm.slane %v4925, %v3228
    %v5414 = vsel %vm3230, %v5413, %v5412
    %v5415 = vperm.slane %v4926, %v3232
    %v5416 = vsel %vm3234, %v5415, %v5414
    %v5417 = vperm.slane %v4927, %v3236
    %v5418 = vsel %vm3238, %v5417, %v5416
    %v5419 = vperm.slane %v4928, %v3240
    %v5420 = vsel %vm3242, %v5419, %v5418
    %v5421 = vperm.slane %v4929, %v3244
    %v5422 = vsel %vm3246, %v5421, %v5420
    %v5423 = vperm.slane %v4930, %v3248
    %v5424 = vsel %vm3250, %v5423, %v5422
    %v5425 = vperm.slane %v4931, %v3252
    %v5426 = vsel %vm3254, %v5425, %v5424
    %v5427 = vperm.slane %v4932, %v3256
    %v5428 = vsel %vm3258, %v5427, %v5426
    %v5429 = vsel %vm3725, %v5087, %v4963
    %v5430 = vsel %vm3727, %v5211, %v5429
    %v5431 = vsel %vm3729, %v5335, %v5430
    %v5432 = vsel %vm3725, %v5118, %v4994
    %v5433 = vsel %vm3727, %v5242, %v5432
    %v5434 = vsel %vm3729, %v5366, %v5433
    %v5435 = vsel %vm3725, %v5149, %v5025
    %v5436 = vsel %vm3727, %v5273, %v5435
    %v5437 = vsel %vm3729, %v5397, %v5436
    %v5438 = vsel %vm3725, %v5180, %v5056
    %v5439 = vsel %vm3727, %v5304, %v5438
    %v5440 = vsel %vm3729, %v5428, %v5439
    %v5441 = vpack.c.b16 %v5431, %v5431
    %v5442 = vpack.c.b16 %v5434, %v5434
    %v5443 = vpack.c.b16 %v5437, %v5437
    %v5444 = vpack.c.b16 %v5440, %v5440
    %v5513 = vunpack.c.l.b16 %v4479
    %v5514 = vunpack.c.h.b16 %v4479
    %v5515 = vunpack.c.l.b16 %v4480
    %v5516 = vunpack.c.h.b16 %v4480
    %v5517 = vunpack.c.l.b16 %v4481
    %v5518 = vunpack.c.h.b16 %v4481
    %v5519 = vunpack.c.l.b16 %v4482
    %v5520 = vunpack.c.h.b16 %v4482
    %v5521 = vunpack.c.l.b16 %v4483
    %v5522 = vunpack.c.h.b16 %v4483
    %v5523 = vunpack.c.l.b16 %v4484
    %v5524 = vunpack.c.h.b16 %v4484
    %v5525 = vunpack.c.l.b16 %v4485
    %v5526 = vunpack.c.h.b16 %v4485
    %v5527 = vunpack.c.l.b16 %v4486
    %v5528 = vunpack.c.h.b16 %v4486
    %v5529 = vunpack.c.l.b16 %v4487
    %v5530 = vunpack.c.h.b16 %v4487
    %v5531 = vunpack.c.l.b16 %v4488
    %v5532 = vunpack.c.h.b16 %v4488
    %v5533 = vunpack.c.l.b16 %v4489
    %v5534 = vunpack.c.h.b16 %v4489
    %v5535 = vunpack.c.l.b16 %v4490
    %v5536 = vunpack.c.h.b16 %v4490
    %v5537 = vunpack.c.l.b16 %v4491
    %v5538 = vunpack.c.h.b16 %v4491
    %v5539 = vunpack.c.l.b16 %v4492
    %v5540 = vunpack.c.h.b16 %v4492
    %v5541 = vunpack.c.l.b16 %v4493
    %v5542 = vunpack.c.h.b16 %v4493
    %v5543 = vunpack.c.l.b16 %v4494
    %v5544 = vunpack.c.h.b16 %v4494
    %v5545 = vunpack.c.l.b16 %v4495
    %v5546 = vunpack.c.h.b16 %v4495
    %v5547 = vunpack.c.l.b16 %v4496
    %v5548 = vunpack.c.h.b16 %v4496
    %v5549 = vunpack.c.l.b16 %v4497
    %v5550 = vunpack.c.h.b16 %v4497
    %v5551 = vunpack.c.l.b16 %v4498
    %v5552 = vunpack.c.h.b16 %v4498
    %v5553 = vunpack.c.l.b16 %v4499
    %v5554 = vunpack.c.h.b16 %v4499
    %v5555 = vunpack.c.l.b16 %v4500
    %v5556 = vunpack.c.h.b16 %v4500
    %v5557 = vunpack.c.l.b16 %v4501
    %v5558 = vunpack.c.h.b16 %v4501
    %v5559 = vunpack.c.l.b16 %v4502
    %v5560 = vunpack.c.h.b16 %v4502
    %v5561 = vunpack.c.l.b16 %v4503
    %v5562 = vunpack.c.h.b16 %v4503
    %v5563 = vunpack.c.l.b16 %v4504
    %v5564 = vunpack.c.h.b16 %v4504
    %v5565 = vunpack.c.l.b16 %v4505
    %v5566 = vunpack.c.h.b16 %v4505
    %v5567 = vunpack.c.l.b16 %v4506
    %v5568 = vunpack.c.h.b16 %v4506
    %v5569 = vunpack.c.l.b16 %v4507
    %v5570 = vunpack.c.h.b16 %v4507
    %v5571 = vunpack.c.l.b16 %v4508
    %v5572 = vunpack.c.h.b16 %v4508
    %v5573 = vunpack.c.l.b16 %v4509
    %v5574 = vunpack.c.h.b16 %v4509
    %v5575 = vunpack.c.l.b16 %v4510
    %v5576 = vunpack.c.h.b16 %v4510
    %v5577 = vunpack.c.l.b16 %v4511
    %v5578 = vunpack.c.h.b16 %v4511
    %v5579 = vunpack.c.l.b16 %v4512
    %v5580 = vunpack.c.h.b16 %v4512
    %v5581 = vunpack.c.l.b16 %v4513
    %v5582 = vunpack.c.h.b16 %v4513
    %v5583 = vunpack.c.l.b16 %v4514
    %v5584 = vunpack.c.h.b16 %v4514
    %v5585 = vunpack.c.l.b16 %v4515
    %v5586 = vunpack.c.h.b16 %v4515
    %v5587 = vunpack.c.l.b16 %v4516
    %v5588 = vunpack.c.h.b16 %v4516
    %v5589 = vunpack.c.l.b16 %v4517
    %v5590 = vunpack.c.h.b16 %v4517
    %v5591 = vunpack.c.l.b16 %v4518
    %v5592 = vunpack.c.h.b16 %v4518
    %v5593 = vunpack.c.l.b16 %v4519
    %v5594 = vunpack.c.h.b16 %v4519
    %v5595 = vunpack.c.l.b16 %v4520
    %v5596 = vunpack.c.h.b16 %v4520
    %v5597 = vunpack.c.l.b16 %v4521
    %v5598 = vunpack.c.h.b16 %v4521
    %v5599 = vunpack.c.l.b16 %v4522
    %v5600 = vunpack.c.h.b16 %v4522
    %v5601 = vunpack.c.l.b16 %v4523
    %v5602 = vunpack.c.h.b16 %v4523
    %v5603 = vunpack.c.l.b16 %v4524
    %v5604 = vunpack.c.h.b16 %v4524
    %v5605 = vunpack.c.l.b16 %v4525
    %v5606 = vunpack.c.h.b16 %v4525
    %v5607 = vunpack.c.l.b16 %v4526
    %v5608 = vunpack.c.h.b16 %v4526
    %v5609 = vunpack.c.l.b16 %v4527
    %v5610 = vunpack.c.h.b16 %v4527
    %v5611 = vunpack.c.l.b16 %v4528
    %v5612 = vunpack.c.h.b16 %v4528
    %v5613 = vunpack.c.l.b16 %v4529
    %v5614 = vunpack.c.h.b16 %v4529
    %v5615 = vunpack.c.l.b16 %v4530
    %v5616 = vunpack.c.h.b16 %v4530
    %v5617 = vunpack.c.l.b16 %v4531
    %v5618 = vunpack.c.h.b16 %v4531
    %v5619 = vunpack.c.l.b16 %v4532
    %v5620 = vunpack.c.h.b16 %v4532
    %v5621 = vunpack.c.l.b16 %v4533
    %v5622 = vunpack.c.h.b16 %v4533
    %v5623 = vunpack.c.l.b16 %v4534
    %v5624 = vunpack.c.h.b16 %v4534
    %v5625 = vunpack.c.l.b16 %v4535
    %v5626 = vunpack.c.h.b16 %v4535
    %v5627 = vunpack.c.l.b16 %v4536
    %v5628 = vunpack.c.h.b16 %v4536
    %v5629 = vunpack.c.l.b16 %v4537
    %v5630 = vunpack.c.h.b16 %v4537
    %v5631 = vunpack.c.l.b16 %v4538
    %v5632 = vunpack.c.h.b16 %v4538
    %v5633 = vunpack.c.l.b16 %v4539
    %v5634 = vunpack.c.h.b16 %v4539
    %v5635 = vunpack.c.l.b16 %v4540
    %v5636 = vunpack.c.h.b16 %v4540
    %v5637 = vunpack.c.l.b16 %v4541
    %v5638 = vunpack.c.h.b16 %v4541
    %v5639 = vunpack.c.l.b16 %v4542
    %v5640 = vunpack.c.h.b16 %v4542
    %v5641 = vpack.c.b16 %v5515, %v5513
    %v5642 = vpack.c.b16 %v5516, %v5514
    %v5643 = vpack.c.b16 %v5519, %v5517
    %v5644 = vpack.c.b16 %v5520, %v5518
    %v5645 = vpack.c.b16 %v5523, %v5521
    %v5646 = vpack.c.b16 %v5524, %v5522
    %v5647 = vpack.c.b16 %v5527, %v5525
    %v5648 = vpack.c.b16 %v5528, %v5526
    %v5649 = vpack.c.b16 %v5531, %v5529
    %v5650 = vpack.c.b16 %v5532, %v5530
    %v5651 = vpack.c.b16 %v5535, %v5533
    %v5652 = vpack.c.b16 %v5536, %v5534
    %v5653 = vpack.c.b16 %v5539, %v5537
    %v5654 = vpack.c.b16 %v5540, %v5538
    %v5655 = vpack.c.b16 %v5543, %v5541
    %v5656 = vpack.c.b16 %v5544, %v5542
    %v5657 = vpack.c.b16 %v5547, %v5545
    %v5658 = vpack.c.b16 %v5548, %v5546
    %v5659 = vpack.c.b16 %v5551, %v5549
    %v5660 = vpack.c.b16 %v5552, %v5550
    %v5661 = vpack.c.b16 %v5555, %v5553
    %v5662 = vpack.c.b16 %v5556, %v5554
    %v5663 = vpack.c.b16 %v5559, %v5557
    %v5664 = vpack.c.b16 %v5560, %v5558
    %v5665 = vpack.c.b16 %v5563, %v5561
    %v5666 = vpack.c.b16 %v5564, %v5562
    %v5667 = vpack.c.b16 %v5567, %v5565
    %v5668 = vpack.c.b16 %v5568, %v5566
    %v5669 = vpack.c.b16 %v5571, %v5569
    %v5670 = vpack.c.b16 %v5572, %v5570
    %v5671 = vpack.c.b16 %v5575, %v5573
    %v5672 = vpack.c.b16 %v5576, %v5574
    %v5673 = vpack.c.b16 %v5579, %v5577
    %v5674 = vpack.c.b16 %v5580, %v5578
    %v5675 = vpack.c.b16 %v5583, %v5581
    %v5676 = vpack.c.b16 %v5584, %v5582
    %v5677 = vpack.c.b16 %v5587, %v5585
    %v5678 = vpack.c.b16 %v5588, %v5586
    %v5679 = vpack.c.b16 %v5591, %v5589
    %v5680 = vpack.c.b16 %v5592, %v5590
    %v5681 = vpack.c.b16 %v5595, %v5593
    %v5682 = vpack.c.b16 %v5596, %v5594
    %v5683 = vpack.c.b16 %v5599, %v5597
    %v5684 = vpack.c.b16 %v5600, %v5598
    %v5685 = vpack.c.b16 %v5603, %v5601
    %v5686 = vpack.c.b16 %v5604, %v5602
    %v5687 = vpack.c.b16 %v5607, %v5605
    %v5688 = vpack.c.b16 %v5608, %v5606
    %v5689 = vpack.c.b16 %v5611, %v5609
    %v5690 = vpack.c.b16 %v5612, %v5610
    %v5691 = vpack.c.b16 %v5615, %v5613
    %v5692 = vpack.c.b16 %v5616, %v5614
    %v5693 = vpack.c.b16 %v5619, %v5617
    %v5694 = vpack.c.b16 %v5620, %v5618
    %v5695 = vpack.c.b16 %v5623, %v5621
    %v5696 = vpack.c.b16 %v5624, %v5622
    %v5697 = vpack.c.b16 %v5627, %v5625
    %v5698 = vpack.c.b16 %v5628, %v5626
    %v5699 = vpack.c.b16 %v5631, %v5629
    %v5700 = vpack.c.b16 %v5632, %v5630
    %v5701 = vpack.c.b16 %v5635, %v5633
    %v5702 = vpack.c.b16 %v5636, %v5634
    %v5703 = vpack.c.b16 %v5639, %v5637
    %v5704 = vpack.c.b16 %v5640, %v5638
    %5769 = vmatpush.bf16.msra.mxu0 %v5655
    %5770 = vmatpush.bf16.msra.mxu0 %v5653
    %5771 = vmatpush.bf16.msra.mxu0 %v5651
    %5772 = vmatpush.bf16.msra.mxu0 %v5649
    %5773 = vmatpush.bf16.msra.mxu0 %v5647
    %5774 = vmatpush.bf16.msra.mxu0 %v5645
    %5775 = vmatpush.bf16.msra.mxu0 %v5643
    %5776 = vmatpush.bf16.msra.mxu0 %v5641
    %5777 = vmatmul.bf16.gmra.mxu0 %v5441
    %v5778 = vpop.f32.mrf.mxu0
    %v5779 = vadd.f32 %v4545, %v5778
    %v5780 = vpop.f32.mrf.mxu0
    %5781 = vdwg.mxu0
    %5782 = vmatpush.bf16.msra.mxu0 %v5671
    %5783 = vmatpush.bf16.msra.mxu0 %v5669
    %5784 = vmatpush.bf16.msra.mxu0 %v5667
    %5785 = vmatpush.bf16.msra.mxu0 %v5665
    %5786 = vmatpush.bf16.msra.mxu0 %v5663
    %5787 = vmatpush.bf16.msra.mxu0 %v5661
    %5788 = vmatpush.bf16.msra.mxu0 %v5659
    %5789 = vmatpush.bf16.msra.mxu0 %v5657
    %5790 = vmatmul.bf16.gmra.mxu0 %v5442
    %v5791 = vpop.f32.mrf.mxu0
    %v5792 = vadd.f32 %v5779, %v5791
    %v5793 = vpop.f32.mrf.mxu0
    %5794 = vdwg.mxu0
    %5795 = vmatpush.bf16.msra.mxu0 %v5687
    %5796 = vmatpush.bf16.msra.mxu0 %v5685
    %5797 = vmatpush.bf16.msra.mxu0 %v5683
    %5798 = vmatpush.bf16.msra.mxu0 %v5681
    %5799 = vmatpush.bf16.msra.mxu0 %v5679
    %5800 = vmatpush.bf16.msra.mxu0 %v5677
    %5801 = vmatpush.bf16.msra.mxu0 %v5675
    %5802 = vmatpush.bf16.msra.mxu0 %v5673
    %5803 = vmatmul.bf16.gmra.mxu0 %v5443
    %v5804 = vpop.f32.mrf.mxu0
    %v5805 = vadd.f32 %v5792, %v5804
    %v5806 = vpop.f32.mrf.mxu0
    %5807 = vdwg.mxu0
    %5808 = vmatpush.bf16.msra.mxu0 %v5703
    %5809 = vmatpush.bf16.msra.mxu0 %v5701
    %5810 = vmatpush.bf16.msra.mxu0 %v5699
    %5811 = vmatpush.bf16.msra.mxu0 %v5697
    %5812 = vmatpush.bf16.msra.mxu0 %v5695
    %5813 = vmatpush.bf16.msra.mxu0 %v5693
    %5814 = vmatpush.bf16.msra.mxu0 %v5691
    %5815 = vmatpush.bf16.msra.mxu0 %v5689
    %5816 = vmatmul.bf16.gmra.mxu0 %v5444
    %v5817 = vpop.f32.mrf.mxu0
    %v5818 = vadd.f32 %v5805, %v5817
    %v5819 = vpop.f32.mrf.mxu0
    %5820 = vdwg.mxu0
    %5821 = vmatpush.bf16.msra.mxu0 %v5656
    %5822 = vmatpush.bf16.msra.mxu0 %v5654
    %5823 = vmatpush.bf16.msra.mxu0 %v5652
    %5824 = vmatpush.bf16.msra.mxu0 %v5650
    %5825 = vmatpush.bf16.msra.mxu0 %v5648
    %5826 = vmatpush.bf16.msra.mxu0 %v5646
    %5827 = vmatpush.bf16.msra.mxu0 %v5644
    %5828 = vmatpush.bf16.msra.mxu0 %v5642
    %5829 = vmatmul.bf16.gmra.mxu0 %v5441
    %v5830 = vpop.f32.mrf.mxu0
    %v5831 = vadd.f32 %v4546, %v5830
    %v5832 = vpop.f32.mrf.mxu0
    %5833 = vdwg.mxu0
    %5834 = vmatpush.bf16.msra.mxu0 %v5672
    %5835 = vmatpush.bf16.msra.mxu0 %v5670
    %5836 = vmatpush.bf16.msra.mxu0 %v5668
    %5837 = vmatpush.bf16.msra.mxu0 %v5666
    %5838 = vmatpush.bf16.msra.mxu0 %v5664
    %5839 = vmatpush.bf16.msra.mxu0 %v5662
    %5840 = vmatpush.bf16.msra.mxu0 %v5660
    %5841 = vmatpush.bf16.msra.mxu0 %v5658
    %5842 = vmatmul.bf16.gmra.mxu0 %v5442
    %v5843 = vpop.f32.mrf.mxu0
    %v5844 = vadd.f32 %v5831, %v5843
    %v5845 = vpop.f32.mrf.mxu0
    %5846 = vdwg.mxu0
    %5847 = vmatpush.bf16.msra.mxu0 %v5688
    %5848 = vmatpush.bf16.msra.mxu0 %v5686
    %5849 = vmatpush.bf16.msra.mxu0 %v5684
    %5850 = vmatpush.bf16.msra.mxu0 %v5682
    %5851 = vmatpush.bf16.msra.mxu0 %v5680
    %5852 = vmatpush.bf16.msra.mxu0 %v5678
    %5853 = vmatpush.bf16.msra.mxu0 %v5676
    %5854 = vmatpush.bf16.msra.mxu0 %v5674
    %5855 = vmatmul.bf16.gmra.mxu0 %v5443
    %v5856 = vpop.f32.mrf.mxu0
    %v5857 = vadd.f32 %v5844, %v5856
    %v5858 = vpop.f32.mrf.mxu0
    %5859 = vdwg.mxu0
    %5860 = vmatpush.bf16.msra.mxu0 %v5704
    %5861 = vmatpush.bf16.msra.mxu0 %v5702
    %5862 = vmatpush.bf16.msra.mxu0 %v5700
    %5863 = vmatpush.bf16.msra.mxu0 %v5698
    %5864 = vmatpush.bf16.msra.mxu0 %v5696
    %5865 = vmatpush.bf16.msra.mxu0 %v5694
    %5866 = vmatpush.bf16.msra.mxu0 %v5692
    %5867 = vmatpush.bf16.msra.mxu0 %v5690
    %5868 = vmatmul.bf16.gmra.mxu0 %v5444
    %v5869 = vpop.f32.mrf.mxu0
    %v5870 = vadd.f32 %v5857, %v5869
    %v5871 = vpop.f32.mrf.mxu0
    %5872 = vdwg.mxu0
    %v5873 = vmax.f32 %v5818, 0.0
    %v5874 = vmax.f32 %v5870, 0.0
    %v5875 = vpack.c.bf16 %v5873, %v5873
    %v5876 = vpack.c.bf16 %v5874, %v5874
    %v5877 = vld [vmem:[%s10] sm:$0xf]
    %v5878 = vld [vmem:[%s10 + $0x4] sm:$0xf]
    %v5879 = vld [vmem:[%s10 + $0x8] sm:$0xf]
    %v5880 = vld [vmem:[%s10 + $0xc] sm:$0xf]
    %v5881 = vld [vmem:[%s10 + $0x10] sm:$0xf]
    %v5882 = vld [vmem:[%s10 + $0x14] sm:$0xf]
    %v5883 = vld [vmem:[%s10 + $0x18] sm:$0xf]
    %v5884 = vld [vmem:[%s10 + $0x1c] sm:$0xf]
    %v5885 = vld [vmem:[%s10 + $0x20] sm:$0xf]
    %v5886 = vld [vmem:[%s10 + $0x24] sm:$0xf]
    %v5887 = vld [vmem:[%s10 + $0x28] sm:$0xf]
    %v5888 = vld [vmem:[%s10 + $0x2c] sm:$0xf]
    %v5889 = vld [vmem:[%s10 + $0x30] sm:$0xf]
    %v5890 = vld [vmem:[%s10 + $0x34] sm:$0xf]
    %v5891 = vld [vmem:[%s10 + $0x38] sm:$0xf]
    %v5892 = vld [vmem:[%s10 + $0x3c] sm:$0xf]
    %v5893 = vld [vmem:[%s10 + $0x40] sm:$0xf]
    %v5894 = vld [vmem:[%s10 + $0x44] sm:$0xf]
    %v5895 = vld [vmem:[%s10 + $0x48] sm:$0xf]
    %v5896 = vld [vmem:[%s10 + $0x4c] sm:$0xf]
    %v5897 = vld [vmem:[%s10 + $0x50] sm:$0xf]
    %v5898 = vld [vmem:[%s10 + $0x54] sm:$0xf]
    %v5899 = vld [vmem:[%s10 + $0x58] sm:$0xf]
    %v5900 = vld [vmem:[%s10 + $0x5c] sm:$0xf]
    %v5901 = vld [vmem:[%s10 + $0x60] sm:$0xf]
    %v5902 = vld [vmem:[%s10 + $0x64] sm:$0xf]
    %v5903 = vld [vmem:[%s10 + $0x68] sm:$0xf]
    %v5904 = vld [vmem:[%s10 + $0x6c] sm:$0xf]
    %v5905 = vld [vmem:[%s10 + $0x70] sm:$0xf]
    %v5906 = vld [vmem:[%s10 + $0x74] sm:$0xf]
    %v5907 = vld [vmem:[%s10 + $0x78] sm:$0xf]
    %v5908 = vld [vmem:[%s10 + $0x7c] sm:$0xf]
    %v5909 = vld [vmem:[%s11] sm:$0x1]
    %v5911 = vperm.slane %v5909, 0
    %v5945 = vunpack.c.l.b16 %v5877
    %v5946 = vunpack.c.l.b16 %v5878
    %v5947 = vunpack.c.l.b16 %v5879
    %v5948 = vunpack.c.l.b16 %v5880
    %v5949 = vunpack.c.l.b16 %v5881
    %v5950 = vunpack.c.l.b16 %v5882
    %v5951 = vunpack.c.l.b16 %v5883
    %v5952 = vunpack.c.l.b16 %v5884
    %v5953 = vunpack.c.l.b16 %v5885
    %v5954 = vunpack.c.l.b16 %v5886
    %v5955 = vunpack.c.l.b16 %v5887
    %v5956 = vunpack.c.l.b16 %v5888
    %v5957 = vunpack.c.l.b16 %v5889
    %v5958 = vunpack.c.l.b16 %v5890
    %v5959 = vunpack.c.l.b16 %v5891
    %v5960 = vunpack.c.l.b16 %v5892
    %v5961 = vunpack.c.l.b16 %v5893
    %v5962 = vunpack.c.l.b16 %v5894
    %v5963 = vunpack.c.l.b16 %v5895
    %v5964 = vunpack.c.l.b16 %v5896
    %v5965 = vunpack.c.l.b16 %v5897
    %v5966 = vunpack.c.l.b16 %v5898
    %v5967 = vunpack.c.l.b16 %v5899
    %v5968 = vunpack.c.l.b16 %v5900
    %v5969 = vunpack.c.l.b16 %v5901
    %v5970 = vunpack.c.l.b16 %v5902
    %v5971 = vunpack.c.l.b16 %v5903
    %v5972 = vunpack.c.l.b16 %v5904
    %v5973 = vunpack.c.l.b16 %v5905
    %v5974 = vunpack.c.l.b16 %v5906
    %v5975 = vunpack.c.l.b16 %v5907
    %v5976 = vunpack.c.l.b16 %v5908
    %v5977 = vpack.c.b16 %v5946, %v5945
    %v5978 = vpack.c.b16 %v5948, %v5947
    %v5979 = vpack.c.b16 %v5950, %v5949
    %v5980 = vpack.c.b16 %v5952, %v5951
    %v5981 = vpack.c.b16 %v5954, %v5953
    %v5982 = vpack.c.b16 %v5956, %v5955
    %v5983 = vpack.c.b16 %v5958, %v5957
    %v5984 = vpack.c.b16 %v5960, %v5959
    %v5985 = vpack.c.b16 %v5962, %v5961
    %v5986 = vpack.c.b16 %v5964, %v5963
    %v5987 = vpack.c.b16 %v5966, %v5965
    %v5988 = vpack.c.b16 %v5968, %v5967
    %v5989 = vpack.c.b16 %v5970, %v5969
    %v5990 = vpack.c.b16 %v5972, %v5971
    %v5991 = vpack.c.b16 %v5974, %v5973
    %v5992 = vpack.c.b16 %v5976, %v5975
    %6009 = vmatpush.bf16.msra.mxu0 %v5984
    %6010 = vmatpush.bf16.msra.mxu0 %v5983
    %6011 = vmatpush.bf16.msra.mxu0 %v5982
    %6012 = vmatpush.bf16.msra.mxu0 %v5981
    %6013 = vmatpush.bf16.msra.mxu0 %v5980
    %6014 = vmatpush.bf16.msra.mxu0 %v5979
    %6015 = vmatpush.bf16.msra.mxu0 %v5978
    %6016 = vmatpush.bf16.msra.mxu0 %v5977
    %6017 = vmatmul.bf16.gmra.mxu0 %v5875
    %v6018 = vpop.f32.mrf.mxu0
    %v6019 = vadd.f32 %v5911, %v6018
    %v6020 = vpop.f32.mrf.mxu0
    %6021 = vdwg.mxu0
    %6022 = vmatpush.bf16.msra.mxu0 %v5992
    %6023 = vmatpush.bf16.msra.mxu0 %v5991
    %6024 = vmatpush.bf16.msra.mxu0 %v5990
    %6025 = vmatpush.bf16.msra.mxu0 %v5989
    %6026 = vmatpush.bf16.msra.mxu0 %v5988
    %6027 = vmatpush.bf16.msra.mxu0 %v5987
    %6028 = vmatpush.bf16.msra.mxu0 %v5986
    %6029 = vmatpush.bf16.msra.mxu0 %v5985
    %6030 = vmatmul.bf16.gmra.mxu0 %v5876
    %v6031 = vpop.f32.mrf.mxu0
    %v6032 = vadd.f32 %v6019, %v6031
    %v6033 = vpop.f32.mrf.mxu0
    %6034 = vdwg.mxu0
    %v6035 = vmul.f32 %v6032, %v6032
    %v6036 = vsel %vm4335, %v6035, 0.0
    %6037 = vadd.xlane.f32.xlu0 %v6036
    %v6038 = vpop.xlane.xlu0 %6037
    %v6039 = vmax.f32 %v6038, 1e-24
    %v6040 = vrsqrt.pop %v6039
    %v6041 = vmul.f32 %v6040, %v6039
    %v6042 = vmul.f32 %v6041, %v6040
    %v6043 = vmul.f32 0.5, %v6042
    %v6044 = vsub.f32 1.5, %v6043
    %v6045 = vmul.f32 %v6040, %v6044
    %vm6046 = vweird.f32 %v6039
    %vm6047 = vweird.f32 %v6040
    %vm6048 = vmor %vm6046, %vm6047
    %v6049 = vsel %vm6048, %v6040, %v6045
    %v6050 = vmul.f32 %v6032, %v6049
    %6051 = vst [vmem:[%s14] sm:$0xf] %v6050
    %v6052 = vld [vmem:[%s12] sm:$0xff]
    %v6053 = vld [vmem:[%s12 + $0x8] sm:$0xff]
    %v6054 = vld [vmem:[%s12 + $0x10] sm:$0xff]
    %v6055 = vld [vmem:[%s12 + $0x18] sm:$0xff]
    %v6056 = vld [vmem:[%s12 + $0x20] sm:$0xff]
    %v6057 = vld [vmem:[%s12 + $0x28] sm:$0xff]
    %v6058 = vld [vmem:[%s12 + $0x30] sm:$0xff]
    %v6059 = vld [vmem:[%s12 + $0x38] sm:$0xff]
    %v6060 = vld [vmem:[%s12 + $0x40] sm:$0xff]
    %v6061 = vld [vmem:[%s12 + $0x48] sm:$0xff]
    %v6062 = vld [vmem:[%s12 + $0x50] sm:$0xff]
    %v6063 = vld [vmem:[%s12 + $0x58] sm:$0xff]
    %v6064 = vld [vmem:[%s12 + $0x60] sm:$0xff]
    %v6065 = vld [vmem:[%s12 + $0x68] sm:$0xff]
    %v6066 = vld [vmem:[%s12 + $0x70] sm:$0xff]
    %v6067 = vld [vmem:[%s12 + $0x78] sm:$0xff]
    %v6068 = vld [vmem:[%s12 + $0x80] sm:$0xff]
    %v6069 = vld [vmem:[%s12 + $0x88] sm:$0xff]
    %v6070 = vld [vmem:[%s12 + $0x90] sm:$0xff]
    %v6071 = vld [vmem:[%s12 + $0x98] sm:$0xff]
    %v6072 = vld [vmem:[%s12 + $0xa0] sm:$0xff]
    %v6073 = vld [vmem:[%s12 + $0xa8] sm:$0xff]
    %v6074 = vld [vmem:[%s12 + $0xb0] sm:$0xff]
    %v6075 = vld [vmem:[%s12 + $0xb8] sm:$0xff]
    %v6076 = vld [vmem:[%s12 + $0xc0] sm:$0xff]
    %v6077 = vld [vmem:[%s12 + $0xc8] sm:$0xff]
    %v6078 = vld [vmem:[%s12 + $0xd0] sm:$0xff]
    %v6079 = vld [vmem:[%s12 + $0xd8] sm:$0xff]
    %v6080 = vld [vmem:[%s12 + $0xe0] sm:$0xff]
    %v6081 = vld [vmem:[%s12 + $0xe8] sm:$0xff]
    %v6082 = vld [vmem:[%s12 + $0xf0] sm:$0xff]
    %v6083 = vld [vmem:[%s12 + $0xf8] sm:$0xff]
    %v6085 = vrot.slane %v6050, 2
    %v6087 = vmul.f32 %v4350, %v6085
    %vm6088 = vcmask 1041408
    %v6089 = vsel %vm6088, %v6087, 0.0
    %6090 = vadd.xlane.f32.xlu0 %v6089
    %v6091 = vpop.xlane.xlu0 %6090
    %v6092 = vmul.f32 %v6091, 5.0
    %6093 = vmatpush.msra.mxu0 %v6082
    %6094 = vmatpush.msra.mxu0 %v6080
    %6095 = vmatpush.msra.mxu0 %v6078
    %6096 = vmatpush.msra.mxu0 %v6076
    %6097 = vmatpush.msra.mxu0 %v6074
    %6098 = vmatpush.msra.mxu0 %v6072
    %6099 = vmatpush.msra.mxu0 %v6070
    %6100 = vmatpush.msra.mxu0 %v6068
    %6101 = vmatpush.msra.mxu0 %v6066
    %6102 = vmatpush.msra.mxu0 %v6064
    %6103 = vmatpush.msra.mxu0 %v6062
    %6104 = vmatpush.msra.mxu0 %v6060
    %6105 = vmatpush.msra.mxu0 %v6058
    %6106 = vmatpush.msra.mxu0 %v6056
    %6107 = vmatpush.msra.mxu0 %v6054
    %6108 = vmatpush.msra.mxu0 %v6052
    %6109 = vmatmul.f32.gmra.mxu0 %v4350
    %v6110 = vpop.f32.mrf.mxu0
    %v6111 = vadd.f32 0.0, %v6110
    %6112 = vdwg.mxu0
    %6113 = vmatpush.msra.mxu0 %v6083
    %6114 = vmatpush.msra.mxu0 %v6081
    %6115 = vmatpush.msra.mxu0 %v6079
    %6116 = vmatpush.msra.mxu0 %v6077
    %6117 = vmatpush.msra.mxu0 %v6075
    %6118 = vmatpush.msra.mxu0 %v6073
    %6119 = vmatpush.msra.mxu0 %v6071
    %6120 = vmatpush.msra.mxu0 %v6069
    %6121 = vmatpush.msra.mxu0 %v6067
    %6122 = vmatpush.msra.mxu0 %v6065
    %6123 = vmatpush.msra.mxu0 %v6063
    %6124 = vmatpush.msra.mxu0 %v6061
    %6125 = vmatpush.msra.mxu0 %v6059
    %6126 = vmatpush.msra.mxu0 %v6057
    %6127 = vmatpush.msra.mxu0 %v6055
    %6128 = vmatpush.msra.mxu0 %v6053
    %6129 = vmatmul.f32.gmra.mxu0 %v4350
    %v6130 = vpop.f32.mrf.mxu0
    %v6131 = vadd.f32 0.0, %v6130
    %6132 = vdwg.mxu0
    %v6133 = vmul.f32 %v6111, 5.0
    %v6134 = vmul.f32 %v6131, 5.0
    %v6135 = vsel %vm6088, %v6133, -inf
    %v6136 = vsel %vm6088, %v6134, -inf
    %v6137 = vmax.f32 %v6135, %v6136
    %6138 = vmax.xlane.f32.xlu0 %v6137
    %v6139 = vpop.xlane.xlu0 %6138
    %v6140 = vmax.f32 %v6092, %v6139
    %v6141 = vsub.f32 %v6092, %v6140
    %v6142 = vmul.f32 %v6141, 1.442695
    %v6143 = vpow.pop %v6142
    %v6144 = vsub.f32 %v6133, %v6140
    %v6145 = vsub.f32 %v6134, %v6140
    %v6146 = vmul.f32 %v6144, 1.442695
    %v6147 = vpow.pop %v6146
    %v6148 = vmul.f32 %v6145, 1.442695
    %v6149 = vpow.pop %v6148
    %v6150 = vsel %vm6088, %v6147, 0.0
    %v6151 = vsel %vm6088, %v6149, 0.0
    %v6152 = vadd.f32 %v6150, %v6151
    %6153 = vadd.xlane.f32.xlu0 %v6152
    %v6154 = vpop.xlane.xlu0 %6153
    %v6155 = vadd.f32 %v6143, %v6154
    %v6156 = vlog2.pop %v6155
    %v6157 = vmul.f32 %v6156, 0.6931472
    %v6158 = vadd.f32 %v6140, %v6157
    %v6159 = vsub.f32 %v6158, %v6092
    %vm6160 = vcmask 1024
    %v6161 = vsel %vm6160, %v6159, 0.0
    %6162 = vadd.xlane.f32.xlu0 %v6161
    %v6163 = vpop.xlane.xlu0 %6162
    %v6164 = vrot.slane %v6163, 4
    %v6165 = vadd.f32 %v6163, %v6164
    %v6166 = vrot.slane %v6165, 2
    %v6167 = vadd.f32 %v6165, %v6166
    %v6168 = vrot.slane %v6167, 1
    %v6169 = vadd.f32 %v6167, %v6168
    %s6170 = vtos %v6169
    %v6171 = vrcp.pop 2.0
    %v6172 = vmul.f32 2.0, %v6171
    %v6173 = vsub.f32 1.0, %v6172
    %v6174 = vmul.f32 %v6171, %v6173
    %v6175 = vadd.f32 %v6171, %v6174
    %vm6176 = vweird.f32 %v6171
    %v6177 = vsel %vm6176, %v6171, %v6175
    %s6178 = vtos %v6177
    %s6179 = smul.f32 %s6170, %s6178
    %v6180 = vrot.slane %v6050, 6
    %v6182 = vmul.f32 %v4350, %v6180
    %vm6183 = vcmask 1043458
    %v6184 = vsel %vm6183, %v6182, 0.0
    %6185 = vadd.xlane.f32.xlu0 %v6184
    %v6186 = vpop.xlane.xlu0 %6185
    %v6187 = vmul.f32 %v6186, 5.0
    %v6189 = vrot.slane %v4350, 2
    %6191 = vmatpush.msra.mxu0 %v6082
    %6192 = vmatpush.msra.mxu0 %v6080
    %6193 = vmatpush.msra.mxu0 %v6078
    %6194 = vmatpush.msra.mxu0 %v6076
    %6195 = vmatpush.msra.mxu0 %v6074
    %6196 = vmatpush.msra.mxu0 %v6072
    %6197 = vmatpush.msra.mxu0 %v6070
    %6198 = vmatpush.msra.mxu0 %v6068
    %6199 = vmatpush.msra.mxu0 %v6066
    %6200 = vmatpush.msra.mxu0 %v6064
    %6201 = vmatpush.msra.mxu0 %v6062
    %6202 = vmatpush.msra.mxu0 %v6060
    %6203 = vmatpush.msra.mxu0 %v6058
    %6204 = vmatpush.msra.mxu0 %v6056
    %6205 = vmatpush.msra.mxu0 %v6054
    %6206 = vmatpush.msra.mxu0 %v6052
    %6207 = vmatmul.f32.gmra.mxu0 %v6189
    %v6208 = vpop.f32.mrf.mxu0
    %v6209 = vadd.f32 0.0, %v6208
    %6210 = vdwg.mxu0
    %6211 = vmatpush.msra.mxu0 %v6083
    %6212 = vmatpush.msra.mxu0 %v6081
    %6213 = vmatpush.msra.mxu0 %v6079
    %6214 = vmatpush.msra.mxu0 %v6077
    %6215 = vmatpush.msra.mxu0 %v6075
    %6216 = vmatpush.msra.mxu0 %v6073
    %6217 = vmatpush.msra.mxu0 %v6071
    %6218 = vmatpush.msra.mxu0 %v6069
    %6219 = vmatpush.msra.mxu0 %v6067
    %6220 = vmatpush.msra.mxu0 %v6065
    %6221 = vmatpush.msra.mxu0 %v6063
    %6222 = vmatpush.msra.mxu0 %v6061
    %6223 = vmatpush.msra.mxu0 %v6059
    %6224 = vmatpush.msra.mxu0 %v6057
    %6225 = vmatpush.msra.mxu0 %v6055
    %6226 = vmatpush.msra.mxu0 %v6053
    %6227 = vmatmul.f32.gmra.mxu0 %v6189
    %v6228 = vpop.f32.mrf.mxu0
    %v6229 = vadd.f32 0.0, %v6228
    %6230 = vdwg.mxu0
    %v6231 = vmul.f32 %v6209, 5.0
    %v6232 = vmul.f32 %v6229, 5.0
    %v6233 = vsel %vm6088, %v6231, -inf
    %v6234 = vsel %vm6088, %v6232, -inf
    %v6235 = vmax.f32 %v6233, %v6234
    %6236 = vmax.xlane.f32.xlu0 %v6235
    %v6237 = vpop.xlane.xlu0 %6236
    %v6239 = vrot.slane %v6237, 6
    %v6241 = vmax.f32 %v6187, %v6239
    %v6242 = vsub.f32 %v6187, %v6241
    %v6243 = vmul.f32 %v6242, 1.442695
    %v6244 = vpow.pop %v6243
    %6246 = vset.pattern.permute.xlu0 0
    %6247 = vperm.xlu0 %6246, %v6241
    %v6248 = vpop.permute.xlu0 %6247
    %v6249 = vrot.slane %v6248, 2
    %v6251 = vsub.f32 %v6231, %v6249
    %v6252 = vsub.f32 %v6232, %v6249
    %v6253 = vmul.f32 %v6251, 1.442695
    %v6254 = vpow.pop %v6253
    %v6255 = vmul.f32 %v6252, 1.442695
    %v6256 = vpow.pop %v6255
    %v6257 = vsel %vm6088, %v6254, 0.0
    %v6258 = vsel %vm6088, %v6256, 0.0
    %v6259 = vadd.f32 %v6257, %v6258
    %6260 = vadd.xlane.f32.xlu0 %v6259
    %v6261 = vpop.xlane.xlu0 %6260
    %v6263 = vrot.slane %v6261, 6
    %v6265 = vadd.f32 %v6244, %v6263
    %v6266 = vlog2.pop %v6265
    %v6267 = vmul.f32 %v6266, 0.6931472
    %v6268 = vadd.f32 %v6241, %v6267
    %v6269 = vsub.f32 %v6268, %v6187
    %v6271 = vrot.slane %v6269, 2
    %v6273 = vsel %vm6160, %v6271, 0.0
    %6274 = vadd.xlane.f32.xlu0 %v6273
    %v6275 = vpop.xlane.xlu0 %6274
    %v6276 = vrot.slane %v6275, 4
    %v6277 = vadd.f32 %v6275, %v6276
    %v6278 = vrot.slane %v6277, 2
    %v6279 = vadd.f32 %v6277, %v6278
    %v6280 = vrot.slane %v6279, 1
    %v6281 = vadd.f32 %v6279, %v6280
    %s6282 = vtos %v6281
    %v6283 = vrcp.pop 2.0
    %v6284 = vmul.f32 2.0, %v6283
    %v6285 = vsub.f32 1.0, %v6284
    %v6286 = vmul.f32 %v6283, %v6285
    %v6287 = vadd.f32 %v6283, %v6286
    %vm6288 = vweird.f32 %v6283
    %v6289 = vsel %vm6288, %v6283, %v6287
    %s6290 = vtos %v6289
    %s6291 = smul.f32 %s6282, %s6290
    %s6292 = sadd.f32 %s6179, %s6291
    %s6293 = smul.f32 %s6292, 0.5
    %s6294 = scalar_lea.smem [#allocation2], 0
    %6295 = sst [smem:[%s6294]] %s6293
    // Predicated region
    $region54: #{moco_global_forward.1} parent=1 // pred_check
      _
    $region55: #{moco_global_forward.1} parent=1 // pred_check_branch
      %6297 = sbr.rel (0) target = $region57
    $region56: #{moco_global_forward.1} parent=1 // pred_region
      %6299 = vsyncadd [#allocation3], 0
      %s6301 = sshll.u32 %s13, 4
      %s6302 = int_to_ptr.hbm [resolvable:$true] %s6301
      %6304 = dma.smem_to_hbm [#allocation2], 16, %s6302, [#allocation3]
    $region57: #{moco_global_forward.1} parent=1 // pred_fallthru
      _
    // Predicated region
    $region58: #{moco_global_forward.1} parent=1 // pred_check
      _
    $region59: #{moco_global_forward.1} parent=1 // pred_check_branch
      %6306 = sbr.rel (0) target = $region61
    $region60: #{moco_global_forward.1} parent=1 // pred_region
      _
    $region61: #{moco_global_forward.1} parent=1 // pred_fallthru
      _
    // Predicated region
    $region62: #{moco_global_forward.1} parent=1 // pred_check
      _
    $region63: #{moco_global_forward.1} parent=1 // pred_check_branch
      %6308 = sbr.rel (0) target = $region65
    $region64: #{moco_global_forward.1} parent=1 // pred_region
      %6310 = dma.done [#allocation3], 16
    $region65: #{moco_global_forward.1} parent=1 // pred_fallthru
      _
    // Predicated region
    $region66: #{moco_global_forward.1} parent=1 // pred_check
      _
    $region67: #{moco_global_forward.1} parent=1 // pred_check_branch
      %6312 = sbr.rel (0) target = $region69
    $region68: #{moco_global_forward.1} parent=1 // pred_region
      _
    $region69: #{moco_global_forward.1} parent=1 // pred_fallthru
      _
    %6313 = sfence
    %6314 = vsyncpa [#allocation3], 1

</llo_original>
